<compile_context>
chip_gen: v7x
topology: tpu7x:2x2x1
jax: 0.10.0
libtpu: 0.0.40
codegen_flags: <defaults>
</compile_context>

<pallas_src>
import functools

import jax
import jax.numpy as jnp
from jax import lax
from jax.experimental import pallas as pl
from jax.experimental.pallas import tpu as pltpu

_UNROLL_MAX_LEN = 8   # fully unroll the decode loop at/below this length


def _slot_decode_kernel(
    # inputs -------------------------------------------------------------
    enc_ref,      # (BB, T, H)    bf16  encoder output block
    maskadd_ref,  # (BB, 1, T)    f32   additive attention mask (0 / -10000)
    ids_ref,      # (BB, T, 1)    i32   input token ids
    w0_ref,       # (BB*Jp, H)    f32   initial slot embeddings (pre-tiled over BB)
    h0_ref,       # (BB, Jp, H)   f32   initial GRU hidden (pre-broadcast over Jp)
    emb_ref,      # (Vp, H)       bf16  embedding table (single copy, zero-padded)
    wih_ref,      # (H, 3H)       bf16  GRU W_ih^T  (r|z|n order)
    whh_ref,      # (H, 3H)       bf16  GRU W_hh^T
    bih_ref,      # (1, 3H)       f32
    bhh_ref,      # (1, 3H)       f32
    wgen_ref,     # (3H, 1)       f32   w_gen^T  ([w | hidden | context] rows)
    bgen_ref,     # (1, 1)        f32
    wgate_ref,    # (H, G)        bf16
    bgate_ref,    # (1, G)        f32
    # outputs ------------------------------------------------------------
    point_ref,    # (BB, Jp, max_len, Vp) f32  -- final layout, no wrapper transpose
    gate_ref,     # (BB, Jp, G)           f32
    # scratch ------------------------------------------------------------
    w_scr,        # (BB*Jp, H) f32  "w" carry
    h_scr,        # (BB*Jp, H) f32  hidden carry
    *,
    v_real,       # static: number of real (un-padded) vocab entries
):
    f32 = jnp.float32
    bf16 = jnp.bfloat16

    BB, T, H = enc_ref.shape
    Vp = emb_ref.shape[0]
    M = w_scr.shape[0]
    Jp = M // BB
    max_len = point_ref.shape[2]

    # ---- loop-invariant values (hoisted out of the decode loop) ---------
    enc = enc_ref[...]                       # (BB, T, H) bf16
    mask_add = maskadd_ref[...]              # (BB, 1, T) f32
    emb = emb_ref[...]                       # (Vp, H)    bf16
    wih = wih_ref[...]
    whh = whh_ref[...]
    bih = bih_ref[...]
    bhh = bhh_ref[...]
    wgen = wgen_ref[...]                     # (3H, 1) f32
    bgen = bgen_ref[...]                     # (1, 1)  f32
    wg_x = wgen[:H]
    wg_h = wgen[H:2 * H]
    wg_c = wgen[2 * H:]
    iota_v = lax.broadcasted_iota(jnp.int32, (1, Vp), 1)

    # one-hot(ids) built once per grid step; the per-step scatter_add becomes a
    # single MXU matmul against this matrix.
    # TODO(synk): use int8 (v5e/v6e) / fp8 (v7x) for this buffer at production T,V.
    iota_v3 = lax.broadcasted_iota(jnp.int32, (1, 1, Vp), 2)
    onehot_ids = (ids_ref[...] == iota_v3).astype(bf16)      # (BB, T, Vp)

    if Vp > v_real:   # keep padded vocab columns out of the vocab softmax
        vmask_add = jnp.where(iota_v >= v_real, f32(-1e30), f32(0.0))

    # ---- init decode carries (fresh per grid step) -----------------------
    w_scr[...] = w0_ref[...]
    h_scr[...] = h0_ref[...].reshape(M, H)

    def step(k):
        """One greedy decode step; returns the (M, H) f32 context vector."""
        x = w_scr[...]                       # "w" (dropout is identity in eval)
        h = h_scr[...]

        # GRU cell (PyTorch gate order r, z, n); bf16 operands, f32 accumulation.
        gi = jnp.dot(x.astype(bf16), wih, preferred_element_type=f32) + bih
        gh = jnp.dot(h.astype(bf16), whh, preferred_element_type=f32) + bhh
        r = jax.nn.sigmoid(gi[:, :H] + gh[:, :H])
        z = jax.nn.sigmoid(gi[:, H:2 * H] + gh[:, H:2 * H])
        n = jnp.tanh(gi[:, 2 * H:] + r * gh[:, 2 * H:])
        h_new = (1.0 - z) * n + z * h                            # (M, H) f32
        hn_bf = h_new.astype(bf16)

        # Attention over encoder history (per batch element, MXU).
        h3 = hn_bf.reshape(BB, Jp, H)
        attn_e = jnp.einsum("bjh,bth->bjt", h3, enc,
                            preferred_element_type=f32) + mask_add   # (BB,Jp,T)
        attn_e = attn_e - jnp.max(attn_e, axis=-1, keepdims=True)
        pe = jnp.exp(attn_e)
        attn_hist = pe * pl.reciprocal(
            jnp.sum(pe, axis=-1, keepdims=True), approx=True)        # (BB,Jp,T)
        ah_bf = attn_hist.astype(bf16)

        # Attention over the vocabulary: single (M,H) x (Vp,H)^T matmul.
        attn_v = lax.dot_general(hn_bf, emb, (((1,), (1,)), ((), ())),
                                 preferred_element_type=f32)          # (M, Vp)
        if Vp > v_real:
            attn_v = attn_v + vmask_add
        attn_v = attn_v - jnp.max(attn_v, axis=-1, keepdims=True)
        pv = jnp.exp(attn_v)
        attn_vocab = pv * pl.reciprocal(
            jnp.sum(pv, axis=-1, keepdims=True), approx=True)         # (M, Vp)

        # Context vector (per batch element, MXU).
        context = jnp.einsum("bjt,bth->bjh", ah_bf, enc,
                             preferred_element_type=f32).reshape(M, H)

        # p_gen = sigmoid(w_gen([w, hidden, context])): three tiny MXU matmuls,
        # no cross-lane reductions.
        pg_logit = (jnp.dot(x, wg_x, preferred_element_type=f32)
                    + jnp.dot(h_new, wg_h, preferred_element_type=f32)
                    + jnp.dot(context, wg_c, preferred_element_type=f32)
                    + bgen)                                            # (M, 1)
        p_gen = jax.nn.sigmoid(pg_logit)

        # Pointer distribution: scatter_add(attn_hist -> vocab) as one matmul.
        p_ctx = jnp.einsum("bjt,btv->bjv", ah_bf, onehot_ids,
                           preferred_element_type=f32).reshape(M, Vp)

        p_final = p_gen * attn_vocab + (1.0 - p_gen) * p_ctx           # (M, Vp)

        # Store directly in (B, J, max_len, V) layout (lane-dense Vp).
        point_ref[:, :, k, :] = (
            p_final.astype(point_ref.dtype).reshape(BB, Jp, Vp))

        # Greedy argmax -> next-step embedding (one-hot matmul gather).
        # (lowest-index tie-break; torch.argmax tie order is unspecified)
        mx = jnp.max(p_final, axis=-1, keepdims=True)
        w_idx = jnp.min(jnp.where(p_final == mx, iota_v, Vp),
                        axis=-1, keepdims=True)                        # (M, 1)
        onehot_w = (iota_v == w_idx).astype(bf16)                      # (M, Vp)
        w_scr[...] = jnp.dot(onehot_w, emb, preferred_element_type=f32)
        h_scr[...] = h_new
        return context

    # Step 0 peeled: the gate head only needs the step-0 context (no pl.when
    # inside the hot loop, wgate/bgate are dead after this point).
    ctx0 = step(0)
    gate = jnp.dot(ctx0.astype(bf16), wgate_ref[...],
                   preferred_element_type=f32) + bgate_ref[...]        # (M, G)
    gate_ref[...] = gate.reshape(gate_ref.shape).astype(gate_ref.dtype)

    if max_len > 1:
        if max_len <= _UNROLL_MAX_LEN:
            for k in range(1, max_len):       # static unroll: LLO sees across steps
                step(k)
        else:
            @pl.loop(1, max_len)
            def _(k):
                step(k)


def _round_up(x, m):
    return (x + m - 1) // m * m


def _pick_batch_block(batch, j_pad, target_rows=256):
    """Largest divisor of `batch` with bb*j_pad <= target_rows; prefer >= 2 grid steps."""
    bb = max(1, min(batch, max(1, target_rows // j_pad)))
    while batch % bb:
        bb -= 1
    if batch >= 2 and batch // bb < 2:        # keep both v7x TensorCores busy
        bb2 = batch // 2
        while bb2 >= 1 and batch % bb2:
            bb2 -= 1
        bb = max(1, bb2)
    return bb


def _full_spec(shape):
    nd = len(shape)
    return pl.BlockSpec(shape, lambda b, _nd=nd: (0,) * _nd)


def slot_generator_forward(params, input_ids, encoder_output, hidden, input_masks,
                           *, slot_embed_idx, max_len, n_gate, batch_block=None):
    """Pure-JAX glue + Pallas kernel call. Mirrors SlotGenerator.forward (GRU path)."""
    f32 = jnp.float32
    bf16 = jnp.bfloat16

    E = params["embed"].astype(f32)                        # (V, H)
    V, H = E.shape
    B, T, _ = encoder_output.shape
    J = len(slot_embed_idx)

    # Lane/sublane padding: V -> x128 (lane-dense (.,V) tensors), J -> x8 (full
    # sublanes in the carries / p_final rows). Padding is stripped after the call.
    Vp = _round_up(V, 128)
    Jp = _round_up(J, 8)
    bb = batch_block if batch_block is not None else _pick_batch_block(B, Jp)
    assert B % bb == 0
    M = bb * Jp

    # set_slot_idx: pad slot vocab-idx lists with pad_idx (=0, zero embedding row)
    max_l = max(len(s) for s in slot_embed_idx)
    slot = jnp.array([list(s) + [0] * (max_l - len(s)) for s in slot_embed_idx],
                     dtype=jnp.int32)                      # (J, L)
    slot_e = jnp.sum(jnp.take(E, slot, axis=0), axis=1)    # (J, H)
    slot_e = jnp.pad(slot_e, ((0, Jp - J), (0, 0)))        # (Jp, H)
    w0 = jnp.tile(slot_e, (bb, 1))                         # (M, H), shared

    enc_bf = encoder_output.astype(bf16)                                   # (B, T, H)
    ids = input_ids.astype(jnp.int32)[:, :, None]                          # (B, T, 1)
    # additive-mask form of masked_fill(input_masks.ne(1), -10000.0)
    mask_add = jnp.where(input_masks != 1, -10000.0, 0.0).astype(f32)[:, None, :]
    h0 = jnp.broadcast_to(hidden[0].astype(f32)[:, None, :], (B, Jp, H))   # (B, Jp, H)
    emb_p = jnp.pad(E, ((0, Vp - V), (0, 0))).astype(bf16)                 # (Vp, H)
    # TODO(synk): LengthMask(input_len_masks) is dead code in the GRU path; not reproduced.

    wih_t = params["gru_w_ih"].T.astype(bf16)              # (H, 3H)
    whh_t = params["gru_w_hh"].T.astype(bf16)              # (H, 3H)
    bih = params["gru_b_ih"].reshape(1, -1).astype(f32)
    bhh = params["gru_b_hh"].reshape(1, -1).astype(f32)
    wgen_t = params["w_gen_w"].T.astype(f32)               # (3H, 1)
    bgen = params["w_gen_b"].reshape(1, 1).astype(f32)
    wgate_t = params["w_gate_w"].T.astype(bf16)            # (H, n_gate)
    bgate = params["w_gate_b"].reshape(1, -1).astype(f32)

    inputs = (enc_bf, mask_add, ids, w0, h0, emb_p,
              wih_t, whh_t, bih, bhh, wgen_t, bgen, wgate_t, bgate)

    in_specs = [
        pl.BlockSpec((bb, T, H), lambda b: (b, 0, 0)),     # encoder output
        pl.BlockSpec((bb, 1, T), lambda b: (b, 0, 0)),     # additive mask
        pl.BlockSpec((bb, T, 1), lambda b: (b, 0, 0)),     # input ids
        _full_spec((M, H)),                                # slot embeddings
        pl.BlockSpec((bb, Jp, H), lambda b: (b, 0, 0)),    # initial hidden
        _full_spec((Vp, H)),                               # embedding table
        _full_spec(wih_t.shape), _full_spec(whh_t.shape),
        _full_spec(bih.shape), _full_spec(bhh.shape),
        _full_spec(wgen_t.shape), _full_spec(bgen.shape),
        _full_spec(wgate_t.shape), _full_spec(bgate.shape),
    ]
    # TODO(synk): at production V/T, single-buffer the loop-invariant inputs
    # (pipeline_mode=pl.Buffered(1)) and/or tile the vocab dim for v7x's 64 MiB VMEM.

    # Scoped-VMEM request: double-buffered blocks + scratch + largest temporaries.
    blk_items = [
        (bb * T * H, 2), (bb * T, 4), (bb * T, 4), (M * H, 4), (bb * Jp * H, 4),
        (Vp * H, 2), (H * 3 * H, 2), (H * 3 * H, 2), (3 * H, 4), (3 * H, 4),
        (3 * H, 4), (1, 4), (H * n_gate, 2), (n_gate, 4),
        (bb * Jp * max_len * Vp, 4), (bb * Jp * n_gate, 4),
    ]
    pipelined = 2 * sum(n * b for n, b in blk_items)
    scratch = 2 * M * H * 4
    temps = 4 * (8 * M * Vp + bb * T * Vp + 4 * bb * Jp * T + 8 * M * H)
    vmem_limit = int(min(100 * 2 ** 20,
                         max(32 * 2 ** 20, 1.3 * (pipelined + scratch + temps))))

    kernel = functools.partial(_slot_decode_kernel, v_real=V)

    point, gate = pl.pallas_call(
        kernel,
        out_shape=(
            jax.ShapeDtypeStruct((B, Jp, max_len, Vp), f32),
            jax.ShapeDtypeStruct((B, Jp, n_gate), f32),
        ),
        grid_spec=pltpu.PrefetchScalarGridSpec(
            num_scalar_prefetch=0,
            grid=(B // bb,),
            in_specs=in_specs,
            out_specs=(
                pl.BlockSpec((bb, Jp, max_len, Vp), lambda b: (b, 0, 0, 0)),
                pl.BlockSpec((bb, Jp, n_gate), lambda b: (b, 0, 0)),
            ),
            scratch_shapes=[
                pltpu.VMEM((M, H), jnp.float32),   # "w" carry
                pltpu.VMEM((M, H), jnp.float32),   # hidden carry
            ],
        ),
        compiler_params=pltpu.CompilerParams(
            dimension_semantics=("parallel",),
            vmem_limit_bytes=vmem_limit,
        ),
    )(*inputs)

    # Output is produced directly in (B, J, max_len, V) layout; only strip padding.
    return point[:, :J, :, :V], gate[:, :J, :]


def _reference_step0(params, input_ids, encoder_output, hidden, input_masks,
                     slot_embed_idx):
    """Pure-f32 JAX reference for the first decode step + gate head."""
    f32 = jnp.float32
    E = params["embed"].astype(f32)
    V, H = E.shape
    B = encoder_output.shape[0]
    max_l = max(len(s) for s in slot_embed_idx)
    slot = jnp.array([list(s) + [0] * (max_l - len(s)) for s in slot_embed_idx],
                     dtype=jnp.int32)
    slot_e = jnp.sum(jnp.take(E, slot, axis=0), axis=1)               # (J, H)
    Jr = slot_e.shape[0]

    x = jnp.broadcast_to(slot_e[None], (B, Jr, H))
    h = jnp.broadcast_to(hidden[0].astype(f32)[:, None, :], (B, Jr, H))
    gi = x @ params["gru_w_ih"].T.astype(f32) + params["gru_b_ih"].astype(f32)
    gh = h @ params["gru_w_hh"].T.astype(f32) + params["gru_b_hh"].astype(f32)
    r = jax.nn.sigmoid(gi[..., :H] + gh[..., :H])
    z = jax.nn.sigmoid(gi[..., H:2 * H] + gh[..., H:2 * H])
    n = jnp.tanh(gi[..., 2 * H:] + r * gh[..., 2 * H:])
    h1 = (1.0 - z) * n + z * h                                        # (B, J, H)

    enc = encoder_output.astype(f32)
    attn_e = jnp.einsum("bjh,bth->bjt", h1, enc)
    attn_e = jnp.where((input_masks != 1)[:, None, :], -10000.0, attn_e)
    attn_hist = jax.nn.softmax(attn_e, axis=-1)
    attn_vocab = jax.nn.softmax(jnp.einsum("bjh,vh->bjv", h1, E), axis=-1)
    context = jnp.einsum("bjt,bth->bjh", attn_hist, enc)

    cat = jnp.concatenate([x, h1, context], axis=-1)                  # (B, J, 3H)
    p_gen = jax.nn.sigmoid(cat @ params["w_gen_w"].astype(f32)[0]
                           + params["w_gen_b"].astype(f32)[0])[..., None]
    onehot = jax.nn.one_hot(input_ids, V, dtype=f32)                  # (B, T, V)
    p_ctx = jnp.einsum("bjt,btv->bjv", attn_hist, onehot)
    p0 = p_gen * attn_vocab + (1.0 - p_gen) * p_ctx
    gate = context @ params["w_gate_w"].astype(f32).T + params["w_gate_b"].astype(f32)
    return p0, gate


if __name__ == "__main__":
    # Small, deterministic config
    vocab_size, hidden_size = 128, 32
    B, T, max_len, n_gate = 2, 8, 4, 5
    slot_embed_idx = [[3, 7], [12, 5, 9], [20], [1, 2, 3]]   # J = 4 slots
    J = len(slot_embed_idx)

    key = jax.random.PRNGKey(0)
    ks = jax.random.split(key, 12)

    embed = 0.1 * jax.random.normal(ks[0], (vocab_size, hidden_size), jnp.float32)
    embed = embed.at[0].set(0.0)   # padding_idx = 0

    params = dict(
        embed=embed,
        gru_w_ih=0.1 * jax.random.normal(ks[1], (3 * hidden_size, hidden_size), jnp.float32),
        gru_w_hh=0.1 * jax.random.normal(ks[2], (3 * hidden_size, hidden_size), jnp.float32),
        gru_b_ih=0.1 * jax.random.normal(ks[3], (3 * hidden_size,), jnp.float32),
        gru_b_hh=0.1 * jax.random.normal(ks[4], (3 * hidden_size,), jnp.float32),
        w_gen_w=0.1 * jax.random.normal(ks[5], (1, 3 * hidden_size), jnp.float32),
        w_gen_b=0.1 * jax.random.normal(ks[6], (1,), jnp.float32),
        w_gate_w=0.1 * jax.random.normal(ks[7], (n_gate, hidden_size), jnp.float32),
        w_gate_b=0.1 * jax.random.normal(ks[8], (n_gate,), jnp.float32),
    )

    input_ids = jax.random.randint(ks[9], (B, T), 1, vocab_size).astype(jnp.int32)
    encoder_output = jax.random.normal(ks[10], (B, T, hidden_size), jnp.float32)
    hidden = 0.1 * jax.random.normal(ks[11], (1, B, hidden_size), jnp.float32)
    # mask == 1 -> valid token (positions != 1 get masked_fill(-10000) per forward())
    input_masks = jnp.where(
        jnp.arange(T)[None, :] < jnp.array([[T], [T - 3]]), 1, 0
    ).astype(jnp.int32)

    fwd = jax.jit(functools.partial(
        slot_generator_forward,
        slot_embed_idx=slot_embed_idx, max_len=max_len, n_gate=n_gate))
    all_point, all_gate = fwd(params, input_ids, encoder_output, hidden, input_masks)
    jax.block_until_ready((all_point, all_gate))

    assert all_point.shape == (B, J, max_len, vocab_size)
    assert all_gate.shape == (B, J, n_gate)

    # p_final is a convex combination of two probability distributions -> rows
    # sum to ~1 (tolerance covers approx-reciprocal softmax + bf16 pointer matmul).
    row_sums = jnp.sum(all_point, axis=-1)
    assert bool(jnp.all(jnp.abs(row_sums - 1.0) < 1e-2)), \
        float(jnp.max(jnp.abs(row_sums - 1.0)))

    # Step-0 / gate check against a pure-f32 JAX reference (later steps depend on
    # the greedy argmax trajectory, which may legitimately flip under bf16 rounding).
    ref_p0, ref_gate = _reference_step0(params, input_ids, encoder_output, hidden,
                                        input_masks, slot_embed_idx)
    assert bool(jnp.allclose(all_point[:, :, 0, :], ref_p0, rtol=0.0, atol=3e-2)), \
        float(jnp.max(jnp.abs(all_point[:, :, 0, :] - ref_p0)))
    assert bool(jnp.allclose(all_gate, ref_gate, rtol=0.0, atol=3e-2)), \
        float(jnp.max(jnp.abs(all_gate - ref_gate)))

    print("KERNEL_OK")
</pallas_src>

<mosaic_0001>
module attributes {stable_mosaic.version = 11 : i64} {
  func.func @_slot_decode_kernel(%arg0: i32, %arg1: memref<1x8x32xbf16, #tpu.memory_space<vmem>>, %arg2: memref<1x1x8xf32, #tpu.memory_space<vmem>>, %arg3: memref<1x8x1xi32, #tpu.memory_space<vmem>>, %arg4: memref<8x32xf32, #tpu.memory_space<vmem>>, %arg5: memref<1x8x32xf32, #tpu.memory_space<vmem>>, %arg6: memref<128x32xbf16, #tpu.memory_space<vmem>>, %arg7: memref<32x96xbf16, #tpu.memory_space<vmem>>, %arg8: memref<32x96xbf16, #tpu.memory_space<vmem>>, %arg9: memref<1x96xf32, #tpu.memory_space<vmem>>, %arg10: memref<1x96xf32, #tpu.memory_space<vmem>>, %arg11: memref<96x1xf32, #tpu.memory_space<vmem>>, %arg12: memref<1x1xf32, #tpu.memory_space<vmem>>, %arg13: memref<32x5xbf16, #tpu.memory_space<vmem>>, %arg14: memref<1x5xf32, #tpu.memory_space<vmem>>, %arg15: memref<1x8x4x128xf32, #tpu.memory_space<vmem>>, %arg16: memref<1x8x5xf32, #tpu.memory_space<vmem>>, %arg17: memref<8x32xf32, #tpu.memory_space<vmem>>, %arg18: memref<8x32xf32, #tpu.memory_space<vmem>>) attributes {dimension_semantics = [#tpu.dimension_semantics<parallel>], iteration_bounds = array<i64: 2>, scalar_prefetch = 0 : i64, scratch_operands = 2 : i64, tpu.core_type = #tpu.core_type<tc>, window_params = [{transform_indices = @transform_0, window_bounds = array<i64: 1, 8, 32>}, {transform_indices = @transform_1, window_bounds = array<i64: 1, 1, 8>}, {transform_indices = @transform_2, window_bounds = array<i64: 1, 8, 1>}, {pipeline_mode = #tpu.pipeline_mode<synchronous>, transform_indices = @transform_3, window_bounds = array<i64: 8, 32>}, {transform_indices = @transform_4, window_bounds = array<i64: 1, 8, 32>}, {pipeline_mode = #tpu.pipeline_mode<synchronous>, transform_indices = @transform_5, window_bounds = array<i64: 128, 32>}, {pipeline_mode = #tpu.pipeline_mode<synchronous>, transform_indices = @transform_6, window_bounds = array<i64: 32, 96>}, {pipeline_mode = #tpu.pipeline_mode<synchronous>, transform_indices = @transform_7, window_bounds = array<i64: 32, 96>}, {pipeline_mode = #tpu.pipeline_mode<synchronous>, transform_indices = @transform_8, window_bounds = array<i64: 1, 96>}, {pipeline_mode = #tpu.pipeline_mode<synchronous>, transform_indices = @transform_9, window_bounds = array<i64: 1, 96>}, {pipeline_mode = #tpu.pipeline_mode<synchronous>, transform_indices = @transform_10, window_bounds = array<i64: 96, 1>}, {pipeline_mode = #tpu.pipeline_mode<synchronous>, transform_indices = @transform_11, window_bounds = array<i64: 1, 1>}, {pipeline_mode = #tpu.pipeline_mode<synchronous>, transform_indices = @transform_12, window_bounds = array<i64: 32, 5>}, {pipeline_mode = #tpu.pipeline_mode<synchronous>, transform_indices = @transform_13, window_bounds = array<i64: 1, 5>}, {transform_indices = @transform_14, window_bounds = array<i64: 1, 8, 4, 128>}, {transform_indices = @transform_15, window_bounds = array<i64: 1, 8, 5>}]} {
    %c0 = arith.constant 0 : index
    %c0_0 = arith.constant 0 : index
    %c0_1 = arith.constant 0 : index
    %0 = vector.load %arg1[%c0, %c0_0, %c0_1] : memref<1x8x32xbf16, #tpu.memory_space<vmem>>, vector<1x8x32xbf16>
    %c0_2 = arith.constant 0 : index
    %c0_3 = arith.constant 0 : index
    %c0_4 = arith.constant 0 : index
    %1 = vector.load %arg2[%c0_2, %c0_3, %c0_4] : memref<1x1x8xf32, #tpu.memory_space<vmem>>, vector<1x1x8xf32>
    %c0_5 = arith.constant 0 : index
    %c0_6 = arith.constant 0 : index
    %2 = vector.load %arg6[%c0_5, %c0_6] : memref<128x32xbf16, #tpu.memory_space<vmem>>, vector<128x32xbf16>
    %c0_7 = arith.constant 0 : index
    %c0_8 = arith.constant 0 : index
    %3 = vector.load %arg7[%c0_7, %c0_8] : memref<32x96xbf16, #tpu.memory_space<vmem>>, vector<32x96xbf16>
    %c0_9 = arith.constant 0 : index
    %c0_10 = arith.constant 0 : index
    %4 = vector.load %arg8[%c0_9, %c0_10] : memref<32x96xbf16, #tpu.memory_space<vmem>>, vector<32x96xbf16>
    %c0_11 = arith.constant 0 : index
    %c0_12 = arith.constant 0 : index
    %5 = vector.load %arg9[%c0_11, %c0_12] : memref<1x96xf32, #tpu.memory_space<vmem>>, vector<1x96xf32>
    %c0_13 = arith.constant 0 : index
    %c0_14 = arith.constant 0 : index
    %6 = vector.load %arg10[%c0_13, %c0_14] : memref<1x96xf32, #tpu.memory_space<vmem>>, vector<1x96xf32>
    %c0_15 = arith.constant 0 : index
    %c0_16 = arith.constant 0 : index
    %7 = vector.load %arg11[%c0_15, %c0_16] : memref<96x1xf32, #tpu.memory_space<vmem>>, vector<96x1xf32>
    %c0_17 = arith.constant 0 : index
    %c0_18 = arith.constant 0 : index
    %8 = vector.load %arg12[%c0_17, %c0_18] : memref<1x1xf32, #tpu.memory_space<vmem>>, vector<1x1xf32>
    %9 = vector.extract_strided_slice %7 {offsets = [0, 0], sizes = [32, 1], strides = [1, 1]} : vector<96x1xf32> to vector<32x1xf32>
    %10 = vector.extract_strided_slice %7 {offsets = [32, 0], sizes = [32, 1], strides = [1, 1]} : vector<96x1xf32> to vector<32x1xf32>
    %11 = vector.extract_strided_slice %7 {offsets = [64, 0], sizes = [32, 1], strides = [1, 1]} : vector<96x1xf32> to vector<32x1xf32>
    %12 = tpu.iota {dimensions = array<i32: 1>} : vector<1x128xi32>
    %13 = tpu.iota {dimensions = array<i32: 2>} : vector<1x1x128xi32>
    %c0_19 = arith.constant 0 : index
    %c0_20 = arith.constant 0 : index
    %c0_21 = arith.constant 0 : index
    %14 = vector.load %arg3[%c0_19, %c0_20, %c0_21] : memref<1x8x1xi32, #tpu.memory_space<vmem>>, vector<1x8x1xi32>
    %15 = vector.broadcast %14 : vector<1x8x1xi32> to vector<1x8x128xi32>
    %16 = vector.broadcast %13 : vector<1x1x128xi32> to vector<1x8x128xi32>
    %17 = arith.cmpi eq, %15, %16 : vector<1x8x128xi32>
    %18 = arith.extui %17 : vector<1x8x128xi1> to vector<1x8x128xi32>
    %19 = arith.sitofp %18 : vector<1x8x128xi32> to vector<1x8x128xf32>
    %20 = arith.truncf %19 : vector<1x8x128xf32> to vector<1x8x128xbf16>
    %c0_22 = arith.constant 0 : index
    %c0_23 = arith.constant 0 : index
    %21 = vector.load %arg4[%c0_22, %c0_23] : memref<8x32xf32, #tpu.memory_space<vmem>>, vector<8x32xf32>
    %c0_24 = arith.constant 0 : index
    %c0_25 = arith.constant 0 : index
    %22 = vector.load %arg17[%c0_24, %c0_25] : memref<8x32xf32, #tpu.memory_space<vmem>>, vector<8x32xf32>
    tpu.vector_store %arg17[%c0_24, %c0_25], %21 {strides = array<i32>} : memref<8x32xf32, #tpu.memory_space<vmem>>, vector<8x32xf32>,
    %c0_26 = arith.constant 0 : index
    %c0_27 = arith.constant 0 : index
    %c0_28 = arith.constant 0 : index
    %23 = vector.load %arg5[%c0_26, %c0_27, %c0_28] : memref<1x8x32xf32, #tpu.memory_space<vmem>>, vector<1x8x32xf32>
    %24 = vector.shape_cast %23 : vector<1x8x32xf32> to vector<8x32xf32>
    %c0_29 = arith.constant 0 : index
    %c0_30 = arith.constant 0 : index
    %25 = vector.load %arg18[%c0_29, %c0_30] : memref<8x32xf32, #tpu.memory_space<vmem>>, vector<8x32xf32>
    tpu.vector_store %arg18[%c0_29, %c0_30], %24 {strides = array<i32>} : memref<8x32xf32, #tpu.memory_space<vmem>>, vector<8x32xf32>,
    %c0_31 = arith.constant 0 : index
    %c0_32 = arith.constant 0 : index
    %26 = vector.load %arg17[%c0_31, %c0_32] : memref<8x32xf32, #tpu.memory_space<vmem>>, vector<8x32xf32>
    %c0_33 = arith.constant 0 : index
    %c0_34 = arith.constant 0 : index
    %27 = vector.load %arg18[%c0_33, %c0_34] : memref<8x32xf32, #tpu.memory_space<vmem>>, vector<8x32xf32>
    %28 = arith.truncf %26 : vector<8x32xf32> to vector<8x32xbf16>
    %cst = arith.constant dense<0.000000e+00> : vector<8x96xf32>
    %29 = tpu.matmul %28, %3, %cst {dimension_numbers = #tpu.dot_dimension_numbers<[1], [0], [0], [1], [0, 0, 1, 1], [], []>} : vector<8x32xbf16>, vector<32x96xbf16>, vector<8x96xf32> -> vector<8x96xf32>
    %30 = vector.broadcast %5 : vector<1x96xf32> to vector<8x96xf32>
    %31 = arith.addf %29, %30 : vector<8x96xf32>
    %32 = arith.truncf %27 : vector<8x32xf32> to vector<8x32xbf16>
    %cst_35 = arith.constant dense<0.000000e+00> : vector<8x96xf32>
    %33 = tpu.matmul %32, %4, %cst_35 {dimension_numbers = #tpu.dot_dimension_numbers<[1], [0], [0], [1], [0, 0, 1, 1], [], []>} : vector<8x32xbf16>, vector<32x96xbf16>, vector<8x96xf32> -> vector<8x96xf32>
    %34 = vector.broadcast %6 : vector<1x96xf32> to vector<8x96xf32>
    %35 = arith.addf %33, %34 : vector<8x96xf32>
    %36 = vector.extract_strided_slice %31 {offsets = [0, 0], sizes = [8, 32], strides = [1, 1]} : vector<8x96xf32> to vector<8x32xf32>
    %37 = vector.extract_strided_slice %35 {offsets = [0, 0], sizes = [8, 32], strides = [1, 1]} : vector<8x96xf32> to vector<8x32xf32>
    %38 = arith.addf %36, %37 : vector<8x32xf32>
    %39 = arith.negf %38 : vector<8x32xf32>
    %40 = math.exp %39 : vector<8x32xf32>
    %cst_36 = arith.constant 1.000000e+00 : f32
    %41 = vector.broadcast %cst_36 : f32 to vector<8x32xf32>
    %42 = arith.addf %41, %40 : vector<8x32xf32>
    %43 = arith.divf %41, %42 : vector<8x32xf32>
    %44 = vector.extract_strided_slice %31 {offsets = [0, 32], sizes = [8, 32], strides = [1, 1]} : vector<8x96xf32> to vector<8x32xf32>
    %45 = vector.extract_strided_slice %35 {offsets = [0, 32], sizes = [8, 32], strides = [1, 1]} : vector<8x96xf32> to vector<8x32xf32>
    %46 = arith.addf %44, %45 : vector<8x32xf32>
    %47 = arith.negf %46 : vector<8x32xf32>
    %48 = math.exp %47 : vector<8x32xf32>
    %cst_37 = arith.constant 1.000000e+00 : f32
    %49 = vector.broadcast %cst_37 : f32 to vector<8x32xf32>
    %50 = arith.addf %49, %48 : vector<8x32xf32>
    %51 = arith.divf %49, %50 : vector<8x32xf32>
    %52 = vector.extract_strided_slice %31 {offsets = [0, 64], sizes = [8, 32], strides = [1, 1]} : vector<8x96xf32> to vector<8x32xf32>
    %53 = vector.extract_strided_slice %35 {offsets = [0, 64], sizes = [8, 32], strides = [1, 1]} : vector<8x96xf32> to vector<8x32xf32>
    %54 = arith.mulf %43, %53 : vector<8x32xf32>
    %55 = arith.addf %52, %54 : vector<8x32xf32>
    %56 = math.tanh %55 : vector<8x32xf32>
    %cst_38 = arith.constant 1.000000e+00 : f32
    %57 = vector.broadcast %cst_38 : f32 to vector<8x32xf32>
    %58 = arith.subf %57, %51 : vector<8x32xf32>
    %59 = arith.mulf %58, %56 : vector<8x32xf32>
    %60 = arith.mulf %51, %27 : vector<8x32xf32>
    %61 = arith.addf %59, %60 : vector<8x32xf32>
    %62 = arith.truncf %61 : vector<8x32xf32> to vector<8x32xbf16>
    %63 = vector.shape_cast %62 : vector<8x32xbf16> to vector<1x8x32xbf16>
    "tpu.trace_start"() <{level = 10 : i32, message = "bjh,bth->bjt"}> : () -> ()
    %cst_39 = arith.constant dense<0.000000e+00> : vector<1x8x8xf32>
    %64 = tpu.matmul %63, %0, %cst_39 {dimension_numbers = #tpu.dot_dimension_numbers<[2], [2], [1], [1], [0, 0, 0, 1, 1, 1], [0], [0]>} : vector<1x8x32xbf16>, vector<1x8x32xbf16>, vector<1x8x8xf32> -> vector<1x8x8xf32>
    "tpu.trace_stop"() : () -> ()
    %65 = vector.broadcast %1 : vector<1x1x8xf32> to vector<1x8x8xf32>
    %66 = arith.addf %64, %65 : vector<1x8x8xf32>
    %cst_40 = arith.constant dense<0xFF800000> : vector<1x8xf32>
    %67 = vector.multi_reduction <maximumf>, %66, %cst_40 [2] : vector<1x8x8xf32> to vector<1x8xf32>
    %68 = vector.shape_cast %67 : vector<1x8xf32> to vector<1x8x1xf32>
    %69 = vector.broadcast %68 : vector<1x8x1xf32> to vector<1x8x8xf32>
    %70 = arith.subf %66, %69 : vector<1x8x8xf32>
    %71 = math.exp %70 : vector<1x8x8xf32>
    %cst_41 = arith.constant dense<0.000000e+00> : vector<1x8xf32>
    %72 = vector.multi_reduction <add>, %71, %cst_41 [2] : vector<1x8x8xf32> to vector<1x8xf32>
    %73 = vector.shape_cast %72 : vector<1x8xf32> to vector<1x8x1xf32>
    %74 = tpu.reciprocal %73 {approx = true} : vector<1x8x1xf32> -> vector<1x8x1xf32>
    %75 = vector.broadcast %74 : vector<1x8x1xf32> to vector<1x8x8xf32>
    %76 = arith.mulf %71, %75 : vector<1x8x8xf32>
    %77 = arith.truncf %76 : vector<1x8x8xf32> to vector<1x8x8xbf16>
    %cst_42 = arith.constant dense<0.000000e+00> : vector<8x128xf32>
    %78 = tpu.matmul %62, %2, %cst_42 {dimension_numbers = #tpu.dot_dimension_numbers<[1], [1], [0], [0], [0, 0, 1, 0], [], []>} : vector<8x32xbf16>, vector<128x32xbf16>, vector<8x128xf32> -> vector<8x128xf32>
    %cst_43 = arith.constant dense<0xFF800000> : vector<8xf32>
    %79 = vector.multi_reduction <maximumf>, %78, %cst_43 [1] : vector<8x128xf32> to vector<8xf32>
    %80 = vector.shape_cast %79 : vector<8xf32> to vector<8x1xf32>
    %81 = vector.broadcast %80 : vector<8x1xf32> to vector<8x128xf32>
    %82 = arith.subf %78, %81 : vector<8x128xf32>
    %83 = math.exp %82 : vector<8x128xf32>
    %cst_44 = arith.constant dense<0.000000e+00> : vector<8xf32>
    %84 = vector.multi_reduction <add>, %83, %cst_44 [1] : vector<8x128xf32> to vector<8xf32>
    %85 = vector.shape_cast %84 : vector<8xf32> to vector<8x1xf32>
    %86 = tpu.reciprocal %85 {approx = true} : vector<8x1xf32> -> vector<8x1xf32>
    %87 = vector.broadcast %86 : vector<8x1xf32> to vector<8x128xf32>
    %88 = arith.mulf %83, %87 : vector<8x128xf32>
    "tpu.trace_start"() <{level = 10 : i32, message = "bjt,bth->bjh"}> : () -> ()
    %cst_45 = arith.constant dense<0.000000e+00> : vector<1x8x32xf32>
    %89 = tpu.matmul %77, %0, %cst_45 {dimension_numbers = #tpu.dot_dimension_numbers<[2], [1], [1], [2], [0, 0, 0, 1, 1, 2], [0], [0]>} : vector<1x8x8xbf16>, vector<1x8x32xbf16>, vector<1x8x32xf32> -> vector<1x8x32xf32>
    "tpu.trace_stop"() : () -> ()
    %90 = vector.shape_cast %89 : vector<1x8x32xf32> to vector<8x32xf32>
    %cst_46 = arith.constant dense<0.000000e+00> : vector<8x1xf32>
    %91 = tpu.matmul %26, %9, %cst_46 {dimension_numbers = #tpu.dot_dimension_numbers<[1], [0], [0], [1], [0, 0, 1, 1], [], []>} : vector<8x32xf32>, vector<32x1xf32>, vector<8x1xf32> -> vector<8x1xf32>
    %cst_47 = arith.constant dense<0.000000e+00> : vector<8x1xf32>
    %92 = tpu.matmul %61, %10, %cst_47 {dimension_numbers = #tpu.dot_dimension_numbers<[1], [0], [0], [1], [0, 0, 1, 1], [], []>} : vector<8x32xf32>, vector<32x1xf32>, vector<8x1xf32> -> vector<8x1xf32>
    %93 = arith.addf %91, %92 : vector<8x1xf32>
    %cst_48 = arith.constant dense<0.000000e+00> : vector<8x1xf32>
    %94 = tpu.matmul %90, %11, %cst_48 {dimension_numbers = #tpu.dot_dimension_numbers<[1], [0], [0], [1], [0, 0, 1, 1], [], []>} : vector<8x32xf32>, vector<32x1xf32>, vector<8x1xf32> -> vector<8x1xf32>
    %95 = arith.addf %93, %94 : vector<8x1xf32>
    %96 = vector.broadcast %8 : vector<1x1xf32> to vector<8x1xf32>
    %97 = arith.addf %95, %96 : vector<8x1xf32>
    %98 = arith.negf %97 : vector<8x1xf32>
    %99 = math.exp %98 : vector<8x1xf32>
    %cst_49 = arith.constant 1.000000e+00 : f32
    %100 = vector.broadcast %cst_49 : f32 to vector<8x1xf32>
    %101 = arith.addf %100, %99 : vector<8x1xf32>
    %102 = arith.divf %100, %101 : vector<8x1xf32>
    "tpu.trace_start"() <{level = 10 : i32, message = "bjt,btv->bjv"}> : () -> ()
    %cst_50 = arith.constant dense<0.000000e+00> : vector<1x8x128xf32>
    %103 = tpu.matmul %77, %20, %cst_50 {dimension_numbers = #tpu.dot_dimension_numbers<[2], [1], [1], [2], [0, 0, 0, 1, 1, 2], [0], [0]>} : vector<1x8x8xbf16>, vector<1x8x128xbf16>, vector<1x8x128xf32> -> vector<1x8x128xf32>
    "tpu.trace_stop"() : () -> ()
    %104 = vector.shape_cast %103 : vector<1x8x128xf32> to vector<8x128xf32>
    %105 = vector.broadcast %102 : vector<8x1xf32> to vector<8x128xf32>
    %106 = arith.mulf %105, %88 : vector<8x128xf32>
    %cst_51 = arith.constant 1.000000e+00 : f32
    %107 = vector.broadcast %cst_51 : f32 to vector<8x1xf32>
    %108 = arith.subf %107, %102 : vector<8x1xf32>
    %109 = vector.broadcast %108 : vector<8x1xf32> to vector<8x128xf32>
    %110 = arith.mulf %109, %104 : vector<8x128xf32>
    %111 = arith.addf %106, %110 : vector<8x128xf32>
    %112 = vector.shape_cast %111 : vector<8x128xf32> to vector<1x8x128xf32>
    %c0_52 = arith.constant 0 : index
    %c0_53 = arith.constant 0 : index
    %c0_54 = arith.constant 0 : index
    %c0_55 = arith.constant 0 : index
    %113 = vector.load %arg15[%c0_52, %c0_53, %c0_54, %c0_55] : memref<1x8x4x128xf32, #tpu.memory_space<vmem>>, vector<1x8x1x128xf32>
    %114 = vector.shape_cast %113 : vector<1x8x1x128xf32> to vector<1x8x128xf32>
    %115 = vector.shape_cast %112 : vector<1x8x128xf32> to vector<1x8x1x128xf32>
    tpu.vector_store %arg15[%c0_52, %c0_53, %c0_54, %c0_55], %115 {strides = array<i32>} : memref<1x8x4x128xf32, #tpu.memory_space<vmem>>, vector<1x8x1x128xf32>,
    %cst_56 = arith.constant dense<0xFF800000> : vector<8xf32>
    %116 = vector.multi_reduction <maximumf>, %111, %cst_56 [1] : vector<8x128xf32> to vector<8xf32>
    %117 = vector.shape_cast %116 : vector<8xf32> to vector<8x1xf32>
    %118 = vector.broadcast %117 : vector<8x1xf32> to vector<8x128xf32>
    %119 = arith.cmpf oeq, %111, %118 : vector<8x128xf32>
    %c128_i32 = arith.constant 128 : i32
    %120 = vector.shape_cast %12 : vector<1x128xi32> to vector<1x128xi32>
    %121 = vector.broadcast %120 : vector<1x128xi32> to vector<8x128xi32>
    %122 = vector.broadcast %c128_i32 : i32 to vector<8x128xi32>
    %123 = arith.select %119, %121, %122 : vector<8x128xi1>, vector<8x128xi32>
    %cst_57 = arith.constant dense<2147483647> : vector<8xi32>
    %124 = vector.multi_reduction <minsi>, %123, %cst_57 [1] : vector<8x128xi32> to vector<8xi32>
    %125 = vector.shape_cast %124 : vector<8xi32> to vector<8x1xi32>
    %126 = vector.broadcast %12 : vector<1x128xi32> to vector<8x128xi32>
    %127 = vector.broadcast %125 : vector<8x1xi32> to vector<8x128xi32>
    %128 = arith.cmpi eq, %126, %127 : vector<8x128xi32>
    %129 = arith.extui %128 : vector<8x128xi1> to vector<8x128xi32>
    %130 = arith.sitofp %129 : vector<8x128xi32> to vector<8x128xf32>
    %131 = arith.truncf %130 : vector<8x128xf32> to vector<8x128xbf16>
    %cst_58 = arith.constant dense<0.000000e+00> : vector<8x32xf32>
    %132 = tpu.matmul %131, %2, %cst_58 {dimension_numbers = #tpu.dot_dimension_numbers<[1], [0], [0], [1], [0, 0, 1, 1], [], []>} : vector<8x128xbf16>, vector<128x32xbf16>, vector<8x32xf32> -> vector<8x32xf32>
    %c0_59 = arith.constant 0 : index
    %c0_60 = arith.constant 0 : index
    %133 = vector.load %arg17[%c0_59, %c0_60] : memref<8x32xf32, #tpu.memory_space<vmem>>, vector<8x32xf32>
    tpu.vector_store %arg17[%c0_59, %c0_60], %132 {strides = array<i32>} : memref<8x32xf32, #tpu.memory_space<vmem>>, vector<8x32xf32>,
    %c0_61 = arith.constant 0 : index
    %c0_62 = arith.constant 0 : index
    %134 = vector.load %arg18[%c0_61, %c0_62] : memref<8x32xf32, #tpu.memory_space<vmem>>, vector<8x32xf32>
    tpu.vector_store %arg18[%c0_61, %c0_62], %61 {strides = array<i32>} : memref<8x32xf32, #tpu.memory_space<vmem>>, vector<8x32xf32>,
    %135 = arith.truncf %90 : vector<8x32xf32> to vector<8x32xbf16>
    %c0_63 = arith.constant 0 : index
    %c0_64 = arith.constant 0 : index
    %136 = vector.load %arg13[%c0_63, %c0_64] : memref<32x5xbf16, #tpu.memory_space<vmem>>, vector<32x5xbf16>
    %cst_65 = arith.constant dense<0.000000e+00> : vector<8x5xf32>
    %137 = tpu.matmul %135, %136, %cst_65 {dimension_numbers = #tpu.dot_dimension_numbers<[1], [0], [0], [1], [0, 0, 1, 1], [], []>} : vector<8x32xbf16>, vector<32x5xbf16>, vector<8x5xf32> -> vector<8x5xf32>
    %c0_66 = arith.constant 0 : index
    %c0_67 = arith.constant 0 : index
    %138 = vector.load %arg14[%c0_66, %c0_67] : memref<1x5xf32, #tpu.memory_space<vmem>>, vector<1x5xf32>
    %139 = vector.broadcast %138 : vector<1x5xf32> to vector<8x5xf32>
    %140 = arith.addf %137, %139 : vector<8x5xf32>
    %141 = vector.shape_cast %140 : vector<8x5xf32> to vector<1x8x5xf32>
    %c0_68 = arith.constant 0 : index
    %c0_69 = arith.constant 0 : index
    %c0_70 = arith.constant 0 : index
    %142 = vector.load %arg16[%c0_68, %c0_69, %c0_70] : memref<1x8x5xf32, #tpu.memory_space<vmem>>, vector<1x8x5xf32>
    tpu.vector_store %arg16[%c0_68, %c0_69, %c0_70], %141 {strides = array<i32>} : memref<1x8x5xf32, #tpu.memory_space<vmem>>, vector<1x8x5xf32>,
    %c0_71 = arith.constant 0 : index
    %c0_72 = arith.constant 0 : index
    %143 = vector.load %arg17[%c0_71, %c0_72] : memref<8x32xf32, #tpu.memory_space<vmem>>, vector<8x32xf32>
    %c0_73 = arith.constant 0 : index
    %c0_74 = arith.constant 0 : index
    %144 = vector.load %arg18[%c0_73, %c0_74] : memref<8x32xf32, #tpu.memory_space<vmem>>, vector<8x32xf32>
    %145 = arith.truncf %143 : vector<8x32xf32> to vector<8x32xbf16>
    %cst_75 = arith.constant dense<0.000000e+00> : vector<8x96xf32>
    %146 = tpu.matmul %145, %3, %cst_75 {dimension_numbers = #tpu.dot_dimension_numbers<[1], [0], [0], [1], [0, 0, 1, 1], [], []>} : vector<8x32xbf16>, vector<32x96xbf16>, vector<8x96xf32> -> vector<8x96xf32>
    %147 = vector.broadcast %5 : vector<1x96xf32> to vector<8x96xf32>
    %148 = arith.addf %146, %147 : vector<8x96xf32>
    %149 = arith.truncf %144 : vector<8x32xf32> to vector<8x32xbf16>
    %cst_76 = arith.constant dense<0.000000e+00> : vector<8x96xf32>
    %150 = tpu.matmul %149, %4, %cst_76 {dimension_numbers = #tpu.dot_dimension_numbers<[1], [0], [0], [1], [0, 0, 1, 1], [], []>} : vector<8x32xbf16>, vector<32x96xbf16>, vector<8x96xf32> -> vector<8x96xf32>
    %151 = vector.broadcast %6 : vector<1x96xf32> to vector<8x96xf32>
    %152 = arith.addf %150, %151 : vector<8x96xf32>
    %153 = vector.extract_strided_slice %148 {offsets = [0, 0], sizes = [8, 32], strides = [1, 1]} : vector<8x96xf32> to vector<8x32xf32>
    %154 = vector.extract_strided_slice %152 {offsets = [0, 0], sizes = [8, 32], strides = [1, 1]} : vector<8x96xf32> to vector<8x32xf32>
    %155 = arith.addf %153, %154 : vector<8x32xf32>
    %156 = arith.negf %155 : vector<8x32xf32>
    %157 = math.exp %156 : vector<8x32xf32>
    %cst_77 = arith.constant 1.000000e+00 : f32
    %158 = vector.broadcast %cst_77 : f32 to vector<8x32xf32>
    %159 = arith.addf %158, %157 : vector<8x32xf32>
    %160 = arith.divf %158, %159 : vector<8x32xf32>
    %161 = vector.extract_strided_slice %148 {offsets = [0, 32], sizes = [8, 32], strides = [1, 1]} : vector<8x96xf32> to vector<8x32xf32>
    %162 = vector.extract_strided_slice %152 {offsets = [0, 32], sizes = [8, 32], strides = [1, 1]} : vector<8x96xf32> to vector<8x32xf32>
    %163 = arith.addf %161, %162 : vector<8x32xf32>
    %164 = arith.negf %163 : vector<8x32xf32>
    %165 = math.exp %164 : vector<8x32xf32>
    %cst_78 = arith.constant 1.000000e+00 : f32
    %166 = vector.broadcast %cst_78 : f32 to vector<8x32xf32>
    %167 = arith.addf %166, %165 : vector<8x32xf32>
    %168 = arith.divf %166, %167 : vector<8x32xf32>
    %169 = vector.extract_strided_slice %148 {offsets = [0, 64], sizes = [8, 32], strides = [1, 1]} : vector<8x96xf32> to vector<8x32xf32>
    %170 = vector.extract_strided_slice %152 {offsets = [0, 64], sizes = [8, 32], strides = [1, 1]} : vector<8x96xf32> to vector<8x32xf32>
    %171 = arith.mulf %160, %170 : vector<8x32xf32>
    %172 = arith.addf %169, %171 : vector<8x32xf32>
    %173 = math.tanh %172 : vector<8x32xf32>
    %cst_79 = arith.constant 1.000000e+00 : f32
    %174 = vector.broadcast %cst_79 : f32 to vector<8x32xf32>
    %175 = arith.subf %174, %168 : vector<8x32xf32>
    %176 = arith.mulf %175, %173 : vector<8x32xf32>
    %177 = arith.mulf %168, %144 : vector<8x32xf32>
    %178 = arith.addf %176, %177 : vector<8x32xf32>
    %179 = arith.truncf %178 : vector<8x32xf32> to vector<8x32xbf16>
    %180 = vector.shape_cast %179 : vector<8x32xbf16> to vector<1x8x32xbf16>
    "tpu.trace_start"() <{level = 10 : i32, message = "bjh,bth->bjt"}> : () -> ()
    %cst_80 = arith.constant dense<0.000000e+00> : vector<1x8x8xf32>
    %181 = tpu.matmul %180, %0, %cst_80 {dimension_numbers = #tpu.dot_dimension_numbers<[2], [2], [1], [1], [0, 0, 0, 1, 1, 1], [0], [0]>} : vector<1x8x32xbf16>, vector<1x8x32xbf16>, vector<1x8x8xf32> -> vector<1x8x8xf32>
    "tpu.trace_stop"() : () -> ()
    %182 = vector.broadcast %1 : vector<1x1x8xf32> to vector<1x8x8xf32>
    %183 = arith.addf %181, %182 : vector<1x8x8xf32>
    %cst_81 = arith.constant dense<0xFF800000> : vector<1x8xf32>
    %184 = vector.multi_reduction <maximumf>, %183, %cst_81 [2] : vector<1x8x8xf32> to vector<1x8xf32>
    %185 = vector.shape_cast %184 : vector<1x8xf32> to vector<1x8x1xf32>
    %186 = vector.broadcast %185 : vector<1x8x1xf32> to vector<1x8x8xf32>
    %187 = arith.subf %183, %186 : vector<1x8x8xf32>
    %188 = math.exp %187 : vector<1x8x8xf32>
    %cst_82 = arith.constant dense<0.000000e+00> : vector<1x8xf32>
    %189 = vector.multi_reduction <add>, %188, %cst_82 [2] : vector<1x8x8xf32> to vector<1x8xf32>
    %190 = vector.shape_cast %189 : vector<1x8xf32> to vector<1x8x1xf32>
    %191 = tpu.reciprocal %190 {approx = true} : vector<1x8x1xf32> -> vector<1x8x1xf32>
    %192 = vector.broadcast %191 : vector<1x8x1xf32> to vector<1x8x8xf32>
    %193 = arith.mulf %188, %192 : vector<1x8x8xf32>
    %194 = arith.truncf %193 : vector<1x8x8xf32> to vector<1x8x8xbf16>
    %cst_83 = arith.constant dense<0.000000e+00> : vector<8x128xf32>
    %195 = tpu.matmul %179, %2, %cst_83 {dimension_numbers = #tpu.dot_dimension_numbers<[1], [1], [0], [0], [0, 0, 1, 0], [], []>} : vector<8x32xbf16>, vector<128x32xbf16>, vector<8x128xf32> -> vector<8x128xf32>
    %cst_84 = arith.constant dense<0xFF800000> : vector<8xf32>
    %196 = vector.multi_reduction <maximumf>, %195, %cst_84 [1] : vector<8x128xf32> to vector<8xf32>
    %197 = vector.shape_cast %196 : vector<8xf32> to vector<8x1xf32>
    %198 = vector.broadcast %197 : vector<8x1xf32> to vector<8x128xf32>
    %199 = arith.subf %195, %198 : vector<8x128xf32>
    %200 = math.exp %199 : vector<8x128xf32>
    %cst_85 = arith.constant dense<0.000000e+00> : vector<8xf32>
    %201 = vector.multi_reduction <add>, %200, %cst_85 [1] : vector<8x128xf32> to vector<8xf32>
    %202 = vector.shape_cast %201 : vector<8xf32> to vector<8x1xf32>
    %203 = tpu.reciprocal %202 {approx = true} : vector<8x1xf32> -> vector<8x1xf32>
    %204 = vector.broadcast %203 : vector<8x1xf32> to vector<8x128xf32>
    %205 = arith.mulf %200, %204 : vector<8x128xf32>
    "tpu.trace_start"() <{level = 10 : i32, message = "bjt,bth->bjh"}> : () -> ()
    %cst_86 = arith.constant dense<0.000000e+00> : vector<1x8x32xf32>
    %206 = tpu.matmul %194, %0, %cst_86 {dimension_numbers = #tpu.dot_dimension_numbers<[2], [1], [1], [2], [0, 0, 0, 1, 1, 2], [0], [0]>} : vector<1x8x8xbf16>, vector<1x8x32xbf16>, vector<1x8x32xf32> -> vector<1x8x32xf32>
    "tpu.trace_stop"() : () -> ()
    %207 = vector.shape_cast %206 : vector<1x8x32xf32> to vector<8x32xf32>
    %cst_87 = arith.constant dense<0.000000e+00> : vector<8x1xf32>
    %208 = tpu.matmul %143, %9, %cst_87 {dimension_numbers = #tpu.dot_dimension_numbers<[1], [0], [0], [1], [0, 0, 1, 1], [], []>} : vector<8x32xf32>, vector<32x1xf32>, vector<8x1xf32> -> vector<8x1xf32>
    %cst_88 = arith.constant dense<0.000000e+00> : vector<8x1xf32>
    %209 = tpu.matmul %178, %10, %cst_88 {dimension_numbers = #tpu.dot_dimension_numbers<[1], [0], [0], [1], [0, 0, 1, 1], [], []>} : vector<8x32xf32>, vector<32x1xf32>, vector<8x1xf32> -> vector<8x1xf32>
    %210 = arith.addf %208, %209 : vector<8x1xf32>
    %cst_89 = arith.constant dense<0.000000e+00> : vector<8x1xf32>
    %211 = tpu.matmul %207, %11, %cst_89 {dimension_numbers = #tpu.dot_dimension_numbers<[1], [0], [0], [1], [0, 0, 1, 1], [], []>} : vector<8x32xf32>, vector<32x1xf32>, vector<8x1xf32> -> vector<8x1xf32>
    %212 = arith.addf %210, %211 : vector<8x1xf32>
    %213 = vector.broadcast %8 : vector<1x1xf32> to vector<8x1xf32>
    %214 = arith.addf %212, %213 : vector<8x1xf32>
    %215 = arith.negf %214 : vector<8x1xf32>
    %216 = math.exp %215 : vector<8x1xf32>
    %cst_90 = arith.constant 1.000000e+00 : f32
    %217 = vector.broadcast %cst_90 : f32 to vector<8x1xf32>
    %218 = arith.addf %217, %216 : vector<8x1xf32>
    %219 = arith.divf %217, %218 : vector<8x1xf32>
    "tpu.trace_start"() <{level = 10 : i32, message = "bjt,btv->bjv"}> : () -> ()
    %cst_91 = arith.constant dense<0.000000e+00> : vector<1x8x128xf32>
    %220 = tpu.matmul %194, %20, %cst_91 {dimension_numbers = #tpu.dot_dimension_numbers<[2], [1], [1], [2], [0, 0, 0, 1, 1, 2], [0], [0]>} : vector<1x8x8xbf16>, vector<1x8x128xbf16>, vector<1x8x128xf32> -> vector<1x8x128xf32>
    "tpu.trace_stop"() : () -> ()
    %221 = vector.shape_cast %220 : vector<1x8x128xf32> to vector<8x128xf32>
    %222 = vector.broadcast %219 : vector<8x1xf32> to vector<8x128xf32>
    %223 = arith.mulf %222, %205 : vector<8x128xf32>
    %cst_92 = arith.constant 1.000000e+00 : f32
    %224 = vector.broadcast %cst_92 : f32 to vector<8x1xf32>
    %225 = arith.subf %224, %219 : vector<8x1xf32>
    %226 = vector.broadcast %225 : vector<8x1xf32> to vector<8x128xf32>
    %227 = arith.mulf %226, %221 : vector<8x128xf32>
    %228 = arith.addf %223, %227 : vector<8x128xf32>
    %229 = vector.shape_cast %228 : vector<8x128xf32> to vector<1x8x128xf32>
    %c0_93 = arith.constant 0 : index
    %c0_94 = arith.constant 0 : index
    %c1 = arith.constant 1 : index
    %c0_95 = arith.constant 0 : index
    %230 = vector.load %arg15[%c0_93, %c0_94, %c1, %c0_95] : memref<1x8x4x128xf32, #tpu.memory_space<vmem>>, vector<1x8x1x128xf32>
    %231 = vector.shape_cast %230 : vector<1x8x1x128xf32> to vector<1x8x128xf32>
    %232 = vector.shape_cast %229 : vector<1x8x128xf32> to vector<1x8x1x128xf32>
    tpu.vector_store %arg15[%c0_93, %c0_94, %c1, %c0_95], %232 {strides = array<i32>} : memref<1x8x4x128xf32, #tpu.memory_space<vmem>>, vector<1x8x1x128xf32>,
    %cst_96 = arith.constant dense<0xFF800000> : vector<8xf32>
    %233 = vector.multi_reduction <maximumf>, %228, %cst_96 [1] : vector<8x128xf32> to vector<8xf32>
    %234 = vector.shape_cast %233 : vector<8xf32> to vector<8x1xf32>
    %235 = vector.broadcast %234 : vector<8x1xf32> to vector<8x128xf32>
    %236 = arith.cmpf oeq, %228, %235 : vector<8x128xf32>
    %c128_i32_97 = arith.constant 128 : i32
    %237 = vector.shape_cast %12 : vector<1x128xi32> to vector<1x128xi32>
    %238 = vector.broadcast %237 : vector<1x128xi32> to vector<8x128xi32>
    %239 = vector.broadcast %c128_i32_97 : i32 to vector<8x128xi32>
    %240 = arith.select %236, %238, %239 : vector<8x128xi1>, vector<8x128xi32>
    %cst_98 = arith.constant dense<2147483647> : vector<8xi32>
    %241 = vector.multi_reduction <minsi>, %240, %cst_98 [1] : vector<8x128xi32> to vector<8xi32>
    %242 = vector.shape_cast %241 : vector<8xi32> to vector<8x1xi32>
    %243 = vector.broadcast %12 : vector<1x128xi32> to vector<8x128xi32>
    %244 = vector.broadcast %242 : vector<8x1xi32> to vector<8x128xi32>
    %245 = arith.cmpi eq, %243, %244 : vector<8x128xi32>
    %246 = arith.extui %245 : vector<8x128xi1> to vector<8x128xi32>
    %247 = arith.sitofp %246 : vector<8x128xi32> to vector<8x128xf32>
    %248 = arith.truncf %247 : vector<8x128xf32> to vector<8x128xbf16>
    %cst_99 = arith.constant dense<0.000000e+00> : vector<8x32xf32>
    %249 = tpu.matmul %248, %2, %cst_99 {dimension_numbers = #tpu.dot_dimension_numbers<[1], [0], [0], [1], [0, 0, 1, 1], [], []>} : vector<8x128xbf16>, vector<128x32xbf16>, vector<8x32xf32> -> vector<8x32xf32>
    %c0_100 = arith.constant 0 : index
    %c0_101 = arith.constant 0 : index
    %250 = vector.load %arg17[%c0_100, %c0_101] : memref<8x32xf32, #tpu.memory_space<vmem>>, vector<8x32xf32>
    tpu.vector_store %arg17[%c0_100, %c0_101], %249 {strides = array<i32>} : memref<8x32xf32, #tpu.memory_space<vmem>>, vector<8x32xf32>,
    %c0_102 = arith.constant 0 : index
    %c0_103 = arith.constant 0 : index
    %251 = vector.load %arg18[%c0_102, %c0_103] : memref<8x32xf32, #tpu.memory_space<vmem>>, vector<8x32xf32>
    tpu.vector_store %arg18[%c0_102, %c0_103], %178 {strides = array<i32>} : memref<8x32xf32, #tpu.memory_space<vmem>>, vector<8x32xf32>,
    %c0_104 = arith.constant 0 : index
    %c0_105 = arith.constant 0 : index
    %252 = vector.load %arg17[%c0_104, %c0_105] : memref<8x32xf32, #tpu.memory_space<vmem>>, vector<8x32xf32>
    %c0_106 = arith.constant 0 : index
    %c0_107 = arith.constant 0 : index
    %253 = vector.load %arg18[%c0_106, %c0_107] : memref<8x32xf32, #tpu.memory_space<vmem>>, vector<8x32xf32>
    %254 = arith.truncf %252 : vector<8x32xf32> to vector<8x32xbf16>
    %cst_108 = arith.constant dense<0.000000e+00> : vector<8x96xf32>
    %255 = tpu.matmul %254, %3, %cst_108 {dimension_numbers = #tpu.dot_dimension_numbers<[1], [0], [0], [1], [0, 0, 1, 1], [], []>} : vector<8x32xbf16>, vector<32x96xbf16>, vector<8x96xf32> -> vector<8x96xf32>
    %256 = vector.broadcast %5 : vector<1x96xf32> to vector<8x96xf32>
    %257 = arith.addf %255, %256 : vector<8x96xf32>
    %258 = arith.truncf %253 : vector<8x32xf32> to vector<8x32xbf16>
    %cst_109 = arith.constant dense<0.000000e+00> : vector<8x96xf32>
    %259 = tpu.matmul %258, %4, %cst_109 {dimension_numbers = #tpu.dot_dimension_numbers<[1], [0], [0], [1], [0, 0, 1, 1], [], []>} : vector<8x32xbf16>, vector<32x96xbf16>, vector<8x96xf32> -> vector<8x96xf32>
    %260 = vector.broadcast %6 : vector<1x96xf32> to vector<8x96xf32>
    %261 = arith.addf %259, %260 : vector<8x96xf32>
    %262 = vector.extract_strided_slice %257 {offsets = [0, 0], sizes = [8, 32], strides = [1, 1]} : vector<8x96xf32> to vector<8x32xf32>
    %263 = vector.extract_strided_slice %261 {offsets = [0, 0], sizes = [8, 32], strides = [1, 1]} : vector<8x96xf32> to vector<8x32xf32>
    %264 = arith.addf %262, %263 : vector<8x32xf32>
    %265 = arith.negf %264 : vector<8x32xf32>
    %266 = math.exp %265 : vector<8x32xf32>
    %cst_110 = arith.constant 1.000000e+00 : f32
    %267 = vector.broadcast %cst_110 : f32 to vector<8x32xf32>
    %268 = arith.addf %267, %266 : vector<8x32xf32>
    %269 = arith.divf %267, %268 : vector<8x32xf32>
    %270 = vector.extract_strided_slice %257 {offsets = [0, 32], sizes = [8, 32], strides = [1, 1]} : vector<8x96xf32> to vector<8x32xf32>
    %271 = vector.extract_strided_slice %261 {offsets = [0, 32], sizes = [8, 32], strides = [1, 1]} : vector<8x96xf32> to vector<8x32xf32>
    %272 = arith.addf %270, %271 : vector<8x32xf32>
    %273 = arith.negf %272 : vector<8x32xf32>
    %274 = math.exp %273 : vector<8x32xf32>
    %cst_111 = arith.constant 1.000000e+00 : f32
    %275 = vector.broadcast %cst_111 : f32 to vector<8x32xf32>
    %276 = arith.addf %275, %274 : vector<8x32xf32>
    %277 = arith.divf %275, %276 : vector<8x32xf32>
    %278 = vector.extract_strided_slice %257 {offsets = [0, 64], sizes = [8, 32], strides = [1, 1]} : vector<8x96xf32> to vector<8x32xf32>
    %279 = vector.extract_strided_slice %261 {offsets = [0, 64], sizes = [8, 32], strides = [1, 1]} : vector<8x96xf32> to vector<8x32xf32>
    %280 = arith.mulf %269, %279 : vector<8x32xf32>
    %281 = arith.addf %278, %280 : vector<8x32xf32>
    %282 = math.tanh %281 : vector<8x32xf32>
    %cst_112 = arith.constant 1.000000e+00 : f32
    %283 = vector.broadcast %cst_112 : f32 to vector<8x32xf32>
    %284 = arith.subf %283, %277 : vector<8x32xf32>
    %285 = arith.mulf %284, %282 : vector<8x32xf32>
    %286 = arith.mulf %277, %253 : vector<8x32xf32>
    %287 = arith.addf %285, %286 : vector<8x32xf32>
    %288 = arith.truncf %287 : vector<8x32xf32> to vector<8x32xbf16>
    %289 = vector.shape_cast %288 : vector<8x32xbf16> to vector<1x8x32xbf16>
    "tpu.trace_start"() <{level = 10 : i32, message = "bjh,bth->bjt"}> : () -> ()
    %cst_113 = arith.constant dense<0.000000e+00> : vector<1x8x8xf32>
    %290 = tpu.matmul %289, %0, %cst_113 {dimension_numbers = #tpu.dot_dimension_numbers<[2], [2], [1], [1], [0, 0, 0, 1, 1, 1], [0], [0]>} : vector<1x8x32xbf16>, vector<1x8x32xbf16>, vector<1x8x8xf32> -> vector<1x8x8xf32>
    "tpu.trace_stop"() : () -> ()
    %291 = vector.broadcast %1 : vector<1x1x8xf32> to vector<1x8x8xf32>
    %292 = arith.addf %290, %291 : vector<1x8x8xf32>
    %cst_114 = arith.constant dense<0xFF800000> : vector<1x8xf32>
    %293 = vector.multi_reduction <maximumf>, %292, %cst_114 [2] : vector<1x8x8xf32> to vector<1x8xf32>
    %294 = vector.shape_cast %293 : vector<1x8xf32> to vector<1x8x1xf32>
    %295 = vector.broadcast %294 : vector<1x8x1xf32> to vector<1x8x8xf32>
    %296 = arith.subf %292, %295 : vector<1x8x8xf32>
    %297 = math.exp %296 : vector<1x8x8xf32>
    %cst_115 = arith.constant dense<0.000000e+00> : vector<1x8xf32>
    %298 = vector.multi_reduction <add>, %297, %cst_115 [2] : vector<1x8x8xf32> to vector<1x8xf32>
    %299 = vector.shape_cast %298 : vector<1x8xf32> to vector<1x8x1xf32>
    %300 = tpu.reciprocal %299 {approx = true} : vector<1x8x1xf32> -> vector<1x8x1xf32>
    %301 = vector.broadcast %300 : vector<1x8x1xf32> to vector<1x8x8xf32>
    %302 = arith.mulf %297, %301 : vector<1x8x8xf32>
    %303 = arith.truncf %302 : vector<1x8x8xf32> to vector<1x8x8xbf16>
    %cst_116 = arith.constant dense<0.000000e+00> : vector<8x128xf32>
    %304 = tpu.matmul %288, %2, %cst_116 {dimension_numbers = #tpu.dot_dimension_numbers<[1], [1], [0], [0], [0, 0, 1, 0], [], []>} : vector<8x32xbf16>, vector<128x32xbf16>, vector<8x128xf32> -> vector<8x128xf32>
    %cst_117 = arith.constant dense<0xFF800000> : vector<8xf32>
    %305 = vector.multi_reduction <maximumf>, %304, %cst_117 [1] : vector<8x128xf32> to vector<8xf32>
    %306 = vector.shape_cast %305 : vector<8xf32> to vector<8x1xf32>
    %307 = vector.broadcast %306 : vector<8x1xf32> to vector<8x128xf32>
    %308 = arith.subf %304, %307 : vector<8x128xf32>
    %309 = math.exp %308 : vector<8x128xf32>
    %cst_118 = arith.constant dense<0.000000e+00> : vector<8xf32>
    %310 = vector.multi_reduction <add>, %309, %cst_118 [1] : vector<8x128xf32> to vector<8xf32>
    %311 = vector.shape_cast %310 : vector<8xf32> to vector<8x1xf32>
    %312 = tpu.reciprocal %311 {approx = true} : vector<8x1xf32> -> vector<8x1xf32>
    %313 = vector.broadcast %312 : vector<8x1xf32> to vector<8x128xf32>
    %314 = arith.mulf %309, %313 : vector<8x128xf32>
    "tpu.trace_start"() <{level = 10 : i32, message = "bjt,bth->bjh"}> : () -> ()
    %cst_119 = arith.constant dense<0.000000e+00> : vector<1x8x32xf32>
    %315 = tpu.matmul %303, %0, %cst_119 {dimension_numbers = #tpu.dot_dimension_numbers<[2], [1], [1], [2], [0, 0, 0, 1, 1, 2], [0], [0]>} : vector<1x8x8xbf16>, vector<1x8x32xbf16>, vector<1x8x32xf32> -> vector<1x8x32xf32>
    "tpu.trace_stop"() : () -> ()
    %316 = vector.shape_cast %315 : vector<1x8x32xf32> to vector<8x32xf32>
    %cst_120 = arith.constant dense<0.000000e+00> : vector<8x1xf32>
    %317 = tpu.matmul %252, %9, %cst_120 {dimension_numbers = #tpu.dot_dimension_numbers<[1], [0], [0], [1], [0, 0, 1, 1], [], []>} : vector<8x32xf32>, vector<32x1xf32>, vector<8x1xf32> -> vector<8x1xf32>
    %cst_121 = arith.constant dense<0.000000e+00> : vector<8x1xf32>
    %318 = tpu.matmul %287, %10, %cst_121 {dimension_numbers = #tpu.dot_dimension_numbers<[1], [0], [0], [1], [0, 0, 1, 1], [], []>} : vector<8x32xf32>, vector<32x1xf32>, vector<8x1xf32> -> vector<8x1xf32>
    %319 = arith.addf %317, %318 : vector<8x1xf32>
    %cst_122 = arith.constant dense<0.000000e+00> : vector<8x1xf32>
    %320 = tpu.matmul %316, %11, %cst_122 {dimension_numbers = #tpu.dot_dimension_numbers<[1], [0], [0], [1], [0, 0, 1, 1], [], []>} : vector<8x32xf32>, vector<32x1xf32>, vector<8x1xf32> -> vector<8x1xf32>
    %321 = arith.addf %319, %320 : vector<8x1xf32>
    %322 = vector.broadcast %8 : vector<1x1xf32> to vector<8x1xf32>
    %323 = arith.addf %321, %322 : vector<8x1xf32>
    %324 = arith.negf %323 : vector<8x1xf32>
    %325 = math.exp %324 : vector<8x1xf32>
    %cst_123 = arith.constant 1.000000e+00 : f32
    %326 = vector.broadcast %cst_123 : f32 to vector<8x1xf32>
    %327 = arith.addf %326, %325 : vector<8x1xf32>
    %328 = arith.divf %326, %327 : vector<8x1xf32>
    "tpu.trace_start"() <{level = 10 : i32, message = "bjt,btv->bjv"}> : () -> ()
    %cst_124 = arith.constant dense<0.000000e+00> : vector<1x8x128xf32>
    %329 = tpu.matmul %303, %20, %cst_124 {dimension_numbers = #tpu.dot_dimension_numbers<[2], [1], [1], [2], [0, 0, 0, 1, 1, 2], [0], [0]>} : vector<1x8x8xbf16>, vector<1x8x128xbf16>, vector<1x8x128xf32> -> vector<1x8x128xf32>
    "tpu.trace_stop"() : () -> ()
    %330 = vector.shape_cast %329 : vector<1x8x128xf32> to vector<8x128xf32>
    %331 = vector.broadcast %328 : vector<8x1xf32> to vector<8x128xf32>
    %332 = arith.mulf %331, %314 : vector<8x128xf32>
    %cst_125 = arith.constant 1.000000e+00 : f32
    %333 = vector.broadcast %cst_125 : f32 to vector<8x1xf32>
    %334 = arith.subf %333, %328 : vector<8x1xf32>
    %335 = vector.broadcast %334 : vector<8x1xf32> to vector<8x128xf32>
    %336 = arith.mulf %335, %330 : vector<8x128xf32>
    %337 = arith.addf %332, %336 : vector<8x128xf32>
    %338 = vector.shape_cast %337 : vector<8x128xf32> to vector<1x8x128xf32>
    %c0_126 = arith.constant 0 : index
    %c0_127 = arith.constant 0 : index
    %c2 = arith.constant 2 : index
    %c0_128 = arith.constant 0 : index
    %339 = vector.load %arg15[%c0_126, %c0_127, %c2, %c0_128] : memref<1x8x4x128xf32, #tpu.memory_space<vmem>>, vector<1x8x1x128xf32>
    %340 = vector.shape_cast %339 : vector<1x8x1x128xf32> to vector<1x8x128xf32>
    %341 = vector.shape_cast %338 : vector<1x8x128xf32> to vector<1x8x1x128xf32>
    tpu.vector_store %arg15[%c0_126, %c0_127, %c2, %c0_128], %341 {strides = array<i32>} : memref<1x8x4x128xf32, #tpu.memory_space<vmem>>, vector<1x8x1x128xf32>,
    %cst_129 = arith.constant dense<0xFF800000> : vector<8xf32>
    %342 = vector.multi_reduction <maximumf>, %337, %cst_129 [1] : vector<8x128xf32> to vector<8xf32>
    %343 = vector.shape_cast %342 : vector<8xf32> to vector<8x1xf32>
    %344 = vector.broadcast %343 : vector<8x1xf32> to vector<8x128xf32>
    %345 = arith.cmpf oeq, %337, %344 : vector<8x128xf32>
    %c128_i32_130 = arith.constant 128 : i32
    %346 = vector.shape_cast %12 : vector<1x128xi32> to vector<1x128xi32>
    %347 = vector.broadcast %346 : vector<1x128xi32> to vector<8x128xi32>
    %348 = vector.broadcast %c128_i32_130 : i32 to vector<8x128xi32>
    %349 = arith.select %345, %347, %348 : vector<8x128xi1>, vector<8x128xi32>
    %cst_131 = arith.constant dense<2147483647> : vector<8xi32>
    %350 = vector.multi_reduction <minsi>, %349, %cst_131 [1] : vector<8x128xi32> to vector<8xi32>
    %351 = vector.shape_cast %350 : vector<8xi32> to vector<8x1xi32>
    %352 = vector.broadcast %12 : vector<1x128xi32> to vector<8x128xi32>
    %353 = vector.broadcast %351 : vector<8x1xi32> to vector<8x128xi32>
    %354 = arith.cmpi eq, %352, %353 : vector<8x128xi32>
    %355 = arith.extui %354 : vector<8x128xi1> to vector<8x128xi32>
    %356 = arith.sitofp %355 : vector<8x128xi32> to vector<8x128xf32>
    %357 = arith.truncf %356 : vector<8x128xf32> to vector<8x128xbf16>
    %cst_132 = arith.constant dense<0.000000e+00> : vector<8x32xf32>
    %358 = tpu.matmul %357, %2, %cst_132 {dimension_numbers = #tpu.dot_dimension_numbers<[1], [0], [0], [1], [0, 0, 1, 1], [], []>} : vector<8x128xbf16>, vector<128x32xbf16>, vector<8x32xf32> -> vector<8x32xf32>
    %c0_133 = arith.constant 0 : index
    %c0_134 = arith.constant 0 : index
    %359 = vector.load %arg17[%c0_133, %c0_134] : memref<8x32xf32, #tpu.memory_space<vmem>>, vector<8x32xf32>
    tpu.vector_store %arg17[%c0_133, %c0_134], %358 {strides = array<i32>} : memref<8x32xf32, #tpu.memory_space<vmem>>, vector<8x32xf32>,
    %c0_135 = arith.constant 0 : index
    %c0_136 = arith.constant 0 : index
    %360 = vector.load %arg18[%c0_135, %c0_136] : memref<8x32xf32, #tpu.memory_space<vmem>>, vector<8x32xf32>
    tpu.vector_store %arg18[%c0_135, %c0_136], %287 {strides = array<i32>} : memref<8x32xf32, #tpu.memory_space<vmem>>, vector<8x32xf32>,
    %c0_137 = arith.constant 0 : index
    %c0_138 = arith.constant 0 : index
    %361 = vector.load %arg17[%c0_137, %c0_138] : memref<8x32xf32, #tpu.memory_space<vmem>>, vector<8x32xf32>
    %c0_139 = arith.constant 0 : index
    %c0_140 = arith.constant 0 : index
    %362 = vector.load %arg18[%c0_139, %c0_140] : memref<8x32xf32, #tpu.memory_space<vmem>>, vector<8x32xf32>
    %363 = arith.truncf %361 : vector<8x32xf32> to vector<8x32xbf16>
    %cst_141 = arith.constant dense<0.000000e+00> : vector<8x96xf32>
    %364 = tpu.matmul %363, %3, %cst_141 {dimension_numbers = #tpu.dot_dimension_numbers<[1], [0], [0], [1], [0, 0, 1, 1], [], []>} : vector<8x32xbf16>, vector<32x96xbf16>, vector<8x96xf32> -> vector<8x96xf32>
    %365 = vector.broadcast %5 : vector<1x96xf32> to vector<8x96xf32>
    %366 = arith.addf %364, %365 : vector<8x96xf32>
    %367 = arith.truncf %362 : vector<8x32xf32> to vector<8x32xbf16>
    %cst_142 = arith.constant dense<0.000000e+00> : vector<8x96xf32>
    %368 = tpu.matmul %367, %4, %cst_142 {dimension_numbers = #tpu.dot_dimension_numbers<[1], [0], [0], [1], [0, 0, 1, 1], [], []>} : vector<8x32xbf16>, vector<32x96xbf16>, vector<8x96xf32> -> vector<8x96xf32>
    %369 = vector.broadcast %6 : vector<1x96xf32> to vector<8x96xf32>
    %370 = arith.addf %368, %369 : vector<8x96xf32>
    %371 = vector.extract_strided_slice %366 {offsets = [0, 0], sizes = [8, 32], strides = [1, 1]} : vector<8x96xf32> to vector<8x32xf32>
    %372 = vector.extract_strided_slice %370 {offsets = [0, 0], sizes = [8, 32], strides = [1, 1]} : vector<8x96xf32> to vector<8x32xf32>
    %373 = arith.addf %371, %372 : vector<8x32xf32>
    %374 = arith.negf %373 : vector<8x32xf32>
    %375 = math.exp %374 : vector<8x32xf32>
    %cst_143 = arith.constant 1.000000e+00 : f32
    %376 = vector.broadcast %cst_143 : f32 to vector<8x32xf32>
    %377 = arith.addf %376, %375 : vector<8x32xf32>
    %378 = arith.divf %376, %377 : vector<8x32xf32>
    %379 = vector.extract_strided_slice %366 {offsets = [0, 32], sizes = [8, 32], strides = [1, 1]} : vector<8x96xf32> to vector<8x32xf32>
    %380 = vector.extract_strided_slice %370 {offsets = [0, 32], sizes = [8, 32], strides = [1, 1]} : vector<8x96xf32> to vector<8x32xf32>
    %381 = arith.addf %379, %380 : vector<8x32xf32>
    %382 = arith.negf %381 : vector<8x32xf32>
    %383 = math.exp %382 : vector<8x32xf32>
    %cst_144 = arith.constant 1.000000e+00 : f32
    %384 = vector.broadcast %cst_144 : f32 to vector<8x32xf32>
    %385 = arith.addf %384, %383 : vector<8x32xf32>
    %386 = arith.divf %384, %385 : vector<8x32xf32>
    %387 = vector.extract_strided_slice %366 {offsets = [0, 64], sizes = [8, 32], strides = [1, 1]} : vector<8x96xf32> to vector<8x32xf32>
    %388 = vector.extract_strided_slice %370 {offsets = [0, 64], sizes = [8, 32], strides = [1, 1]} : vector<8x96xf32> to vector<8x32xf32>
    %389 = arith.mulf %378, %388 : vector<8x32xf32>
    %390 = arith.addf %387, %389 : vector<8x32xf32>
    %391 = math.tanh %390 : vector<8x32xf32>
    %cst_145 = arith.constant 1.000000e+00 : f32
    %392 = vector.broadcast %cst_145 : f32 to vector<8x32xf32>
    %393 = arith.subf %392, %386 : vector<8x32xf32>
    %394 = arith.mulf %393, %391 : vector<8x32xf32>
    %395 = arith.mulf %386, %362 : vector<8x32xf32>
    %396 = arith.addf %394, %395 : vector<8x32xf32>
    %397 = arith.truncf %396 : vector<8x32xf32> to vector<8x32xbf16>
    %398 = vector.shape_cast %397 : vector<8x32xbf16> to vector<1x8x32xbf16>
    "tpu.trace_start"() <{level = 10 : i32, message = "bjh,bth->bjt"}> : () -> ()
    %cst_146 = arith.constant dense<0.000000e+00> : vector<1x8x8xf32>
    %399 = tpu.matmul %398, %0, %cst_146 {dimension_numbers = #tpu.dot_dimension_numbers<[2], [2], [1], [1], [0, 0, 0, 1, 1, 1], [0], [0]>} : vector<1x8x32xbf16>, vector<1x8x32xbf16>, vector<1x8x8xf32> -> vector<1x8x8xf32>
    "tpu.trace_stop"() : () -> ()
    %400 = vector.broadcast %1 : vector<1x1x8xf32> to vector<1x8x8xf32>
    %401 = arith.addf %399, %400 : vector<1x8x8xf32>
    %cst_147 = arith.constant dense<0xFF800000> : vector<1x8xf32>
    %402 = vector.multi_reduction <maximumf>, %401, %cst_147 [2] : vector<1x8x8xf32> to vector<1x8xf32>
    %403 = vector.shape_cast %402 : vector<1x8xf32> to vector<1x8x1xf32>
    %404 = vector.broadcast %403 : vector<1x8x1xf32> to vector<1x8x8xf32>
    %405 = arith.subf %401, %404 : vector<1x8x8xf32>
    %406 = math.exp %405 : vector<1x8x8xf32>
    %cst_148 = arith.constant dense<0.000000e+00> : vector<1x8xf32>
    %407 = vector.multi_reduction <add>, %406, %cst_148 [2] : vector<1x8x8xf32> to vector<1x8xf32>
    %408 = vector.shape_cast %407 : vector<1x8xf32> to vector<1x8x1xf32>
    %409 = tpu.reciprocal %408 {approx = true} : vector<1x8x1xf32> -> vector<1x8x1xf32>
    %410 = vector.broadcast %409 : vector<1x8x1xf32> to vector<1x8x8xf32>
    %411 = arith.mulf %406, %410 : vector<1x8x8xf32>
    %412 = arith.truncf %411 : vector<1x8x8xf32> to vector<1x8x8xbf16>
    %cst_149 = arith.constant dense<0.000000e+00> : vector<8x128xf32>
    %413 = tpu.matmul %397, %2, %cst_149 {dimension_numbers = #tpu.dot_dimension_numbers<[1], [1], [0], [0], [0, 0, 1, 0], [], []>} : vector<8x32xbf16>, vector<128x32xbf16>, vector<8x128xf32> -> vector<8x128xf32>
    %cst_150 = arith.constant dense<0xFF800000> : vector<8xf32>
    %414 = vector.multi_reduction <maximumf>, %413, %cst_150 [1] : vector<8x128xf32> to vector<8xf32>
    %415 = vector.shape_cast %414 : vector<8xf32> to vector<8x1xf32>
    %416 = vector.broadcast %415 : vector<8x1xf32> to vector<8x128xf32>
    %417 = arith.subf %413, %416 : vector<8x128xf32>
    %418 = math.exp %417 : vector<8x128xf32>
    %cst_151 = arith.constant dense<0.000000e+00> : vector<8xf32>
    %419 = vector.multi_reduction <add>, %418, %cst_151 [1] : vector<8x128xf32> to vector<8xf32>
    %420 = vector.shape_cast %419 : vector<8xf32> to vector<8x1xf32>
    %421 = tpu.reciprocal %420 {approx = true} : vector<8x1xf32> -> vector<8x1xf32>
    %422 = vector.broadcast %421 : vector<8x1xf32> to vector<8x128xf32>
    %423 = arith.mulf %418, %422 : vector<8x128xf32>
    "tpu.trace_start"() <{level = 10 : i32, message = "bjt,bth->bjh"}> : () -> ()
    %cst_152 = arith.constant dense<0.000000e+00> : vector<1x8x32xf32>
    %424 = tpu.matmul %412, %0, %cst_152 {dimension_numbers = #tpu.dot_dimension_numbers<[2], [1], [1], [2], [0, 0, 0, 1, 1, 2], [0], [0]>} : vector<1x8x8xbf16>, vector<1x8x32xbf16>, vector<1x8x32xf32> -> vector<1x8x32xf32>
    "tpu.trace_stop"() : () -> ()
    %425 = vector.shape_cast %424 : vector<1x8x32xf32> to vector<8x32xf32>
    %cst_153 = arith.constant dense<0.000000e+00> : vector<8x1xf32>
    %426 = tpu.matmul %361, %9, %cst_153 {dimension_numbers = #tpu.dot_dimension_numbers<[1], [0], [0], [1], [0, 0, 1, 1], [], []>} : vector<8x32xf32>, vector<32x1xf32>, vector<8x1xf32> -> vector<8x1xf32>
    %cst_154 = arith.constant dense<0.000000e+00> : vector<8x1xf32>
    %427 = tpu.matmul %396, %10, %cst_154 {dimension_numbers = #tpu.dot_dimension_numbers<[1], [0], [0], [1], [0, 0, 1, 1], [], []>} : vector<8x32xf32>, vector<32x1xf32>, vector<8x1xf32> -> vector<8x1xf32>
    %428 = arith.addf %426, %427 : vector<8x1xf32>
    %cst_155 = arith.constant dense<0.000000e+00> : vector<8x1xf32>
    %429 = tpu.matmul %425, %11, %cst_155 {dimension_numbers = #tpu.dot_dimension_numbers<[1], [0], [0], [1], [0, 0, 1, 1], [], []>} : vector<8x32xf32>, vector<32x1xf32>, vector<8x1xf32> -> vector<8x1xf32>
    %430 = arith.addf %428, %429 : vector<8x1xf32>
    %431 = vector.broadcast %8 : vector<1x1xf32> to vector<8x1xf32>
    %432 = arith.addf %430, %431 : vector<8x1xf32>
    %433 = arith.negf %432 : vector<8x1xf32>
    %434 = math.exp %433 : vector<8x1xf32>
    %cst_156 = arith.constant 1.000000e+00 : f32
    %435 = vector.broadcast %cst_156 : f32 to vector<8x1xf32>
    %436 = arith.addf %435, %434 : vector<8x1xf32>
    %437 = arith.divf %435, %436 : vector<8x1xf32>
    "tpu.trace_start"() <{level = 10 : i32, message = "bjt,btv->bjv"}> : () -> ()
    %cst_157 = arith.constant dense<0.000000e+00> : vector<1x8x128xf32>
    %438 = tpu.matmul %412, %20, %cst_157 {dimension_numbers = #tpu.dot_dimension_numbers<[2], [1], [1], [2], [0, 0, 0, 1, 1, 2], [0], [0]>} : vector<1x8x8xbf16>, vector<1x8x128xbf16>, vector<1x8x128xf32> -> vector<1x8x128xf32>
    "tpu.trace_stop"() : () -> ()
    %439 = vector.shape_cast %438 : vector<1x8x128xf32> to vector<8x128xf32>
    %440 = vector.broadcast %437 : vector<8x1xf32> to vector<8x128xf32>
    %441 = arith.mulf %440, %423 : vector<8x128xf32>
    %cst_158 = arith.constant 1.000000e+00 : f32
    %442 = vector.broadcast %cst_158 : f32 to vector<8x1xf32>
    %443 = arith.subf %442, %437 : vector<8x1xf32>
    %444 = vector.broadcast %443 : vector<8x1xf32> to vector<8x128xf32>
    %445 = arith.mulf %444, %439 : vector<8x128xf32>
    %446 = arith.addf %441, %445 : vector<8x128xf32>
    %447 = vector.shape_cast %446 : vector<8x128xf32> to vector<1x8x128xf32>
    %c0_159 = arith.constant 0 : index
    %c0_160 = arith.constant 0 : index
    %c3 = arith.constant 3 : index
    %c0_161 = arith.constant 0 : index
    %448 = vector.load %arg15[%c0_159, %c0_160, %c3, %c0_161] : memref<1x8x4x128xf32, #tpu.memory_space<vmem>>, vector<1x8x1x128xf32>
    %449 = vector.shape_cast %448 : vector<1x8x1x128xf32> to vector<1x8x128xf32>
    %450 = vector.shape_cast %447 : vector<1x8x128xf32> to vector<1x8x1x128xf32>
    tpu.vector_store %arg15[%c0_159, %c0_160, %c3, %c0_161], %450 {strides = array<i32>} : memref<1x8x4x128xf32, #tpu.memory_space<vmem>>, vector<1x8x1x128xf32>,
    %cst_162 = arith.constant dense<0xFF800000> : vector<8xf32>
    %451 = vector.multi_reduction <maximumf>, %446, %cst_162 [1] : vector<8x128xf32> to vector<8xf32>
    %452 = vector.shape_cast %451 : vector<8xf32> to vector<8x1xf32>
    %453 = vector.broadcast %452 : vector<8x1xf32> to vector<8x128xf32>
    %454 = arith.cmpf oeq, %446, %453 : vector<8x128xf32>
    %c128_i32_163 = arith.constant 128 : i32
    %455 = vector.shape_cast %12 : vector<1x128xi32> to vector<1x128xi32>
    %456 = vector.broadcast %455 : vector<1x128xi32> to vector<8x128xi32>
    %457 = vector.broadcast %c128_i32_163 : i32 to vector<8x128xi32>
    %458 = arith.select %454, %456, %457 : vector<8x128xi1>, vector<8x128xi32>
    %cst_164 = arith.constant dense<2147483647> : vector<8xi32>
    %459 = vector.multi_reduction <minsi>, %458, %cst_164 [1] : vector<8x128xi32> to vector<8xi32>
    %460 = vector.shape_cast %459 : vector<8xi32> to vector<8x1xi32>
    %461 = vector.broadcast %12 : vector<1x128xi32> to vector<8x128xi32>
    %462 = vector.broadcast %460 : vector<8x1xi32> to vector<8x128xi32>
    %463 = arith.cmpi eq, %461, %462 : vector<8x128xi32>
    %464 = arith.extui %463 : vector<8x128xi1> to vector<8x128xi32>
    %465 = arith.sitofp %464 : vector<8x128xi32> to vector<8x128xf32>
    %466 = arith.truncf %465 : vector<8x128xf32> to vector<8x128xbf16>
    %cst_165 = arith.constant dense<0.000000e+00> : vector<8x32xf32>
    %467 = tpu.matmul %466, %2, %cst_165 {dimension_numbers = #tpu.dot_dimension_numbers<[1], [0], [0], [1], [0, 0, 1, 1], [], []>} : vector<8x128xbf16>, vector<128x32xbf16>, vector<8x32xf32> -> vector<8x32xf32>
    %c0_166 = arith.constant 0 : index
    %c0_167 = arith.constant 0 : index
    %468 = vector.load %arg17[%c0_166, %c0_167] : memref<8x32xf32, #tpu.memory_space<vmem>>, vector<8x32xf32>
    tpu.vector_store %arg17[%c0_166, %c0_167], %467 {strides = array<i32>} : memref<8x32xf32, #tpu.memory_space<vmem>>, vector<8x32xf32>,
    %c0_168 = arith.constant 0 : index
    %c0_169 = arith.constant 0 : index
    %469 = vector.load %arg18[%c0_168, %c0_169] : memref<8x32xf32, #tpu.memory_space<vmem>>, vector<8x32xf32>
    tpu.vector_store %arg18[%c0_168, %c0_169], %396 {strides = array<i32>} : memref<8x32xf32, #tpu.memory_space<vmem>>, vector<8x32xf32>,
    return
  }
  func.func @transform_0(%arg0: i32) -> (i32, i32, i32) {
    %c0_i32 = arith.constant 0 : i32
    %c0_i32_0 = arith.constant 0 : i32
    %c0_i32_1 = arith.constant 0 : i32
    return %arg0, %c0_i32, %c0_i32_0 : i32, i32, i32
  }
  func.func @transform_1(%arg0: i32) -> (i32, i32, i32) {
    %c0_i32 = arith.constant 0 : i32
    %c0_i32_0 = arith.constant 0 : i32
    %c0_i32_1 = arith.constant 0 : i32
    return %arg0, %c0_i32, %c0_i32_0 : i32, i32, i32
  }
  func.func @transform_2(%arg0: i32) -> (i32, i32, i32) {
    %c0_i32 = arith.constant 0 : i32
    %c0_i32_0 = arith.constant 0 : i32
    %c0_i32_1 = arith.constant 0 : i32
    return %arg0, %c0_i32, %c0_i32_0 : i32, i32, i32
  }
  func.func @transform_3(%arg0: i32) -> (i32, i32) {
    %c0_i32 = arith.constant 0 : i32
    %c0_i32_0 = arith.constant 0 : i32
    %c0_i32_1 = arith.constant 0 : i32
    return %c0_i32, %c0_i32_0 : i32, i32
  }
  func.func @transform_4(%arg0: i32) -> (i32, i32, i32) {
    %c0_i32 = arith.constant 0 : i32
    %c0_i32_0 = arith.constant 0 : i32
    %c0_i32_1 = arith.constant 0 : i32
    return %arg0, %c0_i32, %c0_i32_0 : i32, i32, i32
  }
  func.func @transform_5(%arg0: i32) -> (i32, i32) {
    %c0_i32 = arith.constant 0 : i32
    %c0_i32_0 = arith.constant 0 : i32
    %c0_i32_1 = arith.constant 0 : i32
    return %c0_i32, %c0_i32_0 : i32, i32
  }
  func.func @transform_6(%arg0: i32) -> (i32, i32) {
    %c0_i32 = arith.constant 0 : i32
    %c0_i32_0 = arith.constant 0 : i32
    %c0_i32_1 = arith.constant 0 : i32
    return %c0_i32, %c0_i32_0 : i32, i32
  }
  func.func @transform_7(%arg0: i32) -> (i32, i32) {
    %c0_i32 = arith.constant 0 : i32
    %c0_i32_0 = arith.constant 0 : i32
    %c0_i32_1 = arith.constant 0 : i32
    return %c0_i32, %c0_i32_0 : i32, i32
  }
  func.func @transform_8(%arg0: i32) -> (i32, i32) {
    %c0_i32 = arith.constant 0 : i32
    %c0_i32_0 = arith.constant 0 : i32
    %c0_i32_1 = arith.constant 0 : i32
    return %c0_i32, %c0_i32_0 : i32, i32
  }
  func.func @transform_9(%arg0: i32) -> (i32, i32) {
    %c0_i32 = arith.constant 0 : i32
    %c0_i32_0 = arith.constant 0 : i32
    %c0_i32_1 = arith.constant 0 : i32
    return %c0_i32, %c0_i32_0 : i32, i32
  }
  func.func @transform_10(%arg0: i32) -> (i32, i32) {
    %c0_i32 = arith.constant 0 : i32
    %c0_i32_0 = arith.constant 0 : i32
    %c0_i32_1 = arith.constant 0 : i32
    return %c0_i32, %c0_i32_0 : i32, i32
  }
  func.func @transform_11(%arg0: i32) -> (i32, i32) {
    %c0_i32 = arith.constant 0 : i32
    %c0_i32_0 = arith.constant 0 : i32
    %c0_i32_1 = arith.constant 0 : i32
    return %c0_i32, %c0_i32_0 : i32, i32
  }
  func.func @transform_12(%arg0: i32) -> (i32, i32) {
    %c0_i32 = arith.constant 0 : i32
    %c0_i32_0 = arith.constant 0 : i32
    %c0_i32_1 = arith.constant 0 : i32
    return %c0_i32, %c0_i32_0 : i32, i32
  }
  func.func @transform_13(%arg0: i32) -> (i32, i32) {
    %c0_i32 = arith.constant 0 : i32
    %c0_i32_0 = arith.constant 0 : i32
    %c0_i32_1 = arith.constant 0 : i32
    return %c0_i32, %c0_i32_0 : i32, i32
  }
  func.func @transform_14(%arg0: i32) -> (i32, i32, i32, i32) {
    %c0_i32 = arith.constant 0 : i32
    %c0_i32_0 = arith.constant 0 : i32
    %c0_i32_1 = arith.constant 0 : i32
    %c0_i32_2 = arith.constant 0 : i32
    return %arg0, %c0_i32, %c0_i32_0, %c0_i32_1 : i32, i32, i32, i32
  }
  func.func @transform_15(%arg0: i32) -> (i32, i32, i32) {
    %c0_i32 = arith.constant 0 : i32
    %c0_i32_0 = arith.constant 0 : i32
    %c0_i32_1 = arith.constant 0 : i32
    return %arg0, %c0_i32, %c0_i32_0 : i32, i32, i32
  }
}

</mosaic_0001>

<llo_original>
// kernel: slot_generator_forward.1
$region0: #{slot_generator_forward.1}
  #allocation0 [shape = 'u32[]', space=smem, size = 0x4, offset = 0x4, fixed_abs, tag = 'smem constant byte address 0x4 - core index']
  #allocation1 [shape = 'u32[144,128]{1,0:T(1,128)}', space=vmem, size = 0x12000, scoped, tag = 'internal scratch']
  #allocation2 [shape = 'f32[8,32]{1,0:T(8,128)}', space=vmem, size = 0x1000, scoped, tag = 'scratch operand']
  #allocation3 [shape = 'f32[8,32]{1,0:T(8,128)}', space=vmem, size = 0x1000, scoped, tag = 'scratch operand']
  #allocation4 [shape = 'f32[1,1]{1,0:T(1,128)S(1)}', space=vmem, size = 0x200, scoped, tag = 'scoped memory for slot_generator_forward.1']
  %s0 = inlined_call_operand.vmem [shape: bf16[2,8,32], index: 0, kind: input, shape index: {}]
  %s1 = inlined_call_operand.vmem [shape: f32[2,1,8], index: 1, kind: input, shape index: {}]
  %s2 = inlined_call_operand.vmem [shape: s32[2,8,1], index: 2, kind: input, shape index: {}]
  %s3 = inlined_call_operand.vmem [shape: f32[8,32], index: 3, kind: input, shape index: {}]
  %s4 = inlined_call_operand.vmem [shape: f32[2,8,32], index: 4, kind: input, shape index: {}]
  %s5 = inlined_call_operand.vmem [shape: bf16[128,32], index: 5, kind: input, shape index: {}]
  %s6 = inlined_call_operand.vmem [shape: bf16[32,96], index: 6, kind: input, shape index: {}]
  %s7 = inlined_call_operand.vmem [shape: bf16[32,96], index: 7, kind: input, shape index: {}]
  %s8 = inlined_call_operand.vmem [shape: f32[1,96], index: 8, kind: input, shape index: {}]
  %s9 = inlined_call_operand.vmem [shape: f32[1,96], index: 9, kind: input, shape index: {}]
  %s10 = inlined_call_operand.vmem [shape: f32[96,1], index: 10, kind: input, shape index: {}]
  %s11 = inlined_call_operand.<no memory space> [shape: f32[1,1], index: 11, kind: input, shape index: {}]
  %s12 = inlined_call_operand.vmem [shape: bf16[32,5], index: 12, kind: input, shape index: {}]
  %s13 = inlined_call_operand.vmem [shape: f32[1,5], index: 13, kind: input, shape index: {}]
  %s14 = inlined_call_operand.vmem [shape: f32[2,8,4,128], index: 14, kind: output, shape index: {0}]
  %s15 = inlined_call_operand.vmem [shape: f32[2,8,5], index: 15, kind: output, shape index: {1}]
  %16 = xla_tuple %s14, %s15
  %s17 = sld [smem:[#allocation0]]
  $region97: #{slot_generator_forward.1} parent=0
    _
  %s19 = ssub.s32 1, %s17
  %s20 = scalar_select 0, %s19, %s17
  %v21 = vstv %s11
  %22 = vst [vmem:[#allocation4] sm:$0x1] %v21
  loop: start=0, step=1, limit=4
  $region2: #{slot_generator_forward.1} parent=0 // loop_pre_header
    _
  $region3: #{slot_generator_forward.1} parent=0 // loop_header
    %s24 = sphi 0, %s28
    %p25 = scmp.ge.s32.totalorder %s24, 4
    %s34 = sphi 0, %s36
    %s37 = sphi 0, %s34
    %s38 = sphi 0, %s37
    %s54 = sphi 0, %s38
    %s60 = sphi 0, %s62
    %s63 = sphi 0, %s60
    %s64 = sphi 0, %s63
    %s80 = sphi 0, %s64
    %s86 = sphi 0, %s88
    %s89 = sphi 0, %s86
    %s90 = sphi 0, %s89
    %s106 = sphi 0, %s90
    %s110 = sphi 0, %s110
    %s112 = sphi 0, %s110
    %s113 = sphi 0, %s112
    %s127 = sphi 0, %s113
    %s133 = sphi 0, %s135
    %s136 = sphi 0, %s133
    %s137 = sphi 0, %s136
    %s153 = sphi 0, %s137
    %s157 = sphi 0, %s157
    %s159 = sphi 0, %s157
    %s160 = sphi 0, %s159
    %s174 = sphi 0, %s160
    %s178 = sphi 0, %s178
    %s180 = sphi 0, %s178
    %s181 = sphi 0, %s180
    %s195 = sphi 0, %s181
    %s199 = sphi 0, %s199
    %s201 = sphi 0, %s199
    %s202 = sphi 0, %s201
    %s216 = sphi 0, %s202
    %s220 = sphi 0, %s220
    %s222 = sphi 0, %s220
    %s223 = sphi 0, %s222
    %s237 = sphi 0, %s223
    %s241 = sphi 0, %s241
    %s243 = sphi 0, %s241
    %s244 = sphi 0, %s243
    %s258 = sphi 0, %s244
    %s262 = sphi 0, %s262
    %s264 = sphi 0, %s262
    %s265 = sphi 0, %s264
    %s279 = sphi 0, %s265
    %s283 = sphi 0, %s283
    %s285 = sphi 0, %s283
    %s286 = sphi 0, %s285
    %s300 = sphi 0, %s286
    %s304 = sphi 0, %s304
    %s306 = sphi 0, %s304
    %s307 = sphi 0, %s306
    %s321 = sphi 0, %s307
    %s325 = sphi 0, %s325
    %s327 = sphi 0, %s325
    %s328 = sphi 0, %s327
    %s342 = sphi 0, %s328
    %s348 = sphi 0, %s350
    %s351 = sphi 0, %s348
    %s352 = sphi 0, %s351
    %s368 = sphi 0, %s352
    %s374 = sphi 0, %s376
    %s377 = sphi 0, %s374
    %s378 = sphi 0, %s377
    %s394 = sphi 0, %s378
  $region4: #{slot_generator_forward.1} parent=0 // loop_header_branch
    %27 = sbr.rel (%p25) target = $region8
  $region5: #{slot_generator_forward.1} parent=0 // loop_body
    %s29 = ssub.s32 %s24, 1
    %s30 = ssub.s32 %s24, 2
    %s31 = sadd.s32 %s24, 1
    %s32 = ssub.s32 %s24, %s31
    %p33 = scmp.eq.s32.totalorder %s32, 0
    %s35 = sadd.s32 %s34, 1
    %s36 = scalar_select %p33, %s34, %s35
    %p39 = pneg %p33
    %p40 = scmp.eq.s32.totalorder %s24, 1
    %p41 = por %p39, %p40
    %p42 = scmp.ne.s32.totalorder %s34, %s37
    %p43 = scmp.eq.s32.totalorder %s24, 0
    %p44 = por %p42, %p43
    %p45 = scmp.ne.s32.totalorder %s34, %s37
    %p46 = scmp.eq.s32.totalorder %s29, 1
    %p47 = por %p45, %p46
    %p48 = scmp.ne.s32.totalorder %s37, %s38
    %p49 = scmp.eq.s32.totalorder %s29, 0
    %p50 = por %p48, %p49
    %p51 = scmp.ne.s32.totalorder %s37, %s38
    %p52 = scmp.eq.s32.totalorder %s30, 1
    %p53 = por %p51, %p52
    %p55 = scmp.ne.s32.totalorder %s38, %s54
    %p56 = scmp.eq.s32.totalorder %s30, 0
    %p57 = por %p55, %p56
    %s58 = ssub.s32 %s24, %s31
    %p59 = scmp.eq.s32.totalorder %s58, 0
    %s61 = sadd.s32 %s60, 1
    %s62 = scalar_select %p59, %s60, %s61
    %p65 = pneg %p59
    %p66 = scmp.eq.s32.totalorder %s24, 1
    %p67 = por %p65, %p66
    %p68 = scmp.ne.s32.totalorder %s60, %s63
    %p69 = scmp.eq.s32.totalorder %s24, 0
    %p70 = por %p68, %p69
    %p71 = scmp.ne.s32.totalorder %s60, %s63
    %p72 = scmp.eq.s32.totalorder %s29, 1
    %p73 = por %p71, %p72
    %p74 = scmp.ne.s32.totalorder %s63, %s64
    %p75 = scmp.eq.s32.totalorder %s29, 0
    %p76 = por %p74, %p75
    %p77 = scmp.ne.s32.totalorder %s63, %s64
    %p78 = scmp.eq.s32.totalorder %s30, 1
    %p79 = por %p77, %p78
    %p81 = scmp.ne.s32.totalorder %s64, %s80
    %p82 = scmp.eq.s32.totalorder %s30, 0
    %p83 = por %p81, %p82
    %s84 = ssub.s32 %s24, %s31
    %p85 = scmp.eq.s32.totalorder %s84, 0
    %s87 = sadd.s32 %s86, 1
    %s88 = scalar_select %p85, %s86, %s87
    %p91 = pneg %p85
    %p92 = scmp.eq.s32.totalorder %s24, 1
    %p93 = por %p91, %p92
    %p94 = scmp.ne.s32.totalorder %s86, %s89
    %p95 = scmp.eq.s32.totalorder %s24, 0
    %p96 = por %p94, %p95
    %p97 = scmp.ne.s32.totalorder %s86, %s89
    %p98 = scmp.eq.s32.totalorder %s29, 1
    %p99 = por %p97, %p98
    %p100 = scmp.ne.s32.totalorder %s89, %s90
    %p101 = scmp.eq.s32.totalorder %s29, 0
    %p102 = por %p100, %p101
    %p103 = scmp.ne.s32.totalorder %s89, %s90
    %p104 = scmp.eq.s32.totalorder %s30, 1
    %p105 = por %p103, %p104
    %p107 = scmp.ne.s32.totalorder %s90, %s106
    %p108 = scmp.eq.s32.totalorder %s30, 0
    %p109 = por %p107, %p108
    %s111 = sadd.s32 %s110, 1
    %p114 = scmp.eq.s32.totalorder %s24, 1
    %p115 = scmp.ne.s32.totalorder %s110, %s112
    %p116 = scmp.eq.s32.totalorder %s24, 0
    %p117 = por %p115, %p116
    %p118 = scmp.ne.s32.totalorder %s110, %s112
    %p119 = scmp.eq.s32.totalorder %s29, 1
    %p120 = por %p118, %p119
    %p121 = scmp.ne.s32.totalorder %s112, %s113
    %p122 = scmp.eq.s32.totalorder %s29, 0
    %p123 = por %p121, %p122
    %p124 = scmp.ne.s32.totalorder %s112, %s113
    %p125 = scmp.eq.s32.totalorder %s30, 1
    %p126 = por %p124, %p125
    %p128 = scmp.ne.s32.totalorder %s113, %s127
    %p129 = scmp.eq.s32.totalorder %s30, 0
    %p130 = por %p128, %p129
    %s131 = ssub.s32 %s24, %s31
    %p132 = scmp.eq.s32.totalorder %s131, 0
    %s134 = sadd.s32 %s133, 1
    %s135 = scalar_select %p132, %s133, %s134
    %p138 = pneg %p132
    %p139 = scmp.eq.s32.totalorder %s24, 1
    %p140 = por %p138, %p139
    %p141 = scmp.ne.s32.totalorder %s133, %s136
    %p142 = scmp.eq.s32.totalorder %s24, 0
    %p143 = por %p141, %p142
    %p144 = scmp.ne.s32.totalorder %s133, %s136
    %p145 = scmp.eq.s32.totalorder %s29, 1
    %p146 = por %p144, %p145
    %p147 = scmp.ne.s32.totalorder %s136, %s137
    %p148 = scmp.eq.s32.totalorder %s29, 0
    %p149 = por %p147, %p148
    %p150 = scmp.ne.s32.totalorder %s136, %s137
    %p151 = scmp.eq.s32.totalorder %s30, 1
    %p152 = por %p150, %p151
    %p154 = scmp.ne.s32.totalorder %s137, %s153
    %p155 = scmp.eq.s32.totalorder %s30, 0
    %p156 = por %p154, %p155
    %s158 = sadd.s32 %s157, 1
    %p161 = scmp.eq.s32.totalorder %s24, 1
    %p162 = scmp.ne.s32.totalorder %s157, %s159
    %p163 = scmp.eq.s32.totalorder %s24, 0
    %p164 = por %p162, %p163
    %p165 = scmp.ne.s32.totalorder %s157, %s159
    %p166 = scmp.eq.s32.totalorder %s29, 1
    %p167 = por %p165, %p166
    %p168 = scmp.ne.s32.totalorder %s159, %s160
    %p169 = scmp.eq.s32.totalorder %s29, 0
    %p170 = por %p168, %p169
    %p171 = scmp.ne.s32.totalorder %s159, %s160
    %p172 = scmp.eq.s32.totalorder %s30, 1
    %p173 = por %p171, %p172
    %p175 = scmp.ne.s32.totalorder %s160, %s174
    %p176 = scmp.eq.s32.totalorder %s30, 0
    %p177 = por %p175, %p176
    %s179 = sadd.s32 %s178, 1
    %p182 = scmp.eq.s32.totalorder %s24, 1
    %p183 = scmp.ne.s32.totalorder %s178, %s180
    %p184 = scmp.eq.s32.totalorder %s24, 0
    %p185 = por %p183, %p184
    %p186 = scmp.ne.s32.totalorder %s178, %s180
    %p187 = scmp.eq.s32.totalorder %s29, 1
    %p188 = por %p186, %p187
    %p189 = scmp.ne.s32.totalorder %s180, %s181
    %p190 = scmp.eq.s32.totalorder %s29, 0
    %p191 = por %p189, %p190
    %p192 = scmp.ne.s32.totalorder %s180, %s181
    %p193 = scmp.eq.s32.totalorder %s30, 1
    %p194 = por %p192, %p193
    %p196 = scmp.ne.s32.totalorder %s181, %s195
    %p197 = scmp.eq.s32.totalorder %s30, 0
    %p198 = por %p196, %p197
    %s200 = sadd.s32 %s199, 1
    %p203 = scmp.eq.s32.totalorder %s24, 1
    %p204 = scmp.ne.s32.totalorder %s199, %s201
    %p205 = scmp.eq.s32.totalorder %s24, 0
    %p206 = por %p204, %p205
    %p207 = scmp.ne.s32.totalorder %s199, %s201
    %p208 = scmp.eq.s32.totalorder %s29, 1
    %p209 = por %p207, %p208
    %p210 = scmp.ne.s32.totalorder %s201, %s202
    %p211 = scmp.eq.s32.totalorder %s29, 0
    %p212 = por %p210, %p211
    %p213 = scmp.ne.s32.totalorder %s201, %s202
    %p214 = scmp.eq.s32.totalorder %s30, 1
    %p215 = por %p213, %p214
    %p217 = scmp.ne.s32.totalorder %s202, %s216
    %p218 = scmp.eq.s32.totalorder %s30, 0
    %p219 = por %p217, %p218
    %s221 = sadd.s32 %s220, 1
    %p224 = scmp.eq.s32.totalorder %s24, 1
    %p225 = scmp.ne.s32.totalorder %s220, %s222
    %p226 = scmp.eq.s32.totalorder %s24, 0
    %p227 = por %p225, %p226
    %p228 = scmp.ne.s32.totalorder %s220, %s222
    %p229 = scmp.eq.s32.totalorder %s29, 1
    %p230 = por %p228, %p229
    %p231 = scmp.ne.s32.totalorder %s222, %s223
    %p232 = scmp.eq.s32.totalorder %s29, 0
    %p233 = por %p231, %p232
    %p234 = scmp.ne.s32.totalorder %s222, %s223
    %p235 = scmp.eq.s32.totalorder %s30, 1
    %p236 = por %p234, %p235
    %p238 = scmp.ne.s32.totalorder %s223, %s237
    %p239 = scmp.eq.s32.totalorder %s30, 0
    %p240 = por %p238, %p239
    %s242 = sadd.s32 %s241, 1
    %p245 = scmp.eq.s32.totalorder %s24, 1
    %p246 = scmp.ne.s32.totalorder %s241, %s243
    %p247 = scmp.eq.s32.totalorder %s24, 0
    %p248 = por %p246, %p247
    %p249 = scmp.ne.s32.totalorder %s241, %s243
    %p250 = scmp.eq.s32.totalorder %s29, 1
    %p251 = por %p249, %p250
    %p252 = scmp.ne.s32.totalorder %s243, %s244
    %p253 = scmp.eq.s32.totalorder %s29, 0
    %p254 = por %p252, %p253
    %p255 = scmp.ne.s32.totalorder %s243, %s244
    %p256 = scmp.eq.s32.totalorder %s30, 1
    %p257 = por %p255, %p256
    %p259 = scmp.ne.s32.totalorder %s244, %s258
    %p260 = scmp.eq.s32.totalorder %s30, 0
    %p261 = por %p259, %p260
    %s263 = sadd.s32 %s262, 1
    %p266 = scmp.eq.s32.totalorder %s24, 1
    %p267 = scmp.ne.s32.totalorder %s262, %s264
    %p268 = scmp.eq.s32.totalorder %s24, 0
    %p269 = por %p267, %p268
    %p270 = scmp.ne.s32.totalorder %s262, %s264
    %p271 = scmp.eq.s32.totalorder %s29, 1
    %p272 = por %p270, %p271
    %p273 = scmp.ne.s32.totalorder %s264, %s265
    %p274 = scmp.eq.s32.totalorder %s29, 0
    %p275 = por %p273, %p274
    %p276 = scmp.ne.s32.totalorder %s264, %s265
    %p277 = scmp.eq.s32.totalorder %s30, 1
    %p278 = por %p276, %p277
    %p280 = scmp.ne.s32.totalorder %s265, %s279
    %p281 = scmp.eq.s32.totalorder %s30, 0
    %p282 = por %p280, %p281
    %s284 = sadd.s32 %s283, 1
    %p287 = scmp.eq.s32.totalorder %s24, 1
    %p288 = scmp.ne.s32.totalorder %s283, %s285
    %p289 = scmp.eq.s32.totalorder %s24, 0
    %p290 = por %p288, %p289
    %p291 = scmp.ne.s32.totalorder %s283, %s285
    %p292 = scmp.eq.s32.totalorder %s29, 1
    %p293 = por %p291, %p292
    %p294 = scmp.ne.s32.totalorder %s285, %s286
    %p295 = scmp.eq.s32.totalorder %s29, 0
    %p296 = por %p294, %p295
    %p297 = scmp.ne.s32.totalorder %s285, %s286
    %p298 = scmp.eq.s32.totalorder %s30, 1
    %p299 = por %p297, %p298
    %p301 = scmp.ne.s32.totalorder %s286, %s300
    %p302 = scmp.eq.s32.totalorder %s30, 0
    %p303 = por %p301, %p302
    %s305 = sadd.s32 %s304, 1
    %p308 = scmp.eq.s32.totalorder %s24, 1
    %p309 = scmp.ne.s32.totalorder %s304, %s306
    %p310 = scmp.eq.s32.totalorder %s24, 0
    %p311 = por %p309, %p310
    %p312 = scmp.ne.s32.totalorder %s304, %s306
    %p313 = scmp.eq.s32.totalorder %s29, 1
    %p314 = por %p312, %p313
    %p315 = scmp.ne.s32.totalorder %s306, %s307
    %p316 = scmp.eq.s32.totalorder %s29, 0
    %p317 = por %p315, %p316
    %p318 = scmp.ne.s32.totalorder %s306, %s307
    %p319 = scmp.eq.s32.totalorder %s30, 1
    %p320 = por %p318, %p319
    %p322 = scmp.ne.s32.totalorder %s307, %s321
    %p323 = scmp.eq.s32.totalorder %s30, 0
    %p324 = por %p322, %p323
    %s326 = sadd.s32 %s325, 1
    %p329 = scmp.eq.s32.totalorder %s24, 1
    %p330 = scmp.ne.s32.totalorder %s325, %s327
    %p331 = scmp.eq.s32.totalorder %s24, 0
    %p332 = por %p330, %p331
    %p333 = scmp.ne.s32.totalorder %s325, %s327
    %p334 = scmp.eq.s32.totalorder %s29, 1
    %p335 = por %p333, %p334
    %p336 = scmp.ne.s32.totalorder %s327, %s328
    %p337 = scmp.eq.s32.totalorder %s29, 0
    %p338 = por %p336, %p337
    %p339 = scmp.ne.s32.totalorder %s327, %s328
    %p340 = scmp.eq.s32.totalorder %s30, 1
    %p341 = por %p339, %p340
    %p343 = scmp.ne.s32.totalorder %s328, %s342
    %p344 = scmp.eq.s32.totalorder %s30, 0
    %p345 = por %p343, %p344
    %s346 = ssub.s32 %s24, %s31
    %p347 = scmp.eq.s32.totalorder %s346, 0
    %s349 = sadd.s32 %s348, 1
    %s350 = scalar_select %p347, %s348, %s349
    %p353 = pneg %p347
    %p354 = scmp.eq.s32.totalorder %s24, 1
    %p355 = por %p353, %p354
    %p356 = scmp.ne.s32.totalorder %s348, %s351
    %p357 = scmp.eq.s32.totalorder %s24, 0
    %p358 = por %p356, %p357
    %p359 = scmp.ne.s32.totalorder %s348, %s351
    %p360 = scmp.eq.s32.totalorder %s29, 1
    %p361 = por %p359, %p360
    %p362 = scmp.ne.s32.totalorder %s351, %s352
    %p363 = scmp.eq.s32.totalorder %s29, 0
    %p364 = por %p362, %p363
    %p365 = scmp.ne.s32.totalorder %s351, %s352
    %p366 = scmp.eq.s32.totalorder %s30, 1
    %p367 = por %p365, %p366
    %p369 = scmp.ne.s32.totalorder %s352, %s368
    %p370 = scmp.eq.s32.totalorder %s30, 0
    %p371 = por %p369, %p370
    %s372 = ssub.s32 %s24, %s31
    %p373 = scmp.eq.s32.totalorder %s372, 0
    %s375 = sadd.s32 %s374, 1
    %s376 = scalar_select %p373, %s374, %s375
    %p379 = pneg %p373
    %p380 = scmp.eq.s32.totalorder %s24, 1
    %p381 = por %p379, %p380
    %p382 = scmp.ne.s32.totalorder %s374, %s377
    %p383 = scmp.eq.s32.totalorder %s24, 0
    %p384 = por %p382, %p383
    %p385 = scmp.ne.s32.totalorder %s374, %s377
    %p386 = scmp.eq.s32.totalorder %s29, 1
    %p387 = por %p385, %p386
    %p388 = scmp.ne.s32.totalorder %s377, %s378
    %p389 = scmp.eq.s32.totalorder %s29, 0
    %p390 = por %p388, %p389
    %p391 = scmp.ne.s32.totalorder %s377, %s378
    %p392 = scmp.eq.s32.totalorder %s30, 1
    %p393 = por %p391, %p392
    %p395 = scmp.ne.s32.totalorder %s378, %s394
    %p396 = scmp.eq.s32.totalorder %s30, 0
    %p397 = por %p395, %p396
    %p398 = scmp.le.s32.totalorder 1, %s24
    %p399 = scmp.lt.s32.totalorder %s24, 3
    %p400 = pnand %p398, %p399
    %p401 = pneg %p400
    // Predicated region
    $region9: #{slot_generator_forward.1} parent=5 // pred_check
      _
    $region10: #{slot_generator_forward.1} parent=5 // pred_check_branch
      %403 = sbr.rel (%p400) target = $region12
    $region11: #{slot_generator_forward.1} parent=5 // pred_region
      %s404 = ssub.s32 %s24, 1
      // Predicated region
      $region13: #{slot_generator_forward.1} parent=11 // pred_check
        %p405 = pneg %p123
      $region14: #{slot_generator_forward.1} parent=11 // pred_check_branch
        %407 = sbr.rel (%p405) target = $region16
      $region15: #{slot_generator_forward.1} parent=11 // pred_region
        _
      $region16: #{slot_generator_forward.1} parent=11 // pred_fallthru
        _
      // Predicated region
      $region17: #{slot_generator_forward.1} parent=11 // pred_check
        %p408 = pneg %p170
      $region18: #{slot_generator_forward.1} parent=11 // pred_check_branch
        %410 = sbr.rel (%p408) target = $region20
      $region19: #{slot_generator_forward.1} parent=11 // pred_region
        _
      $region20: #{slot_generator_forward.1} parent=11 // pred_fallthru
        _
      // Predicated region
      $region21: #{slot_generator_forward.1} parent=11 // pred_check
        %p411 = pneg %p191
      $region22: #{slot_generator_forward.1} parent=11 // pred_check_branch
        %413 = sbr.rel (%p411) target = $region24
      $region23: #{slot_generator_forward.1} parent=11 // pred_region
        _
      $region24: #{slot_generator_forward.1} parent=11 // pred_fallthru
        _
      // Predicated region
      $region25: #{slot_generator_forward.1} parent=11 // pred_check
        %p414 = pneg %p212
      $region26: #{slot_generator_forward.1} parent=11 // pred_check_branch
        %416 = sbr.rel (%p414) target = $region28
      $region27: #{slot_generator_forward.1} parent=11 // pred_region
        _
      $region28: #{slot_generator_forward.1} parent=11 // pred_fallthru
        _
      // Predicated region
      $region29: #{slot_generator_forward.1} parent=11 // pred_check
        %p417 = pneg %p233
      $region30: #{slot_generator_forward.1} parent=11 // pred_check_branch
        %419 = sbr.rel (%p417) target = $region32
      $region31: #{slot_generator_forward.1} parent=11 // pred_region
        _
      $region32: #{slot_generator_forward.1} parent=11 // pred_fallthru
        _
      // Predicated region
      $region33: #{slot_generator_forward.1} parent=11 // pred_check
        %p420 = pneg %p254
      $region34: #{slot_generator_forward.1} parent=11 // pred_check_branch
        %422 = sbr.rel (%p420) target = $region36
      $region35: #{slot_generator_forward.1} parent=11 // pred_region
        _
      $region36: #{slot_generator_forward.1} parent=11 // pred_fallthru
        _
      // Predicated region
      $region37: #{slot_generator_forward.1} parent=11 // pred_check
        %p423 = pneg %p275
      $region38: #{slot_generator_forward.1} parent=11 // pred_check_branch
        %425 = sbr.rel (%p423) target = $region40
      $region39: #{slot_generator_forward.1} parent=11 // pred_region
        _
      $region40: #{slot_generator_forward.1} parent=11 // pred_fallthru
        _
      // Predicated region
      $region41: #{slot_generator_forward.1} parent=11 // pred_check
        %p426 = pneg %p296
      $region42: #{slot_generator_forward.1} parent=11 // pred_check_branch
        %428 = sbr.rel (%p426) target = $region44
      $region43: #{slot_generator_forward.1} parent=11 // pred_region
        _
      $region44: #{slot_generator_forward.1} parent=11 // pred_fallthru
        _
      // Predicated region
      $region45: #{slot_generator_forward.1} parent=11 // pred_check
        %p429 = pneg %p317
      $region46: #{slot_generator_forward.1} parent=11 // pred_check_branch
        %431 = sbr.rel (%p429) target = $region48
      $region47: #{slot_generator_forward.1} parent=11 // pred_region
        _
      $region48: #{slot_generator_forward.1} parent=11 // pred_fallthru
        _
      // Predicated region
      $region49: #{slot_generator_forward.1} parent=11 // pred_check
        %p432 = pneg %p338
      $region50: #{slot_generator_forward.1} parent=11 // pred_check_branch
        %434 = sbr.rel (%p432) target = $region52
      $region51: #{slot_generator_forward.1} parent=11 // pred_region
        _
      $region52: #{slot_generator_forward.1} parent=11 // pred_fallthru
        _
    $region12: #{slot_generator_forward.1} parent=5 // pred_fallthru
      _
    %p435 = scmp.lt.s32.totalorder %s24, 2
    // Predicated region
    $region53: #{slot_generator_forward.1} parent=5 // pred_check
      %p436 = pneg %p435
    $region54: #{slot_generator_forward.1} parent=5 // pred_check_branch
      %438 = sbr.rel (%p436) target = $region56
    $region55: #{slot_generator_forward.1} parent=5 // pred_region
      // Predicated region
      $region57: #{slot_generator_forward.1} parent=55 // pred_check
        %p439 = pneg %p44
      $region58: #{slot_generator_forward.1} parent=55 // pred_check_branch
        %441 = sbr.rel (%p439) target = $region60
      $region59: #{slot_generator_forward.1} parent=55 // pred_region
        %p442 = scmp.lt.s32.totalorder %s24, 1
        %s443 = scalar_select %p442, %s24, 1
        %s444 = smul.addr %s443, 4
        %s445 = scalar_lea.vmem %s0, %s444
      $region60: #{slot_generator_forward.1} parent=55 // pred_fallthru
        _
      // Predicated region
      $region61: #{slot_generator_forward.1} parent=55 // pred_check
        %p446 = pneg %p70
      $region62: #{slot_generator_forward.1} parent=55 // pred_check_branch
        %448 = sbr.rel (%p446) target = $region64
      $region63: #{slot_generator_forward.1} parent=55 // pred_region
        %p449 = scmp.lt.s32.totalorder %s24, 1
        %s450 = scalar_select %p449, %s24, 1
        %s451 = scalar_lea.vmem %s1, %s450
      $region64: #{slot_generator_forward.1} parent=55 // pred_fallthru
        _
      // Predicated region
      $region65: #{slot_generator_forward.1} parent=55 // pred_check
        %p452 = pneg %p96
      $region66: #{slot_generator_forward.1} parent=55 // pred_check_branch
        %454 = sbr.rel (%p452) target = $region68
      $region67: #{slot_generator_forward.1} parent=55 // pred_region
        %p455 = scmp.lt.s32.totalorder %s24, 1
        %s456 = scalar_select %p455, %s24, 1
        %s457 = smul.addr %s456, 8
        %s458 = scalar_lea.vmem %s2, %s457
      $region68: #{slot_generator_forward.1} parent=55 // pred_fallthru
        _
      // Predicated region
      $region69: #{slot_generator_forward.1} parent=55 // pred_check
        %p459 = pneg %p143
      $region70: #{slot_generator_forward.1} parent=55 // pred_check_branch
        %461 = sbr.rel (%p459) target = $region72
      $region71: #{slot_generator_forward.1} parent=55 // pred_region
        %p462 = scmp.lt.s32.totalorder %s24, 1
        %s463 = scalar_select %p462, %s24, 1
        %s464 = smul.addr %s463, 8
        %s465 = scalar_lea.vmem %s4, %s464
      $region72: #{slot_generator_forward.1} parent=55 // pred_fallthru
        _
    $region56: #{slot_generator_forward.1} parent=5 // pred_fallthru
      _
    %p466 = scmp.le.s32.totalorder 1, %s24
    %p467 = scmp.lt.s32.totalorder %s24, 3
    %p468 = pnand %p466, %p467
    %p469 = pneg %p468
    // Predicated region
    $region73: #{slot_generator_forward.1} parent=5 // pred_check
      _
    $region74: #{slot_generator_forward.1} parent=5 // pred_check_branch
      %471 = sbr.rel (%p468) target = $region76
    $region75: #{slot_generator_forward.1} parent=5 // pred_region
      %s472 = ssub.s32 %s24, 1
      %p473 = scmp.lt.s32.totalorder %s29, 1
      %s474 = scalar_select %p473, %s29, 1
      %s475 = smul.addr %s474, 4
      %s476 = scalar_lea.vmem %s0, %s475
      %p477 = pneg %p50
      %p478 = pneg %p47
      %p479 = scmp.lt.s32.totalorder %s29, 1
      %s480 = scalar_select %p479, %s29, 1
      %s481 = scalar_lea.vmem %s1, %s480
      %p482 = pneg %p76
      %p483 = pneg %p73
      %p484 = scmp.lt.s32.totalorder %s29, 1
      %s485 = scalar_select %p484, %s29, 1
      %s486 = smul.addr %s485, 8
      %s487 = scalar_lea.vmem %s2, %s486
      %p488 = pneg %p102
      %p489 = pneg %p99
      %p490 = pneg %p123
      %p491 = pneg %p120
      %p492 = scmp.lt.s32.totalorder %s29, 1
      %s493 = scalar_select %p492, %s29, 1
      %s494 = smul.addr %s493, 8
      %s495 = scalar_lea.vmem %s4, %s494
      %p496 = pneg %p149
      %p497 = pneg %p146
      %p498 = pneg %p170
      %p499 = pneg %p167
      %p500 = pneg %p191
      %p501 = pneg %p188
      %p502 = pneg %p212
      %p503 = pneg %p209
      %p504 = pneg %p233
      %p505 = pneg %p230
      %p506 = pneg %p254
      %p507 = pneg %p251
      %p508 = pneg %p275
      %p509 = pneg %p272
      %p510 = pneg %p296
      %p511 = pneg %p293
      %p512 = pneg %p317
      %p513 = pneg %p314
      %p514 = pneg %p338
      %p515 = pneg %p335
      %p516 = pneg %p364
      %p517 = pneg %p361
      %p518 = scmp.lt.s32.totalorder %s29, 1
      %s519 = scalar_select %p518, %s29, 1
      %s520 = smul.addr %s519, 8
      %s521 = smul.addr %s520, 4
      %s522 = scalar_lea.vmem %s14, %s521
      %p523 = pneg %p390
      %p524 = pneg %p387
      %p525 = scmp.lt.s32.totalorder %s29, 1
      %s526 = scalar_select %p525, %s29, 1
      %s527 = smul.addr %s526, 8
      %s528 = scalar_lea.vmem %s15, %s527
      %p529 = scmp.lt.s32.totalorder %s29, 1
      %s530 = scalar_select %p529, %s29, 1
      %s531 = smul.addr %s530, 4
      %s532 = scalar_lea.vmem %s0, %s531
      %p533 = scmp.lt.s32.totalorder %s29, 1
      %s534 = scalar_select %p533, %s29, 1
      %s535 = scalar_lea.vmem %s1, %s534
      %p536 = scmp.lt.s32.totalorder %s29, 1
      %s537 = scalar_select %p536, %s29, 1
      %s538 = smul.addr %s537, 8
      %s539 = scalar_lea.vmem %s2, %s538
      %p540 = scmp.lt.s32.totalorder %s29, 1
      %s541 = scalar_select %p540, %s29, 1
      %s542 = smul.addr %s541, 8
      %s543 = scalar_lea.vmem %s4, %s542
      %p544 = scmp.lt.s32.totalorder %s29, 1
      %s545 = scalar_select %p544, %s29, 1
      %s546 = smul.addr %s545, 8
      %s547 = smul.addr %s546, 4
      %s548 = scalar_lea.vmem %s14, %s547
      %p549 = scmp.lt.s32.totalorder %s29, 1
      %s550 = scalar_select %p549, %s29, 1
      %s551 = smul.addr %s550, 8
      %s552 = scalar_lea.vmem %s15, %s551
      %v554 = vld [vmem:[%s532] sm:$0xf]
      %v555 = vld [vmem:[%s535] sm:$0x1]
      %v556 = vld [vmem:[%s5] sm:$0xf]
      %v557 = vld [vmem:[%s5 + $0x4] sm:$0xf]
      %v558 = vld [vmem:[%s5 + $0x8] sm:$0xf]
      %v559 = vld [vmem:[%s5 + $0xc] sm:$0xf]
      %v560 = vld [vmem:[%s5 + $0x10] sm:$0xf]
      %v561 = vld [vmem:[%s5 + $0x14] sm:$0xf]
      %v562 = vld [vmem:[%s5 + $0x18] sm:$0xf]
      %v563 = vld [vmem:[%s5 + $0x1c] sm:$0xf]
      %v564 = vld [vmem:[%s5 + $0x20] sm:$0xf]
      %v565 = vld [vmem:[%s5 + $0x24] sm:$0xf]
      %v566 = vld [vmem:[%s5 + $0x28] sm:$0xf]
      %v567 = vld [vmem:[%s5 + $0x2c] sm:$0xf]
      %v568 = vld [vmem:[%s5 + $0x30] sm:$0xf]
      %v569 = vld [vmem:[%s5 + $0x34] sm:$0xf]
      %v570 = vld [vmem:[%s5 + $0x38] sm:$0xf]
      %v571 = vld [vmem:[%s5 + $0x3c] sm:$0xf]
      %v572 = vld [vmem:[%s6] sm:$0xf]
      %v573 = vld [vmem:[%s6 + $0x4] sm:$0xf]
      %v574 = vld [vmem:[%s6 + $0x8] sm:$0xf]
      %v575 = vld [vmem:[%s6 + $0xc] sm:$0xf]
      %v576 = vld [vmem:[%s7] sm:$0xf]
      %v577 = vld [vmem:[%s7 + $0x4] sm:$0xf]
      %v578 = vld [vmem:[%s7 + $0x8] sm:$0xf]
      %v579 = vld [vmem:[%s7 + $0xc] sm:$0xf]
      %v580 = vld [vmem:[%s8] sm:$0x1]
      %v581 = vld [vmem:[%s9] sm:$0x1]
      %v582 = vld [vmem:[%s10] sm:$0xff]
      %v583 = vld [vmem:[%s10 + $0x8] sm:$0xff]
      %v584 = vld [vmem:[%s10 + $0x10] sm:$0xff]
      %v585 = vld [vmem:[%s10 + $0x18] sm:$0xff]
      %v586 = vld [vmem:[%s10 + $0x20] sm:$0xff]
      %v587 = vld [vmem:[%s10 + $0x28] sm:$0xff]
      %v588 = vld [vmem:[%s10 + $0x30] sm:$0xff]
      %v589 = vld [vmem:[%s10 + $0x38] sm:$0xff]
      %v590 = vld [vmem:[%s10 + $0x40] sm:$0xff]
      %v591 = vld [vmem:[%s10 + $0x48] sm:$0xff]
      %v592 = vld [vmem:[%s10 + $0x50] sm:$0xff]
      %v593 = vld [vmem:[%s10 + $0x58] sm:$0xff]
      %v594 = vld [vmem:[#allocation4] sm:$0x1]
      %v595 = vlaneseq
      %v596 = vand.u32 %v595, 127
      %v597 = vld [vmem:[%s539] sm:$0xff]
      %598 = vset.pattern.permute.xlu0 0
      %599 = vperm.xlu0 %598, %v597
      %v600 = vpop.permute.xlu0 %599
      %vm601 = vcmp.eq.s32.totalorder %v600, %v596
      %v602 = vsel %vm601, 1, 0
      %v603 = vcvt.s32.f32 %v602
      %v604 = vpack.c.bf16 %v603, %v603
      %v605 = vld [vmem:[%s3] sm:$0xff]
      %vm606 = vcmask 261120
      %607 = vst.msk [vmem:[#allocation2] sm:$0xff] %vm606, %v605
      %v608 = vld [vmem:[%s543] sm:$0xff]
      %609 = vst.msk [vmem:[#allocation3] sm:$0xff] %vm606, %v608
      %v610 = vld [vmem:[#allocation2] sm:$0xff]
      %v611 = vld [vmem:[#allocation3] sm:$0xff]
      %v612 = vpack.c.bf16 %v610, %v610
      %v614 = vlaneseq
      %v615 = vshrl.u32 %v614, 7
      %v616 = vsub.s32 0, %v615
      %v617 = vrot.slane %v580, %v616
      %v623 = vunpack.c.l.b16 %v572
      %v624 = vunpack.c.l.b16 %v573
      %v625 = vunpack.c.l.b16 %v574
      %v626 = vunpack.c.l.b16 %v575
      %v627 = vpack.c.b16 %v624, %v623
      %v628 = vpack.c.b16 %v626, %v625
      %v632 = vsel %vm606, %v612, 0
      %634 = vmatprep.subr.bf16.mxu0 0
      %635 = vmatpush1.bf16.msra.mxu0 %v627
      %636 = vmatprep.subr.bf16.mxu0 0
      %637 = vmatpush1.bf16.msra.mxu0 %v628
      %638 = vmatprep.subr.bf16.mxu0 0
      %639 = vmatpush1.bf16.msra.mxu0 0
      %640 = vmatprep.subr.bf16.mxu0 0
      %641 = vmatpush1.bf16.msra.mxu0 0
      %642 = vmatprep.subr.bf16.mxu0 0
      %643 = vmatpush1.bf16.msra.mxu0 0
      %644 = vmatprep.subr.bf16.mxu0 0
      %645 = vmatpush1.bf16.msra.mxu0 0
      %646 = vmatprep.subr.bf16.mxu0 0
      %647 = vmatpush1.bf16.msra.mxu0 0
      %648 = vmatprep.subr.bf16.mxu0 0
      %649 = vmatpush1.bf16.msra.mxu0 0
      %650 = vmatprep.subr.bf16.mxu0 0
      %651 = vmatpush1.bf16.msra.mxu0 0
      %652 = vmatprep.subr.bf16.mxu0 0
      %653 = vmatpush1.bf16.msra.mxu0 0
      %654 = vmatprep.subr.bf16.mxu0 0
      %655 = vmatpush1.bf16.msra.mxu0 0
      %656 = vmatprep.subr.bf16.mxu0 0
      %657 = vmatpush1.bf16.msra.mxu0 0
      %658 = vmatprep.subr.bf16.mxu0 0
      %659 = vmatpush1.bf16.msra.mxu0 0
      %660 = vmatprep.subr.bf16.mxu0 0
      %661 = vmatpush1.bf16.msra.mxu0 0
      %662 = vmatprep.subr.bf16.mxu0 0
      %663 = vmatpush1.bf16.msra.mxu0 0
      %664 = vmatprep.subr.bf16.mxu0 0
      %665 = vmatpush1.bf16.msra.mxu0 0
      %666 = vmatprep.mubr.bf16.mxu0 0
      %667 = vmatmul.mubr.bf16.gmra.mrb[0].mxu0 %v632
      %v668 = vpop.f32.mrb[0].mxu0
      %v669 = vadd.f32 %v617, %v668
      %v670 = vpop.f32.mrb[0].mxu0
      %v671 = vpop.f32.mrb[0].mxu0
      %v672 = vpop.f32.mrb[0].mxu0
      %673 = vdwg.mxu0
      %v674 = vpack.c.bf16 %v611, %v611
      %v676 = vlaneseq
      %v677 = vshrl.u32 %v676, 7
      %v678 = vsub.s32 0, %v677
      %v679 = vrot.slane %v581, %v678
      %v685 = vunpack.c.l.b16 %v576
      %v686 = vunpack.c.l.b16 %v577
      %v687 = vunpack.c.l.b16 %v578
      %v688 = vunpack.c.l.b16 %v579
      %v689 = vpack.c.b16 %v686, %v685
      %v690 = vpack.c.b16 %v688, %v687
      %v694 = vsel %vm606, %v674, 0
      %696 = vmatprep.subr.bf16.mxu0 0
      %697 = vmatpush1.bf16.msra.mxu0 %v689
      %698 = vmatprep.subr.bf16.mxu0 0
      %699 = vmatpush1.bf16.msra.mxu0 %v690
      %700 = vmatprep.subr.bf16.mxu0 0
      %701 = vmatpush1.bf16.msra.mxu0 0
      %702 = vmatprep.subr.bf16.mxu0 0
      %703 = vmatpush1.bf16.msra.mxu0 0
      %704 = vmatprep.subr.bf16.mxu0 0
      %705 = vmatpush1.bf16.msra.mxu0 0
      %706 = vmatprep.subr.bf16.mxu0 0
      %707 = vmatpush1.bf16.msra.mxu0 0
      %708 = vmatprep.subr.bf16.mxu0 0
      %709 = vmatpush1.bf16.msra.mxu0 0
      %710 = vmatprep.subr.bf16.mxu0 0
      %711 = vmatpush1.bf16.msra.mxu0 0
      %712 = vmatprep.subr.bf16.mxu0 0
      %713 = vmatpush1.bf16.msra.mxu0 0
      %714 = vmatprep.subr.bf16.mxu0 0
      %715 = vmatpush1.bf16.msra.mxu0 0
      %716 = vmatprep.subr.bf16.mxu0 0
      %717 = vmatpush1.bf16.msra.mxu0 0
      %718 = vmatprep.subr.bf16.mxu0 0
      %719 = vmatpush1.bf16.msra.mxu0 0
      %720 = vmatprep.subr.bf16.mxu0 0
      %721 = vmatpush1.bf16.msra.mxu0 0
      %722 = vmatprep.subr.bf16.mxu0 0
      %723 = vmatpush1.bf16.msra.mxu0 0
      %724 = vmatprep.subr.bf16.mxu0 0
      %725 = vmatpush1.bf16.msra.mxu0 0
      %726 = vmatprep.subr.bf16.mxu0 0
      %727 = vmatpush1.bf16.msra.mxu0 0
      %728 = vmatprep.mubr.bf16.mxu0 0
      %729 = vmatmul.mubr.bf16.gmra.mrb[0].mxu0 %v694
      %v730 = vpop.f32.mrb[0].mxu0
      %v731 = vadd.f32 %v679, %v730
      %v732 = vpop.f32.mrb[0].mxu0
      %v733 = vpop.f32.mrb[0].mxu0
      %v734 = vpop.f32.mrb[0].mxu0
      %735 = vdwg.mxu0
      %v736 = vadd.f32 %v669, %v731
      %v737 = vxor.u32 %v736, 2147483648
      %v738 = vmul.f32 %v737, 1.442695
      %v739 = vpow.pop %v738
      %v740 = vadd.f32 %v739, 1.0
      %v741 = vrcp.pop %v740
      %v742 = vmul.f32 1.0, %v741
      %744 = vrot.lane.b32.xlu0 %v731, 64
      %v745 = vpop.permute.xlu0 %744
      %v747 = vmul.f32 %v742, %v745
      %749 = vrot.lane.b32.xlu0 %v747, 64
      %v750 = vpop.permute.xlu0 %749
      %v752 = vadd.f32 %v669, %v750
      %v753 = vtanh.pop %v752
      %v754 = vsub.f32 1.0, %v742
      %756 = vrot.lane.b32.xlu0 %v753, 96
      %v757 = vpop.permute.xlu0 %756
      %v759 = vmul.f32 %v754, %v757
      %761 = vrot.lane.b32.xlu0 %v611, 32
      %v762 = vpop.permute.xlu0 %761
      %v764 = vmul.f32 %v742, %v762
      %v765 = vadd.f32 %v759, %v764
      %v766 = vpack.c.bf16 %v765, %v765
      %v768 = vlaneseq
      %v769 = vshrl.u32 %v768, 7
      %v770 = vsub.s32 0, %v769
      %v771 = vrot.slane %v555, %v770
      %774 = vrot.lane.b32.xlu0 %v766, 96
      %v775 = vpop.permute.xlu0 %774
      %v777 = vsel %vm606, %v775, 0
      %v780 = vsel %vm606, %v554, 0
      %782 = vmatprep.subr.bf16.mxu0 0
      %783 = vmatpush1.bf16.xpose.msra.mxu0 %v780
      %784 = vmatprep.subr.bf16.mxu0 0
      %785 = vmatpush1.bf16.xpose.msra.mxu0 0
      %786 = vmatprep.subr.bf16.mxu0 0
      %787 = vmatpush1.bf16.xpose.msra.mxu0 0
      %788 = vmatprep.subr.bf16.mxu0 0
      %789 = vmatpush1.bf16.xpose.msra.mxu0 0
      %790 = vmatprep.subr.bf16.mxu0 0
      %791 = vmatpush1.bf16.xpose.msra.mxu0 0
      %792 = vmatprep.subr.bf16.mxu0 0
      %793 = vmatpush1.bf16.xpose.msra.mxu0 0
      %794 = vmatprep.subr.bf16.mxu0 0
      %795 = vmatpush1.bf16.xpose.msra.mxu0 0
      %796 = vmatprep.subr.bf16.mxu0 0
      %797 = vmatpush1.bf16.xpose.msra.mxu0 0
      %798 = vmatprep.subr.bf16.mxu0 0
      %799 = vmatpush1.bf16.xpose.msra.mxu0 0
      %800 = vmatprep.subr.bf16.mxu0 0
      %801 = vmatpush1.bf16.xpose.msra.mxu0 0
      %802 = vmatprep.subr.bf16.mxu0 0
      %803 = vmatpush1.bf16.xpose.msra.mxu0 0
      %804 = vmatprep.subr.bf16.mxu0 0
      %805 = vmatpush1.bf16.xpose.msra.mxu0 0
      %806 = vmatprep.subr.bf16.mxu0 0
      %807 = vmatpush1.bf16.xpose.msra.mxu0 0
      %808 = vmatprep.subr.bf16.mxu0 0
      %809 = vmatpush1.bf16.xpose.msra.mxu0 0
      %810 = vmatprep.subr.bf16.mxu0 0
      %811 = vmatpush1.bf16.xpose.msra.mxu0 0
      %812 = vmatprep.subr.bf16.mxu0 0
      %813 = vmatpush1.bf16.xpose.msra.mxu0 0
      %814 = vmatprep.mubr.bf16.mxu0 0
      %815 = vmatmul.mubr.bf16.gmra.mrb[0].mxu0 %v777
      %v816 = vpop.f32.mrb[0].mxu0
      %v817 = vadd.f32 %v771, %v816
      %v818 = vpop.f32.mrb[0].mxu0
      %v819 = vpop.f32.mrb[0].mxu0
      %v820 = vpop.f32.mrb[0].mxu0
      %821 = vdwg.mxu0
      %vm822 = vcmask 64512
      %v823 = vsel %vm822, %v817, -inf
      %824 = vmax.xlane.f32.xlu0 %v823
      %v825 = vpop.xlane.xlu0 %824
      %v826 = vsub.f32 %v817, %v825
      %v827 = vmul.f32 %v826, 1.442695
      %v828 = vpow.pop %v827
      %v829 = vsel %vm822, %v828, 0.0
      %830 = vadd.xlane.f32.xlu0 %v829
      %v831 = vpop.xlane.xlu0 %830
      %v832 = vrcp.pop %v831
      %v833 = vmul.f32 %v828, %v832
      %v834 = vpack.c.bf16 %v833, %v833
      %v851 = vunpack.c.l.b16 %v556
      %v852 = vunpack.c.l.b16 %v557
      %v853 = vunpack.c.l.b16 %v558
      %v854 = vunpack.c.l.b16 %v559
      %v855 = vunpack.c.l.b16 %v560
      %v856 = vunpack.c.l.b16 %v561
      %v857 = vunpack.c.l.b16 %v562
      %v858 = vunpack.c.l.b16 %v563
      %v859 = vunpack.c.l.b16 %v564
      %v860 = vunpack.c.l.b16 %v565
      %v861 = vunpack.c.l.b16 %v566
      %v862 = vunpack.c.l.b16 %v567
      %v863 = vunpack.c.l.b16 %v568
      %v864 = vunpack.c.l.b16 %v569
      %v865 = vunpack.c.l.b16 %v570
      %v866 = vunpack.c.l.b16 %v571
      %v867 = vpack.c.b16 %v852, %v851
      %v868 = vpack.c.b16 %v854, %v853
      %v869 = vpack.c.b16 %v856, %v855
      %v870 = vpack.c.b16 %v858, %v857
      %v871 = vpack.c.b16 %v860, %v859
      %v872 = vpack.c.b16 %v862, %v861
      %v873 = vpack.c.b16 %v864, %v863
      %v874 = vpack.c.b16 %v866, %v865
      %v876 = vsel %vm606, %v867, 0
      %v879 = vsel %vm606, %v868, 0
      %v882 = vsel %vm606, %v869, 0
      %v885 = vsel %vm606, %v870, 0
      %v888 = vsel %vm606, %v871, 0
      %v891 = vsel %vm606, %v872, 0
      %v894 = vsel %vm606, %v873, 0
      %v897 = vsel %vm606, %v874, 0
      %899 = vmatprep.subr.bf16.mxu0 0
      %900 = vmatpush1.bf16.xpose.msra.mxu0 %v876
      %901 = vmatprep.subr.bf16.mxu0 0
      %902 = vmatpush1.bf16.xpose.msra.mxu0 %v879
      %903 = vmatprep.subr.bf16.mxu0 0
      %904 = vmatpush1.bf16.xpose.msra.mxu0 %v882
      %905 = vmatprep.subr.bf16.mxu0 0
      %906 = vmatpush1.bf16.xpose.msra.mxu0 %v885
      %907 = vmatprep.subr.bf16.mxu0 0
      %908 = vmatpush1.bf16.xpose.msra.mxu0 %v888
      %909 = vmatprep.subr.bf16.mxu0 0
      %910 = vmatpush1.bf16.xpose.msra.mxu0 %v891
      %911 = vmatprep.subr.bf16.mxu0 0
      %912 = vmatpush1.bf16.xpose.msra.mxu0 %v894
      %913 = vmatprep.subr.bf16.mxu0 0
      %914 = vmatpush1.bf16.xpose.msra.mxu0 %v897
      %915 = vmatprep.subr.bf16.mxu0 0
      %916 = vmatpush1.bf16.xpose.msra.mxu0 0
      %917 = vmatprep.subr.bf16.mxu0 0
      %918 = vmatpush1.bf16.xpose.msra.mxu0 0
      %919 = vmatprep.subr.bf16.mxu0 0
      %920 = vmatpush1.bf16.xpose.msra.mxu0 0
      %921 = vmatprep.subr.bf16.mxu0 0
      %922 = vmatpush1.bf16.xpose.msra.mxu0 0
      %923 = vmatprep.subr.bf16.mxu0 0
      %924 = vmatpush1.bf16.xpose.msra.mxu0 0
      %925 = vmatprep.subr.bf16.mxu0 0
      %926 = vmatpush1.bf16.xpose.msra.mxu0 0
      %927 = vmatprep.subr.bf16.mxu0 0
      %928 = vmatpush1.bf16.xpose.msra.mxu0 0
      %929 = vmatprep.subr.bf16.mxu0 0
      %930 = vmatpush1.bf16.xpose.msra.mxu0 0
      %931 = vmatprep.mubr.bf16.mxu0 0
      %932 = vmatmul.mubr.bf16.gmra.mrb[0].mxu0 %v777
      %v933 = vpop.f32.mrb[0].mxu0
      %v934 = vadd.f32 0.0, %v933
      %v935 = vpop.f32.mrb[0].mxu0
      %v936 = vpop.f32.mrb[0].mxu0
      %v937 = vpop.f32.mrb[0].mxu0
      %938 = vdwg.mxu0
      %939 = vmax.xlane.f32.xlu0 %v934
      %v940 = vpop.xlane.xlu0 %939
      %v941 = vsub.f32 %v934, %v940
      %v942 = vmul.f32 %v941, 1.442695
      %v943 = vpow.pop %v942
      %944 = vadd.xlane.f32.xlu0 %v943
      %v945 = vpop.xlane.xlu0 %944
      %v946 = vrcp.pop %v945
      %v947 = vmul.f32 %v943, %v946
      %v949 = vsel %vm822, %v834, 0
      %vm951 = vcmask 1043456
      %v952 = vsel %vm951, %v554, 0
      %954 = vmatprep.subr.bf16.mxu0 0
      %955 = vmatpush1.bf16.msra.mxu0 %v952
      %956 = vmatprep.subr.bf16.mxu0 0
      %957 = vmatpush1.bf16.msra.mxu0 0
      %958 = vmatprep.subr.bf16.mxu0 0
      %959 = vmatpush1.bf16.msra.mxu0 0
      %960 = vmatprep.subr.bf16.mxu0 0
      %961 = vmatpush1.bf16.msra.mxu0 0
      %962 = vmatprep.subr.bf16.mxu0 0
      %963 = vmatpush1.bf16.msra.mxu0 0
      %964 = vmatprep.subr.bf16.mxu0 0
      %965 = vmatpush1.bf16.msra.mxu0 0
      %966 = vmatprep.subr.bf16.mxu0 0
      %967 = vmatpush1.bf16.msra.mxu0 0
      %968 = vmatprep.subr.bf16.mxu0 0
      %969 = vmatpush1.bf16.msra.mxu0 0
      %970 = vmatprep.subr.bf16.mxu0 0
      %971 = vmatpush1.bf16.msra.mxu0 0
      %972 = vmatprep.subr.bf16.mxu0 0
      %973 = vmatpush1.bf16.msra.mxu0 0
      %974 = vmatprep.subr.bf16.mxu0 0
      %975 = vmatpush1.bf16.msra.mxu0 0
      %976 = vmatprep.subr.bf16.mxu0 0
      %977 = vmatpush1.bf16.msra.mxu0 0
      %978 = vmatprep.subr.bf16.mxu0 0
      %979 = vmatpush1.bf16.msra.mxu0 0
      %980 = vmatprep.subr.bf16.mxu0 0
      %981 = vmatpush1.bf16.msra.mxu0 0
      %982 = vmatprep.subr.bf16.mxu0 0
      %983 = vmatpush1.bf16.msra.mxu0 0
      %984 = vmatprep.subr.bf16.mxu0 0
      %985 = vmatpush1.bf16.msra.mxu0 0
      %986 = vmatprep.mubr.bf16.mxu0 0
      %987 = vmatmul.mubr.bf16.gmra.mrb[0].mxu0 %v949
      %v988 = vpop.f32.mrb[0].mxu0
      %v989 = vadd.f32 0.0, %v988
      %v990 = vpop.f32.mrb[0].mxu0
      %v991 = vpop.f32.mrb[0].mxu0
      %v992 = vpop.f32.mrb[0].mxu0
      %993 = vdwg.mxu0
      %995 = vrot.lane.b32.xlu0 %v765, 96
      %v996 = vpop.permute.xlu0 %995
      %v997 = vsel %vm606, %v996, 0
      %999 = vmatprep.subr.mxu0 0.0
      %1000 = vmatpush1.msra.mxu0 %v586
      %1001 = vmatprep.subr.mxu0 0.0
      %1002 = vmatpush1.msra.mxu0 %v587
      %1003 = vmatprep.subr.mxu0 0.0
      %1004 = vmatpush1.msra.mxu0 %v588
      %1005 = vmatprep.subr.mxu0 0.0
      %1006 = vmatpush1.msra.mxu0 %v589
      %1007 = vmatprep.subr.mxu0 0.0
      %1008 = vmatpush1.msra.mxu0 0.0
      %1009 = vmatprep.subr.mxu0 0.0
      %1010 = vmatpush1.msra.mxu0 0.0
      %1011 = vmatprep.subr.mxu0 0.0
      %1012 = vmatpush1.msra.mxu0 0.0
      %1013 = vmatprep.subr.mxu0 0.0
      %1014 = vmatpush1.msra.mxu0 0.0
      %1015 = vmatprep.subr.mxu0 0.0
      %1016 = vmatpush1.msra.mxu0 0.0
      %1017 = vmatprep.subr.mxu0 0.0
      %1018 = vmatpush1.msra.mxu0 0.0
      %1019 = vmatprep.subr.mxu0 0.0
      %1020 = vmatpush1.msra.mxu0 0.0
      %1021 = vmatprep.subr.mxu0 0.0
      %1022 = vmatpush1.msra.mxu0 0.0
      %1023 = vmatprep.subr.mxu0 0.0
      %1024 = vmatpush1.msra.mxu0 0.0
      %1025 = vmatprep.subr.mxu0 0.0
      %1026 = vmatpush1.msra.mxu0 0.0
      %1027 = vmatprep.subr.mxu0 0.0
      %1028 = vmatpush1.msra.mxu0 0.0
      %1029 = vmatprep.subr.mxu0 0.0
      %1030 = vmatpush1.msra.mxu0 0.0
      %1031 = vmatprep.subr.mxu0 0.0
      %1032 = vmatpush1.msra.mxu0 0.0
      %1033 = vmatprep.subr.mxu0 0.0
      %1034 = vmatpush1.msra.mxu0 0.0
      %1035 = vmatprep.subr.mxu0 0.0
      %1036 = vmatpush1.msra.mxu0 0.0
      %1037 = vmatprep.subr.mxu0 0.0
      %1038 = vmatpush1.msra.mxu0 0.0
      %1039 = vmatprep.subr.mxu0 0.0
      %1040 = vmatpush1.msra.mxu0 0.0
      %1041 = vmatprep.subr.mxu0 0.0
      %1042 = vmatpush1.msra.mxu0 0.0
      %1043 = vmatprep.subr.mxu0 0.0
      %1044 = vmatpush1.msra.mxu0 0.0
      %1045 = vmatprep.subr.mxu0 0.0
      %1046 = vmatpush1.msra.mxu0 0.0
      %1047 = vmatprep.subr.mxu0 0.0
      %1048 = vmatpush1.msra.mxu0 0.0
      %1049 = vmatprep.subr.mxu0 0.0
      %1050 = vmatpush1.msra.mxu0 0.0
      %1051 = vmatprep.subr.mxu0 0.0
      %1052 = vmatpush1.msra.mxu0 0.0
      %1053 = vmatprep.subr.mxu0 0.0
      %1054 = vmatpush1.msra.mxu0 0.0
      %1055 = vmatprep.subr.mxu0 0.0
      %1056 = vmatpush1.msra.mxu0 0.0
      %1057 = vmatprep.subr.mxu0 0.0
      %1058 = vmatpush1.msra.mxu0 0.0
      %1059 = vmatprep.subr.mxu0 0.0
      %1060 = vmatpush1.msra.mxu0 0.0
      %1061 = vmatprep.subr.mxu0 0.0
      %1062 = vmatpush1.msra.mxu0 0.0
      %1063 = vmatprep.mubr.f32.mxu0 0.0
      %1064 = vmatmul.mubr.f32.gmra.mrb[0].mxu0 %v997
      %v1065 = vpop.f32.mrb[0].mxu0
      %v1066 = vadd.f32 0.0, %v1065
      %v1067 = vpop.f32.mrb[0].mxu0
      %1068 = vdwg.mxu0
      %v1070 = vsel %vm606, %v610, 0
      %1072 = vmatprep.subr.mxu0 0.0
      %1073 = vmatpush1.msra.mxu0 %v582
      %1074 = vmatprep.subr.mxu0 0.0
      %1075 = vmatpush1.msra.mxu0 %v583
      %1076 = vmatprep.subr.mxu0 0.0
      %1077 = vmatpush1.msra.mxu0 %v584
      %1078 = vmatprep.subr.mxu0 0.0
      %1079 = vmatpush1.msra.mxu0 %v585
      %1080 = vmatprep.subr.mxu0 0.0
      %1081 = vmatpush1.msra.mxu0 0.0
      %1082 = vmatprep.subr.mxu0 0.0
      %1083 = vmatpush1.msra.mxu0 0.0
      %1084 = vmatprep.subr.mxu0 0.0
      %1085 = vmatpush1.msra.mxu0 0.0
      %1086 = vmatprep.subr.mxu0 0.0
      %1087 = vmatpush1.msra.mxu0 0.0
      %1088 = vmatprep.subr.mxu0 0.0
      %1089 = vmatpush1.msra.mxu0 0.0
      %1090 = vmatprep.subr.mxu0 0.0
      %1091 = vmatpush1.msra.mxu0 0.0
      %1092 = vmatprep.subr.mxu0 0.0
      %1093 = vmatpush1.msra.mxu0 0.0
      %1094 = vmatprep.subr.mxu0 0.0
      %1095 = vmatpush1.msra.mxu0 0.0
      %1096 = vmatprep.subr.mxu0 0.0
      %1097 = vmatpush1.msra.mxu0 0.0
      %1098 = vmatprep.subr.mxu0 0.0
      %1099 = vmatpush1.msra.mxu0 0.0
      %1100 = vmatprep.subr.mxu0 0.0
      %1101 = vmatpush1.msra.mxu0 0.0
      %1102 = vmatprep.subr.mxu0 0.0
      %1103 = vmatpush1.msra.mxu0 0.0
      %1104 = vmatprep.subr.mxu0 0.0
      %1105 = vmatpush1.msra.mxu0 0.0
      %1106 = vmatprep.subr.mxu0 0.0
      %1107 = vmatpush1.msra.mxu0 0.0
      %1108 = vmatprep.subr.mxu0 0.0
      %1109 = vmatpush1.msra.mxu0 0.0
      %1110 = vmatprep.subr.mxu0 0.0
      %1111 = vmatpush1.msra.mxu0 0.0
      %1112 = vmatprep.subr.mxu0 0.0
      %1113 = vmatpush1.msra.mxu0 0.0
      %1114 = vmatprep.subr.mxu0 0.0
      %1115 = vmatpush1.msra.mxu0 0.0
      %1116 = vmatprep.subr.mxu0 0.0
      %1117 = vmatpush1.msra.mxu0 0.0
      %1118 = vmatprep.subr.mxu0 0.0
      %1119 = vmatpush1.msra.mxu0 0.0
      %1120 = vmatprep.subr.mxu0 0.0
      %1121 = vmatpush1.msra.mxu0 0.0
      %1122 = vmatprep.subr.mxu0 0.0
      %1123 = vmatpush1.msra.mxu0 0.0
      %1124 = vmatprep.subr.mxu0 0.0
      %1125 = vmatpush1.msra.mxu0 0.0
      %1126 = vmatprep.subr.mxu0 0.0
      %1127 = vmatpush1.msra.mxu0 0.0
      %1128 = vmatprep.subr.mxu0 0.0
      %1129 = vmatpush1.msra.mxu0 0.0
      %1130 = vmatprep.subr.mxu0 0.0
      %1131 = vmatpush1.msra.mxu0 0.0
      %1132 = vmatprep.subr.mxu0 0.0
      %1133 = vmatpush1.msra.mxu0 0.0
      %1134 = vmatprep.subr.mxu0 0.0
      %1135 = vmatpush1.msra.mxu0 0.0
      %1136 = vmatprep.mubr.f32.mxu0 0.0
      %1137 = vmatmul.mubr.f32.gmra.mrb[0].mxu0 %v1070
      %v1138 = vpop.f32.mrb[0].mxu0
      %v1139 = vadd.f32 %v1066, %v1138
      %v1140 = vpop.f32.mrb[0].mxu0
      %1141 = vdwg.mxu0
      %v1143 = vsel %vm606, %v989, 0
      %1145 = vmatprep.subr.mxu0 0.0
      %1146 = vmatpush1.msra.mxu0 %v590
      %1147 = vmatprep.subr.mxu0 0.0
      %1148 = vmatpush1.msra.mxu0 %v591
      %1149 = vmatprep.subr.mxu0 0.0
      %1150 = vmatpush1.msra.mxu0 %v592
      %1151 = vmatprep.subr.mxu0 0.0
      %1152 = vmatpush1.msra.mxu0 %v593
      %1153 = vmatprep.subr.mxu0 0.0
      %1154 = vmatpush1.msra.mxu0 0.0
      %1155 = vmatprep.subr.mxu0 0.0
      %1156 = vmatpush1.msra.mxu0 0.0
      %1157 = vmatprep.subr.mxu0 0.0
      %1158 = vmatpush1.msra.mxu0 0.0
      %1159 = vmatprep.subr.mxu0 0.0
      %1160 = vmatpush1.msra.mxu0 0.0
      %1161 = vmatprep.subr.mxu0 0.0
      %1162 = vmatpush1.msra.mxu0 0.0
      %1163 = vmatprep.subr.mxu0 0.0
      %1164 = vmatpush1.msra.mxu0 0.0
      %1165 = vmatprep.subr.mxu0 0.0
      %1166 = vmatpush1.msra.mxu0 0.0
      %1167 = vmatprep.subr.mxu0 0.0
      %1168 = vmatpush1.msra.mxu0 0.0
      %1169 = vmatprep.subr.mxu0 0.0
      %1170 = vmatpush1.msra.mxu0 0.0
      %1171 = vmatprep.subr.mxu0 0.0
      %1172 = vmatpush1.msra.mxu0 0.0
      %1173 = vmatprep.subr.mxu0 0.0
      %1174 = vmatpush1.msra.mxu0 0.0
      %1175 = vmatprep.subr.mxu0 0.0
      %1176 = vmatpush1.msra.mxu0 0.0
      %1177 = vmatprep.subr.mxu0 0.0
      %1178 = vmatpush1.msra.mxu0 0.0
      %1179 = vmatprep.subr.mxu0 0.0
      %1180 = vmatpush1.msra.mxu0 0.0
      %1181 = vmatprep.subr.mxu0 0.0
      %1182 = vmatpush1.msra.mxu0 0.0
      %1183 = vmatprep.subr.mxu0 0.0
      %1184 = vmatpush1.msra.mxu0 0.0
      %1185 = vmatprep.subr.mxu0 0.0
      %1186 = vmatpush1.msra.mxu0 0.0
      %1187 = vmatprep.subr.mxu0 0.0
      %1188 = vmatpush1.msra.mxu0 0.0
      %1189 = vmatprep.subr.mxu0 0.0
      %1190 = vmatpush1.msra.mxu0 0.0
      %1191 = vmatprep.subr.mxu0 0.0
      %1192 = vmatpush1.msra.mxu0 0.0
      %1193 = vmatprep.subr.mxu0 0.0
      %1194 = vmatpush1.msra.mxu0 0.0
      %1195 = vmatprep.subr.mxu0 0.0
      %1196 = vmatpush1.msra.mxu0 0.0
      %1197 = vmatprep.subr.mxu0 0.0
      %1198 = vmatpush1.msra.mxu0 0.0
      %1199 = vmatprep.subr.mxu0 0.0
      %1200 = vmatpush1.msra.mxu0 0.0
      %1201 = vmatprep.subr.mxu0 0.0
      %1202 = vmatpush1.msra.mxu0 0.0
      %1203 = vmatprep.subr.mxu0 0.0
      %1204 = vmatpush1.msra.mxu0 0.0
      %1205 = vmatprep.subr.mxu0 0.0
      %1206 = vmatpush1.msra.mxu0 0.0
      %1207 = vmatprep.subr.mxu0 0.0
      %1208 = vmatpush1.msra.mxu0 0.0
      %1209 = vmatprep.mubr.f32.mxu0 0.0
      %1210 = vmatmul.mubr.f32.gmra.mrb[0].mxu0 %v1143
      %v1211 = vpop.f32.mrb[0].mxu0
      %v1212 = vadd.f32 0.0, %v1211
      %v1213 = vpop.f32.mrb[0].mxu0
      %1214 = vdwg.mxu0
      %v1215 = vadd.f32 %v1139, %v1212
      %v1217 = vlaneseq
      %v1218 = vshrl.u32 %v1217, 7
      %v1219 = vsub.s32 0, %v1218
      %v1220 = vrot.slane %v594, %v1219
      %v1222 = vadd.f32 %v1215, %v1220
      %v1223 = vxor.u32 %v1222, 2147483648
      %v1224 = vmul.f32 %v1223, 1.442695
      %v1225 = vpow.pop %v1224
      %v1226 = vadd.f32 %v1225, 1.0
      %v1227 = vrcp.pop %v1226
      %v1228 = vmul.f32 1.0, %v1227
      %v1230 = vsel %vm951, %v604, 0
      %1232 = vmatprep.subr.bf16.mxu0 0
      %1233 = vmatpush1.bf16.msra.mxu0 %v1230
      %1234 = vmatprep.subr.bf16.mxu0 0
      %1235 = vmatpush1.bf16.msra.mxu0 0
      %1236 = vmatprep.subr.bf16.mxu0 0
      %1237 = vmatpush1.bf16.msra.mxu0 0
      %1238 = vmatprep.subr.bf16.mxu0 0
      %1239 = vmatpush1.bf16.msra.mxu0 0
      %1240 = vmatprep.subr.bf16.mxu0 0
      %1241 = vmatpush1.bf16.msra.mxu0 0
      %1242 = vmatprep.subr.bf16.mxu0 0
      %1243 = vmatpush1.bf16.msra.mxu0 0
      %1244 = vmatprep.subr.bf16.mxu0 0
      %1245 = vmatpush1.bf16.msra.mxu0 0
      %1246 = vmatprep.subr.bf16.mxu0 0
      %1247 = vmatpush1.bf16.msra.mxu0 0
      %1248 = vmatprep.subr.bf16.mxu0 0
      %1249 = vmatpush1.bf16.msra.mxu0 0
      %1250 = vmatprep.subr.bf16.mxu0 0
      %1251 = vmatpush1.bf16.msra.mxu0 0
      %1252 = vmatprep.subr.bf16.mxu0 0
      %1253 = vmatpush1.bf16.msra.mxu0 0
      %1254 = vmatprep.subr.bf16.mxu0 0
      %1255 = vmatpush1.bf16.msra.mxu0 0
      %1256 = vmatprep.subr.bf16.mxu0 0
      %1257 = vmatpush1.bf16.msra.mxu0 0
      %1258 = vmatprep.subr.bf16.mxu0 0
      %1259 = vmatpush1.bf16.msra.mxu0 0
      %1260 = vmatprep.subr.bf16.mxu0 0
      %1261 = vmatpush1.bf16.msra.mxu0 0
      %1262 = vmatprep.subr.bf16.mxu0 0
      %1263 = vmatpush1.bf16.msra.mxu0 0
      %1264 = vmatprep.mubr.bf16.mxu0 0
      %1265 = vmatmul.mubr.bf16.gmra.mrb[0].mxu0 %v949
      %v1266 = vpop.f32.mrb[0].mxu0
      %v1267 = vadd.f32 0.0, %v1266
      %v1268 = vpop.f32.mrb[0].mxu0
      %v1269 = vpop.f32.mrb[0].mxu0
      %v1270 = vpop.f32.mrb[0].mxu0
      %1271 = vdwg.mxu0
      %1273 = vset.pattern.permute.xlu0 0
      %1274 = vperm.xlu0 %1273, %v1228
      %v1275 = vpop.permute.xlu0 %1274
      %v1277 = vmul.f32 %v1275, %v947
      %v1278 = vsub.f32 1.0, %v1228
      %1280 = vset.pattern.permute.xlu0 0
      %1281 = vperm.xlu0 %1280, %v1278
      %v1282 = vpop.permute.xlu0 %1281
      %v1284 = vmul.f32 %v1282, %v1267
      %v1285 = vadd.f32 %v1277, %v1284
      %v1287 = vcombine.high %v1285, %v1285
      %v1289 = vunpack.c.l.s4 1966171168
      %v1290 = vunpack.c.0.s8 %v1289
      %v1291 = vlaneseq
      %v1292 = vshrl.u32 %v1291, 7
      %v1293 = vsub.s32 %v1290, %v1292
      %v1294 = vrot.slane %v1285, %v1293
      %v1296 = vunpack.c.l.s4 1966171168
      %v1297 = vunpack.c.0.s8 %v1296
      %v1298 = vlaneseq
      %v1299 = vshrl.u32 %v1298, 7
      %v1300 = vsub.s32 %v1297, %v1299
      %v1301 = vrot.slane %v1287, %v1300
      %v1302 = vcombine.high %v1294, %v1294
      %v1303 = vcombine.high %v1301, %v1301
      %v1305 = vunpack.c.l.s4 1966171168
      %v1306 = vunpack.c.0.s8 %v1305
      %v1307 = vlaneseq
      %v1308 = vshrl.u32 %v1307, 7
      %v1309 = vsub.s32 %v1306, %v1308
      %v1310 = vrot.slane %v1294, %v1309
      %v1312 = vunpack.c.l.s4 1966171168
      %v1313 = vunpack.c.0.s8 %v1312
      %v1314 = vlaneseq
      %v1315 = vshrl.u32 %v1314, 7
      %v1316 = vsub.s32 %v1313, %v1315
      %v1317 = vrot.slane %v1301, %v1316
      %v1319 = vunpack.c.l.s4 1966171168
      %v1320 = vunpack.c.0.s8 %v1319
      %v1321 = vlaneseq
      %v1322 = vshrl.u32 %v1321, 7
      %v1323 = vsub.s32 %v1320, %v1322
      %v1324 = vrot.slane %v1302, %v1323
      %v1326 = vunpack.c.l.s4 1966171168
      %v1327 = vunpack.c.0.s8 %v1326
      %v1328 = vlaneseq
      %v1329 = vshrl.u32 %v1328, 7
      %v1330 = vsub.s32 %v1327, %v1329
      %v1331 = vrot.slane %v1303, %v1330
      %v1332 = vcombine.high %v1310, %v1310
      %v1333 = vcombine.high %v1317, %v1317
      %v1334 = vcombine.high %v1324, %v1324
      %v1335 = vcombine.high %v1331, %v1331
      %1344 = vst [vmem:[%s548] sm:$0x1] %v1310
      %1345 = vst [vmem:[%s548 + $0x4] sm:$0x1] %v1324
      %1346 = vst [vmem:[%s548 + $0x8] sm:$0x1] %v1332
      %1347 = vst [vmem:[%s548 + $0xc] sm:$0x1] %v1334
      %1348 = vst [vmem:[%s548 + $0x10] sm:$0x1] %v1317
      %1349 = vst [vmem:[%s548 + $0x14] sm:$0x1] %v1331
      %1350 = vst [vmem:[%s548 + $0x18] sm:$0x1] %v1333
      %1351 = vst [vmem:[%s548 + $0x1c] sm:$0x1] %v1335
      %1352 = vmax.xlane.f32.xlu0 %v1285
      %v1353 = vpop.xlane.xlu0 %1352
      %vm1354 = vcmp.eq.f32.partialorder %v1285, %v1353
      %v1355 = vsel %vm1354, %v596, 128
      %v1356 = vand.u32 %v1355, 65535
      %v1357 = vshra.s32 %v1355, 16
      %v1358 = vcvt.s32.f32 %v1356
      %v1359 = vcvt.s32.f32 %v1357
      %1360 = vmin.xlane.f32.xlu0 %v1359
      %v1361 = vpop.xlane.xlu0 %1360
      %vm1362 = vcmp.eq.f32.partialorder %v1359, %v1361
      %v1363 = vsel %vm1362, %v1358, inf
      %1364 = vmin.xlane.f32.xlu0 %v1363
      %v1365 = vpop.xlane.xlu0 %1364
      %v1366 = vcvt.f32.s32 %v1365
      %v1367 = vcvt.f32.s32 %v1361
      %v1368 = vshll.u32 %v1367, 16
      %v1369 = vadd.s32 %v1368, %v1366
      %vm1370 = vcmp.eq.s32.totalorder %v596, %v1369
      %v1371 = vsel %vm1370, 1, 0
      %v1372 = vcvt.s32.f32 %v1371
      %v1373 = vpack.c.bf16 %v1372, %v1372
      %1382 = vmatprep.subr.bf16.mxu0 0
      %1383 = vmatpush1.bf16.msra.mxu0 %v867
      %1384 = vmatprep.subr.bf16.mxu0 0
      %1385 = vmatpush1.bf16.msra.mxu0 %v868
      %1386 = vmatprep.subr.bf16.mxu0 0
      %1387 = vmatpush1.bf16.msra.mxu0 %v869
      %1388 = vmatprep.subr.bf16.mxu0 0
      %1389 = vmatpush1.bf16.msra.mxu0 %v870
      %1390 = vmatprep.subr.bf16.mxu0 0
      %1391 = vmatpush1.bf16.msra.mxu0 %v871
      %1392 = vmatprep.subr.bf16.mxu0 0
      %1393 = vmatpush1.bf16.msra.mxu0 %v872
      %1394 = vmatprep.subr.bf16.mxu0 0
      %1395 = vmatpush1.bf16.msra.mxu0 %v873
      %1396 = vmatprep.subr.bf16.mxu0 0
      %1397 = vmatpush1.bf16.msra.mxu0 %v874
      %1398 = vmatprep.subr.bf16.mxu0 0
      %1399 = vmatpush1.bf16.msra.mxu0 0
      %1400 = vmatprep.subr.bf16.mxu0 0
      %1401 = vmatpush1.bf16.msra.mxu0 0
      %1402 = vmatprep.subr.bf16.mxu0 0
      %1403 = vmatpush1.bf16.msra.mxu0 0
      %1404 = vmatprep.subr.bf16.mxu0 0
      %1405 = vmatpush1.bf16.msra.mxu0 0
      %1406 = vmatprep.subr.bf16.mxu0 0
      %1407 = vmatpush1.bf16.msra.mxu0 0
      %1408 = vmatprep.subr.bf16.mxu0 0
      %1409 = vmatpush1.bf16.msra.mxu0 0
      %1410 = vmatprep.subr.bf16.mxu0 0
      %1411 = vmatpush1.bf16.msra.mxu0 0
      %1412 = vmatprep.subr.bf16.mxu0 0
      %1413 = vmatpush1.bf16.msra.mxu0 0
      %1414 = vmatprep.mubr.bf16.mxu0 0
      %1415 = vmatmul.mubr.bf16.gmra.mrb[0].mxu0 %v1373
      %v1416 = vpop.f32.mrb[0].mxu0
      %v1417 = vadd.f32 0.0, %v1416
      %v1418 = vpop.f32.mrb[0].mxu0
      %v1419 = vpop.f32.mrb[0].mxu0
      %v1420 = vpop.f32.mrb[0].mxu0
      %1421 = vdwg.mxu0
      %1422 = vst.msk [vmem:[#allocation2] sm:$0xff] %vm606, %v1417
      %1424 = vst.msk [vmem:[#allocation3] sm:$0xff] %vm606, %v996
      %v1425 = vpack.c.bf16 %v989, %v989
      %v1426 = vld [vmem:[%s12] sm:$0xf]
      %v1427 = vld [vmem:[%s12 + $0x4] sm:$0xf]
      %v1428 = vld [vmem:[%s12 + $0x8] sm:$0xf]
      %v1429 = vld [vmem:[%s12 + $0xc] sm:$0xf]
      %v1430 = vld [vmem:[%s13] sm:$0x1]
      %v1432 = vlaneseq
      %v1433 = vshrl.u32 %v1432, 7
      %v1434 = vsub.s32 0, %v1433
      %v1435 = vrot.slane %v1430, %v1434
      %v1441 = vunpack.c.l.b16 %v1426
      %v1442 = vunpack.c.l.b16 %v1427
      %v1443 = vunpack.c.l.b16 %v1428
      %v1444 = vunpack.c.l.b16 %v1429
      %v1445 = vpack.c.b16 %v1442, %v1441
      %v1446 = vpack.c.b16 %v1444, %v1443
      %v1450 = vsel %vm606, %v1425, 0
      %1452 = vmatprep.subr.bf16.mxu0 0
      %1453 = vmatpush1.bf16.msra.mxu0 %v1445
      %1454 = vmatprep.subr.bf16.mxu0 0
      %1455 = vmatpush1.bf16.msra.mxu0 %v1446
      %1456 = vmatprep.subr.bf16.mxu0 0
      %1457 = vmatpush1.bf16.msra.mxu0 0
      %1458 = vmatprep.subr.bf16.mxu0 0
      %1459 = vmatpush1.bf16.msra.mxu0 0
      %1460 = vmatprep.subr.bf16.mxu0 0
      %1461 = vmatpush1.bf16.msra.mxu0 0
      %1462 = vmatprep.subr.bf16.mxu0 0
      %1463 = vmatpush1.bf16.msra.mxu0 0
      %1464 = vmatprep.subr.bf16.mxu0 0
      %1465 = vmatpush1.bf16.msra.mxu0 0
      %1466 = vmatprep.subr.bf16.mxu0 0
      %1467 = vmatpush1.bf16.msra.mxu0 0
      %1468 = vmatprep.subr.bf16.mxu0 0
      %1469 = vmatpush1.bf16.msra.mxu0 0
      %1470 = vmatprep.subr.bf16.mxu0 0
      %1471 = vmatpush1.bf16.msra.mxu0 0
      %1472 = vmatprep.subr.bf16.mxu0 0
      %1473 = vmatpush1.bf16.msra.mxu0 0
      %1474 = vmatprep.subr.bf16.mxu0 0
      %1475 = vmatpush1.bf16.msra.mxu0 0
      %1476 = vmatprep.subr.bf16.mxu0 0
      %1477 = vmatpush1.bf16.msra.mxu0 0
      %1478 = vmatprep.subr.bf16.mxu0 0
      %1479 = vmatpush1.bf16.msra.mxu0 0
      %1480 = vmatprep.subr.bf16.mxu0 0
      %1481 = vmatpush1.bf16.msra.mxu0 0
      %1482 = vmatprep.subr.bf16.mxu0 0
      %1483 = vmatpush1.bf16.msra.mxu0 0
      %1484 = vmatprep.mubr.bf16.mxu0 0
      %1485 = vmatmul.mubr.bf16.gmra.mrb[0].mxu0 %v1450
      %v1486 = vpop.f32.mrb[0].mxu0
      %v1487 = vadd.f32 %v1435, %v1486
      %v1488 = vpop.f32.mrb[0].mxu0
      %v1489 = vpop.f32.mrb[0].mxu0
      %v1490 = vpop.f32.mrb[0].mxu0
      %1491 = vdwg.mxu0
      %vm1492 = vcmask 39936
      %1493 = vst.msk [vmem:[%s552] sm:$0xff] %vm1492, %v1487
      %v1494 = vld [vmem:[#allocation2] sm:$0xff]
      %v1495 = vld [vmem:[#allocation3] sm:$0xff]
      %v1496 = vpack.c.bf16 %v1494, %v1494
      %v1498 = vsel %vm606, %v1496, 0
      %1500 = vmatprep.subr.bf16.mxu0 0
      %1501 = vmatpush1.bf16.msra.mxu0 %v627
      %1502 = vmatprep.subr.bf16.mxu0 0
      %1503 = vmatpush1.bf16.msra.mxu0 %v628
      %1504 = vmatprep.subr.bf16.mxu0 0
      %1505 = vmatpush1.bf16.msra.mxu0 0
      %1506 = vmatprep.subr.bf16.mxu0 0
      %1507 = vmatpush1.bf16.msra.mxu0 0
      %1508 = vmatprep.subr.bf16.mxu0 0
      %1509 = vmatpush1.bf16.msra.mxu0 0
      %1510 = vmatprep.subr.bf16.mxu0 0
      %1511 = vmatpush1.bf16.msra.mxu0 0
      %1512 = vmatprep.subr.bf16.mxu0 0
      %1513 = vmatpush1.bf16.msra.mxu0 0
      %1514 = vmatprep.subr.bf16.mxu0 0
      %1515 = vmatpush1.bf16.msra.mxu0 0
      %1516 = vmatprep.subr.bf16.mxu0 0
      %1517 = vmatpush1.bf16.msra.mxu0 0
      %1518 = vmatprep.subr.bf16.mxu0 0
      %1519 = vmatpush1.bf16.msra.mxu0 0
      %1520 = vmatprep.subr.bf16.mxu0 0
      %1521 = vmatpush1.bf16.msra.mxu0 0
      %1522 = vmatprep.subr.bf16.mxu0 0
      %1523 = vmatpush1.bf16.msra.mxu0 0
      %1524 = vmatprep.subr.bf16.mxu0 0
      %1525 = vmatpush1.bf16.msra.mxu0 0
      %1526 = vmatprep.subr.bf16.mxu0 0
      %1527 = vmatpush1.bf16.msra.mxu0 0
      %1528 = vmatprep.subr.bf16.mxu0 0
      %1529 = vmatpush1.bf16.msra.mxu0 0
      %1530 = vmatprep.subr.bf16.mxu0 0
      %1531 = vmatpush1.bf16.msra.mxu0 0
      %1532 = vmatprep.mubr.bf16.mxu0 0
      %1533 = vmatmul.mubr.bf16.gmra.mrb[0].mxu0 %v1498
      %v1534 = vpop.f32.mrb[0].mxu0
      %v1535 = vadd.f32 %v617, %v1534
      %v1536 = vpop.f32.mrb[0].mxu0
      %v1537 = vpop.f32.mrb[0].mxu0
      %v1538 = vpop.f32.mrb[0].mxu0
      %1539 = vdwg.mxu0
      %v1540 = vpack.c.bf16 %v1495, %v1495
      %v1542 = vsel %vm606, %v1540, 0
      %1544 = vmatprep.subr.bf16.mxu0 0
      %1545 = vmatpush1.bf16.msra.mxu0 %v689
      %1546 = vmatprep.subr.bf16.mxu0 0
      %1547 = vmatpush1.bf16.msra.mxu0 %v690
      %1548 = vmatprep.subr.bf16.mxu0 0
      %1549 = vmatpush1.bf16.msra.mxu0 0
      %1550 = vmatprep.subr.bf16.mxu0 0
      %1551 = vmatpush1.bf16.msra.mxu0 0
      %1552 = vmatprep.subr.bf16.mxu0 0
      %1553 = vmatpush1.bf16.msra.mxu0 0
      %1554 = vmatprep.subr.bf16.mxu0 0
      %1555 = vmatpush1.bf16.msra.mxu0 0
      %1556 = vmatprep.subr.bf16.mxu0 0
      %1557 = vmatpush1.bf16.msra.mxu0 0
      %1558 = vmatprep.subr.bf16.mxu0 0
      %1559 = vmatpush1.bf16.msra.mxu0 0
      %1560 = vmatprep.subr.bf16.mxu0 0
      %1561 = vmatpush1.bf16.msra.mxu0 0
      %1562 = vmatprep.subr.bf16.mxu0 0
      %1563 = vmatpush1.bf16.msra.mxu0 0
      %1564 = vmatprep.subr.bf16.mxu0 0
      %1565 = vmatpush1.bf16.msra.mxu0 0
      %1566 = vmatprep.subr.bf16.mxu0 0
      %1567 = vmatpush1.bf16.msra.mxu0 0
      %1568 = vmatprep.subr.bf16.mxu0 0
      %1569 = vmatpush1.bf16.msra.mxu0 0
      %1570 = vmatprep.subr.bf16.mxu0 0
      %1571 = vmatpush1.bf16.msra.mxu0 0
      %1572 = vmatprep.subr.bf16.mxu0 0
      %1573 = vmatpush1.bf16.msra.mxu0 0
      %1574 = vmatprep.subr.bf16.mxu0 0
      %1575 = vmatpush1.bf16.msra.mxu0 0
      %1576 = vmatprep.mubr.bf16.mxu0 0
      %1577 = vmatmul.mubr.bf16.gmra.mrb[0].mxu0 %v1542
      %v1578 = vpop.f32.mrb[0].mxu0
      %v1579 = vadd.f32 %v679, %v1578
      %v1580 = vpop.f32.mrb[0].mxu0
      %v1581 = vpop.f32.mrb[0].mxu0
      %v1582 = vpop.f32.mrb[0].mxu0
      %1583 = vdwg.mxu0
      %v1584 = vadd.f32 %v1535, %v1579
      %v1585 = vxor.u32 %v1584, 2147483648
      %v1586 = vmul.f32 %v1585, 1.442695
      %v1587 = vpow.pop %v1586
      %v1588 = vadd.f32 %v1587, 1.0
      %v1589 = vrcp.pop %v1588
      %v1590 = vmul.f32 1.0, %v1589
      %1592 = vrot.lane.b32.xlu0 %v1579, 64
      %v1593 = vpop.permute.xlu0 %1592
      %v1595 = vmul.f32 %v1590, %v1593
      %1597 = vrot.lane.b32.xlu0 %v1595, 64
      %v1598 = vpop.permute.xlu0 %1597
      %v1600 = vadd.f32 %v1535, %v1598
      %v1601 = vtanh.pop %v1600
      %v1602 = vsub.f32 1.0, %v1590
      %1604 = vrot.lane.b32.xlu0 %v1601, 96
      %v1605 = vpop.permute.xlu0 %1604
      %v1607 = vmul.f32 %v1602, %v1605
      %1609 = vrot.lane.b32.xlu0 %v1495, 32
      %v1610 = vpop.permute.xlu0 %1609
      %v1612 = vmul.f32 %v1590, %v1610
      %v1613 = vadd.f32 %v1607, %v1612
      %v1614 = vpack.c.bf16 %v1613, %v1613
      %1616 = vrot.lane.b32.xlu0 %v1614, 96
      %v1617 = vpop.permute.xlu0 %1616
      %v1619 = vsel %vm606, %v1617, 0
      %1621 = vmatprep.subr.bf16.mxu0 0
      %1622 = vmatpush1.bf16.xpose.msra.mxu0 %v780
      %1623 = vmatprep.subr.bf16.mxu0 0
      %1624 = vmatpush1.bf16.xpose.msra.mxu0 0
      %1625 = vmatprep.subr.bf16.mxu0 0
      %1626 = vmatpush1.bf16.xpose.msra.mxu0 0
      %1627 = vmatprep.subr.bf16.mxu0 0
      %1628 = vmatpush1.bf16.xpose.msra.mxu0 0
      %1629 = vmatprep.subr.bf16.mxu0 0
      %1630 = vmatpush1.bf16.xpose.msra.mxu0 0
      %1631 = vmatprep.subr.bf16.mxu0 0
      %1632 = vmatpush1.bf16.xpose.msra.mxu0 0
      %1633 = vmatprep.subr.bf16.mxu0 0
      %1634 = vmatpush1.bf16.xpose.msra.mxu0 0
      %1635 = vmatprep.subr.bf16.mxu0 0
      %1636 = vmatpush1.bf16.xpose.msra.mxu0 0
      %1637 = vmatprep.subr.bf16.mxu0 0
      %1638 = vmatpush1.bf16.xpose.msra.mxu0 0
      %1639 = vmatprep.subr.bf16.mxu0 0
      %1640 = vmatpush1.bf16.xpose.msra.mxu0 0
      %1641 = vmatprep.subr.bf16.mxu0 0
      %1642 = vmatpush1.bf16.xpose.msra.mxu0 0
      %1643 = vmatprep.subr.bf16.mxu0 0
      %1644 = vmatpush1.bf16.xpose.msra.mxu0 0
      %1645 = vmatprep.subr.bf16.mxu0 0
      %1646 = vmatpush1.bf16.xpose.msra.mxu0 0
      %1647 = vmatprep.subr.bf16.mxu0 0
      %1648 = vmatpush1.bf16.xpose.msra.mxu0 0
      %1649 = vmatprep.subr.bf16.mxu0 0
      %1650 = vmatpush1.bf16.xpose.msra.mxu0 0
      %1651 = vmatprep.subr.bf16.mxu0 0
      %1652 = vmatpush1.bf16.xpose.msra.mxu0 0
      %1653 = vmatprep.mubr.bf16.mxu0 0
      %1654 = vmatmul.mubr.bf16.gmra.mrb[0].mxu0 %v1619
      %v1655 = vpop.f32.mrb[0].mxu0
      %v1656 = vadd.f32 %v771, %v1655
      %v1657 = vpop.f32.mrb[0].mxu0
      %v1658 = vpop.f32.mrb[0].mxu0
      %v1659 = vpop.f32.mrb[0].mxu0
      %1660 = vdwg.mxu0
      %v1661 = vsel %vm822, %v1656, -inf
      %1662 = vmax.xlane.f32.xlu0 %v1661
      %v1663 = vpop.xlane.xlu0 %1662
      %v1664 = vsub.f32 %v1656, %v1663
      %v1665 = vmul.f32 %v1664, 1.442695
      %v1666 = vpow.pop %v1665
      %v1667 = vsel %vm822, %v1666, 0.0
      %1668 = vadd.xlane.f32.xlu0 %v1667
      %v1669 = vpop.xlane.xlu0 %1668
      %v1670 = vrcp.pop %v1669
      %v1671 = vmul.f32 %v1666, %v1670
      %v1672 = vpack.c.bf16 %v1671, %v1671
      %1673 = vmatprep.subr.bf16.mxu0 0
      %1674 = vmatpush1.bf16.xpose.msra.mxu0 %v876
      %1675 = vmatprep.subr.bf16.mxu0 0
      %1676 = vmatpush1.bf16.xpose.msra.mxu0 %v879
      %1677 = vmatprep.subr.bf16.mxu0 0
      %1678 = vmatpush1.bf16.xpose.msra.mxu0 %v882
      %1679 = vmatprep.subr.bf16.mxu0 0
      %1680 = vmatpush1.bf16.xpose.msra.mxu0 %v885
      %1681 = vmatprep.subr.bf16.mxu0 0
      %1682 = vmatpush1.bf16.xpose.msra.mxu0 %v888
      %1683 = vmatprep.subr.bf16.mxu0 0
      %1684 = vmatpush1.bf16.xpose.msra.mxu0 %v891
      %1685 = vmatprep.subr.bf16.mxu0 0
      %1686 = vmatpush1.bf16.xpose.msra.mxu0 %v894
      %1687 = vmatprep.subr.bf16.mxu0 0
      %1688 = vmatpush1.bf16.xpose.msra.mxu0 %v897
      %1689 = vmatprep.subr.bf16.mxu0 0
      %1690 = vmatpush1.bf16.xpose.msra.mxu0 0
      %1691 = vmatprep.subr.bf16.mxu0 0
      %1692 = vmatpush1.bf16.xpose.msra.mxu0 0
      %1693 = vmatprep.subr.bf16.mxu0 0
      %1694 = vmatpush1.bf16.xpose.msra.mxu0 0
      %1695 = vmatprep.subr.bf16.mxu0 0
      %1696 = vmatpush1.bf16.xpose.msra.mxu0 0
      %1697 = vmatprep.subr.bf16.mxu0 0
      %1698 = vmatpush1.bf16.xpose.msra.mxu0 0
      %1699 = vmatprep.subr.bf16.mxu0 0
      %1700 = vmatpush1.bf16.xpose.msra.mxu0 0
      %1701 = vmatprep.subr.bf16.mxu0 0
      %1702 = vmatpush1.bf16.xpose.msra.mxu0 0
      %1703 = vmatprep.subr.bf16.mxu0 0
      %1704 = vmatpush1.bf16.xpose.msra.mxu0 0
      %1705 = vmatprep.mubr.bf16.mxu0 0
      %1706 = vmatmul.mubr.bf16.gmra.mrb[0].mxu0 %v1619
      %v1707 = vpop.f32.mrb[0].mxu0
      %v1708 = vadd.f32 0.0, %v1707
      %v1709 = vpop.f32.mrb[0].mxu0
      %v1710 = vpop.f32.mrb[0].mxu0
      %v1711 = vpop.f32.mrb[0].mxu0
      %1712 = vdwg.mxu0
      %1713 = vmax.xlane.f32.xlu0 %v1708
      %v1714 = vpop.xlane.xlu0 %1713
      %v1715 = vsub.f32 %v1708, %v1714
      %v1716 = vmul.f32 %v1715, 1.442695
      %v1717 = vpow.pop %v1716
      %1718 = vadd.xlane.f32.xlu0 %v1717
      %v1719 = vpop.xlane.xlu0 %1718
      %v1720 = vrcp.pop %v1719
      %v1721 = vmul.f32 %v1717, %v1720
      %v1723 = vsel %vm822, %v1672, 0
      %1725 = vmatprep.subr.bf16.mxu0 0
      %1726 = vmatpush1.bf16.msra.mxu0 %v952
      %1727 = vmatprep.subr.bf16.mxu0 0
      %1728 = vmatpush1.bf16.msra.mxu0 0
      %1729 = vmatprep.subr.bf16.mxu0 0
      %1730 = vmatpush1.bf16.msra.mxu0 0
      %1731 = vmatprep.subr.bf16.mxu0 0
      %1732 = vmatpush1.bf16.msra.mxu0 0
      %1733 = vmatprep.subr.bf16.mxu0 0
      %1734 = vmatpush1.bf16.msra.mxu0 0
      %1735 = vmatprep.subr.bf16.mxu0 0
      %1736 = vmatpush1.bf16.msra.mxu0 0
      %1737 = vmatprep.subr.bf16.mxu0 0
      %1738 = vmatpush1.bf16.msra.mxu0 0
      %1739 = vmatprep.subr.bf16.mxu0 0
      %1740 = vmatpush1.bf16.msra.mxu0 0
      %1741 = vmatprep.subr.bf16.mxu0 0
      %1742 = vmatpush1.bf16.msra.mxu0 0
      %1743 = vmatprep.subr.bf16.mxu0 0
      %1744 = vmatpush1.bf16.msra.mxu0 0
      %1745 = vmatprep.subr.bf16.mxu0 0
      %1746 = vmatpush1.bf16.msra.mxu0 0
      %1747 = vmatprep.subr.bf16.mxu0 0
      %1748 = vmatpush1.bf16.msra.mxu0 0
      %1749 = vmatprep.subr.bf16.mxu0 0
      %1750 = vmatpush1.bf16.msra.mxu0 0
      %1751 = vmatprep.subr.bf16.mxu0 0
      %1752 = vmatpush1.bf16.msra.mxu0 0
      %1753 = vmatprep.subr.bf16.mxu0 0
      %1754 = vmatpush1.bf16.msra.mxu0 0
      %1755 = vmatprep.subr.bf16.mxu0 0
      %1756 = vmatpush1.bf16.msra.mxu0 0
      %1757 = vmatprep.mubr.bf16.mxu0 0
      %1758 = vmatmul.mubr.bf16.gmra.mrb[0].mxu0 %v1723
      %v1759 = vpop.f32.mrb[0].mxu0
      %v1760 = vadd.f32 0.0, %v1759
      %v1761 = vpop.f32.mrb[0].mxu0
      %v1762 = vpop.f32.mrb[0].mxu0
      %v1763 = vpop.f32.mrb[0].mxu0
      %1764 = vdwg.mxu0
      %1766 = vrot.lane.b32.xlu0 %v1613, 96
      %v1767 = vpop.permute.xlu0 %1766
      %v1768 = vsel %vm606, %v1767, 0
      %1770 = vmatprep.subr.mxu0 0.0
      %1771 = vmatpush1.msra.mxu0 %v586
      %1772 = vmatprep.subr.mxu0 0.0
      %1773 = vmatpush1.msra.mxu0 %v587
      %1774 = vmatprep.subr.mxu0 0.0
      %1775 = vmatpush1.msra.mxu0 %v588
      %1776 = vmatprep.subr.mxu0 0.0
      %1777 = vmatpush1.msra.mxu0 %v589
      %1778 = vmatprep.subr.mxu0 0.0
      %1779 = vmatpush1.msra.mxu0 0.0
      %1780 = vmatprep.subr.mxu0 0.0
      %1781 = vmatpush1.msra.mxu0 0.0
      %1782 = vmatprep.subr.mxu0 0.0
      %1783 = vmatpush1.msra.mxu0 0.0
      %1784 = vmatprep.subr.mxu0 0.0
      %1785 = vmatpush1.msra.mxu0 0.0
      %1786 = vmatprep.subr.mxu0 0.0
      %1787 = vmatpush1.msra.mxu0 0.0
      %1788 = vmatprep.subr.mxu0 0.0
      %1789 = vmatpush1.msra.mxu0 0.0
      %1790 = vmatprep.subr.mxu0 0.0
      %1791 = vmatpush1.msra.mxu0 0.0
      %1792 = vmatprep.subr.mxu0 0.0
      %1793 = vmatpush1.msra.mxu0 0.0
      %1794 = vmatprep.subr.mxu0 0.0
      %1795 = vmatpush1.msra.mxu0 0.0
      %1796 = vmatprep.subr.mxu0 0.0
      %1797 = vmatpush1.msra.mxu0 0.0
      %1798 = vmatprep.subr.mxu0 0.0
      %1799 = vmatpush1.msra.mxu0 0.0
      %1800 = vmatprep.subr.mxu0 0.0
      %1801 = vmatpush1.msra.mxu0 0.0
      %1802 = vmatprep.subr.mxu0 0.0
      %1803 = vmatpush1.msra.mxu0 0.0
      %1804 = vmatprep.subr.mxu0 0.0
      %1805 = vmatpush1.msra.mxu0 0.0
      %1806 = vmatprep.subr.mxu0 0.0
      %1807 = vmatpush1.msra.mxu0 0.0
      %1808 = vmatprep.subr.mxu0 0.0
      %1809 = vmatpush1.msra.mxu0 0.0
      %1810 = vmatprep.subr.mxu0 0.0
      %1811 = vmatpush1.msra.mxu0 0.0
      %1812 = vmatprep.subr.mxu0 0.0
      %1813 = vmatpush1.msra.mxu0 0.0
      %1814 = vmatprep.subr.mxu0 0.0
      %1815 = vmatpush1.msra.mxu0 0.0
      %1816 = vmatprep.subr.mxu0 0.0
      %1817 = vmatpush1.msra.mxu0 0.0
      %1818 = vmatprep.subr.mxu0 0.0
      %1819 = vmatpush1.msra.mxu0 0.0
      %1820 = vmatprep.subr.mxu0 0.0
      %1821 = vmatpush1.msra.mxu0 0.0
      %1822 = vmatprep.subr.mxu0 0.0
      %1823 = vmatpush1.msra.mxu0 0.0
      %1824 = vmatprep.subr.mxu0 0.0
      %1825 = vmatpush1.msra.mxu0 0.0
      %1826 = vmatprep.subr.mxu0 0.0
      %1827 = vmatpush1.msra.mxu0 0.0
      %1828 = vmatprep.subr.mxu0 0.0
      %1829 = vmatpush1.msra.mxu0 0.0
      %1830 = vmatprep.subr.mxu0 0.0
      %1831 = vmatpush1.msra.mxu0 0.0
      %1832 = vmatprep.subr.mxu0 0.0
      %1833 = vmatpush1.msra.mxu0 0.0
      %1834 = vmatprep.mubr.f32.mxu0 0.0
      %1835 = vmatmul.mubr.f32.gmra.mrb[0].mxu0 %v1768
      %v1836 = vpop.f32.mrb[0].mxu0
      %v1837 = vadd.f32 0.0, %v1836
      %v1838 = vpop.f32.mrb[0].mxu0
      %1839 = vdwg.mxu0
      %v1841 = vsel %vm606, %v1494, 0
      %1843 = vmatprep.subr.mxu0 0.0
      %1844 = vmatpush1.msra.mxu0 %v582
      %1845 = vmatprep.subr.mxu0 0.0
      %1846 = vmatpush1.msra.mxu0 %v583
      %1847 = vmatprep.subr.mxu0 0.0
      %1848 = vmatpush1.msra.mxu0 %v584
      %1849 = vmatprep.subr.mxu0 0.0
      %1850 = vmatpush1.msra.mxu0 %v585
      %1851 = vmatprep.subr.mxu0 0.0
      %1852 = vmatpush1.msra.mxu0 0.0
      %1853 = vmatprep.subr.mxu0 0.0
      %1854 = vmatpush1.msra.mxu0 0.0
      %1855 = vmatprep.subr.mxu0 0.0
      %1856 = vmatpush1.msra.mxu0 0.0
      %1857 = vmatprep.subr.mxu0 0.0
      %1858 = vmatpush1.msra.mxu0 0.0
      %1859 = vmatprep.subr.mxu0 0.0
      %1860 = vmatpush1.msra.mxu0 0.0
      %1861 = vmatprep.subr.mxu0 0.0
      %1862 = vmatpush1.msra.mxu0 0.0
      %1863 = vmatprep.subr.mxu0 0.0
      %1864 = vmatpush1.msra.mxu0 0.0
      %1865 = vmatprep.subr.mxu0 0.0
      %1866 = vmatpush1.msra.mxu0 0.0
      %1867 = vmatprep.subr.mxu0 0.0
      %1868 = vmatpush1.msra.mxu0 0.0
      %1869 = vmatprep.subr.mxu0 0.0
      %1870 = vmatpush1.msra.mxu0 0.0
      %1871 = vmatprep.subr.mxu0 0.0
      %1872 = vmatpush1.msra.mxu0 0.0
      %1873 = vmatprep.subr.mxu0 0.0
      %1874 = vmatpush1.msra.mxu0 0.0
      %1875 = vmatprep.subr.mxu0 0.0
      %1876 = vmatpush1.msra.mxu0 0.0
      %1877 = vmatprep.subr.mxu0 0.0
      %1878 = vmatpush1.msra.mxu0 0.0
      %1879 = vmatprep.subr.mxu0 0.0
      %1880 = vmatpush1.msra.mxu0 0.0
      %1881 = vmatprep.subr.mxu0 0.0
      %1882 = vmatpush1.msra.mxu0 0.0
      %1883 = vmatprep.subr.mxu0 0.0
      %1884 = vmatpush1.msra.mxu0 0.0
      %1885 = vmatprep.subr.mxu0 0.0
      %1886 = vmatpush1.msra.mxu0 0.0
      %1887 = vmatprep.subr.mxu0 0.0
      %1888 = vmatpush1.msra.mxu0 0.0
      %1889 = vmatprep.subr.mxu0 0.0
      %1890 = vmatpush1.msra.mxu0 0.0
      %1891 = vmatprep.subr.mxu0 0.0
      %1892 = vmatpush1.msra.mxu0 0.0
      %1893 = vmatprep.subr.mxu0 0.0
      %1894 = vmatpush1.msra.mxu0 0.0
      %1895 = vmatprep.subr.mxu0 0.0
      %1896 = vmatpush1.msra.mxu0 0.0
      %1897 = vmatprep.subr.mxu0 0.0
      %1898 = vmatpush1.msra.mxu0 0.0
      %1899 = vmatprep.subr.mxu0 0.0
      %1900 = vmatpush1.msra.mxu0 0.0
      %1901 = vmatprep.subr.mxu0 0.0
      %1902 = vmatpush1.msra.mxu0 0.0
      %1903 = vmatprep.subr.mxu0 0.0
      %1904 = vmatpush1.msra.mxu0 0.0
      %1905 = vmatprep.subr.mxu0 0.0
      %1906 = vmatpush1.msra.mxu0 0.0
      %1907 = vmatprep.mubr.f32.mxu0 0.0
      %1908 = vmatmul.mubr.f32.gmra.mrb[0].mxu0 %v1841
      %v1909 = vpop.f32.mrb[0].mxu0
      %v1910 = vadd.f32 %v1837, %v1909
      %v1911 = vpop.f32.mrb[0].mxu0
      %1912 = vdwg.mxu0
      %v1914 = vsel %vm606, %v1760, 0
      %1916 = vmatprep.subr.mxu0 0.0
      %1917 = vmatpush1.msra.mxu0 %v590
      %1918 = vmatprep.subr.mxu0 0.0
      %1919 = vmatpush1.msra.mxu0 %v591
      %1920 = vmatprep.subr.mxu0 0.0
      %1921 = vmatpush1.msra.mxu0 %v592
      %1922 = vmatprep.subr.mxu0 0.0
      %1923 = vmatpush1.msra.mxu0 %v593
      %1924 = vmatprep.subr.mxu0 0.0
      %1925 = vmatpush1.msra.mxu0 0.0
      %1926 = vmatprep.subr.mxu0 0.0
      %1927 = vmatpush1.msra.mxu0 0.0
      %1928 = vmatprep.subr.mxu0 0.0
      %1929 = vmatpush1.msra.mxu0 0.0
      %1930 = vmatprep.subr.mxu0 0.0
      %1931 = vmatpush1.msra.mxu0 0.0
      %1932 = vmatprep.subr.mxu0 0.0
      %1933 = vmatpush1.msra.mxu0 0.0
      %1934 = vmatprep.subr.mxu0 0.0
      %1935 = vmatpush1.msra.mxu0 0.0
      %1936 = vmatprep.subr.mxu0 0.0
      %1937 = vmatpush1.msra.mxu0 0.0
      %1938 = vmatprep.subr.mxu0 0.0
      %1939 = vmatpush1.msra.mxu0 0.0
      %1940 = vmatprep.subr.mxu0 0.0
      %1941 = vmatpush1.msra.mxu0 0.0
      %1942 = vmatprep.subr.mxu0 0.0
      %1943 = vmatpush1.msra.mxu0 0.0
      %1944 = vmatprep.subr.mxu0 0.0
      %1945 = vmatpush1.msra.mxu0 0.0
      %1946 = vmatprep.subr.mxu0 0.0
      %1947 = vmatpush1.msra.mxu0 0.0
      %1948 = vmatprep.subr.mxu0 0.0
      %1949 = vmatpush1.msra.mxu0 0.0
      %1950 = vmatprep.subr.mxu0 0.0
      %1951 = vmatpush1.msra.mxu0 0.0
      %1952 = vmatprep.subr.mxu0 0.0
      %1953 = vmatpush1.msra.mxu0 0.0
      %1954 = vmatprep.subr.mxu0 0.0
      %1955 = vmatpush1.msra.mxu0 0.0
      %1956 = vmatprep.subr.mxu0 0.0
      %1957 = vmatpush1.msra.mxu0 0.0
      %1958 = vmatprep.subr.mxu0 0.0
      %1959 = vmatpush1.msra.mxu0 0.0
      %1960 = vmatprep.subr.mxu0 0.0
      %1961 = vmatpush1.msra.mxu0 0.0
      %1962 = vmatprep.subr.mxu0 0.0
      %1963 = vmatpush1.msra.mxu0 0.0
      %1964 = vmatprep.subr.mxu0 0.0
      %1965 = vmatpush1.msra.mxu0 0.0
      %1966 = vmatprep.subr.mxu0 0.0
      %1967 = vmatpush1.msra.mxu0 0.0
      %1968 = vmatprep.subr.mxu0 0.0
      %1969 = vmatpush1.msra.mxu0 0.0
      %1970 = vmatprep.subr.mxu0 0.0
      %1971 = vmatpush1.msra.mxu0 0.0
      %1972 = vmatprep.subr.mxu0 0.0
      %1973 = vmatpush1.msra.mxu0 0.0
      %1974 = vmatprep.subr.mxu0 0.0
      %1975 = vmatpush1.msra.mxu0 0.0
      %1976 = vmatprep.subr.mxu0 0.0
      %1977 = vmatpush1.msra.mxu0 0.0
      %1978 = vmatprep.subr.mxu0 0.0
      %1979 = vmatpush1.msra.mxu0 0.0
      %1980 = vmatprep.mubr.f32.mxu0 0.0
      %1981 = vmatmul.mubr.f32.gmra.mrb[0].mxu0 %v1914
      %v1982 = vpop.f32.mrb[0].mxu0
      %v1983 = vadd.f32 0.0, %v1982
      %v1984 = vpop.f32.mrb[0].mxu0
      %1985 = vdwg.mxu0
      %v1986 = vadd.f32 %v1910, %v1983
      %v1987 = vadd.f32 %v1986, %v1220
      %v1988 = vxor.u32 %v1987, 2147483648
      %v1989 = vmul.f32 %v1988, 1.442695
      %v1990 = vpow.pop %v1989
      %v1991 = vadd.f32 %v1990, 1.0
      %v1992 = vrcp.pop %v1991
      %v1993 = vmul.f32 1.0, %v1992
      %1994 = vmatprep.subr.bf16.mxu0 0
      %1995 = vmatpush1.bf16.msra.mxu0 %v1230
      %1996 = vmatprep.subr.bf16.mxu0 0
      %1997 = vmatpush1.bf16.msra.mxu0 0
      %1998 = vmatprep.subr.bf16.mxu0 0
      %1999 = vmatpush1.bf16.msra.mxu0 0
      %2000 = vmatprep.subr.bf16.mxu0 0
      %2001 = vmatpush1.bf16.msra.mxu0 0
      %2002 = vmatprep.subr.bf16.mxu0 0
      %2003 = vmatpush1.bf16.msra.mxu0 0
      %2004 = vmatprep.subr.bf16.mxu0 0
      %2005 = vmatpush1.bf16.msra.mxu0 0
      %2006 = vmatprep.subr.bf16.mxu0 0
      %2007 = vmatpush1.bf16.msra.mxu0 0
      %2008 = vmatprep.subr.bf16.mxu0 0
      %2009 = vmatpush1.bf16.msra.mxu0 0
      %2010 = vmatprep.subr.bf16.mxu0 0
      %2011 = vmatpush1.bf16.msra.mxu0 0
      %2012 = vmatprep.subr.bf16.mxu0 0
      %2013 = vmatpush1.bf16.msra.mxu0 0
      %2014 = vmatprep.subr.bf16.mxu0 0
      %2015 = vmatpush1.bf16.msra.mxu0 0
      %2016 = vmatprep.subr.bf16.mxu0 0
      %2017 = vmatpush1.bf16.msra.mxu0 0
      %2018 = vmatprep.subr.bf16.mxu0 0
      %2019 = vmatpush1.bf16.msra.mxu0 0
      %2020 = vmatprep.subr.bf16.mxu0 0
      %2021 = vmatpush1.bf16.msra.mxu0 0
      %2022 = vmatprep.subr.bf16.mxu0 0
      %2023 = vmatpush1.bf16.msra.mxu0 0
      %2024 = vmatprep.subr.bf16.mxu0 0
      %2025 = vmatpush1.bf16.msra.mxu0 0
      %2026 = vmatprep.mubr.bf16.mxu0 0
      %2027 = vmatmul.mubr.bf16.gmra.mrb[0].mxu0 %v1723
      %v2028 = vpop.f32.mrb[0].mxu0
      %v2029 = vadd.f32 0.0, %v2028
      %v2030 = vpop.f32.mrb[0].mxu0
      %v2031 = vpop.f32.mrb[0].mxu0
      %v2032 = vpop.f32.mrb[0].mxu0
      %2033 = vdwg.mxu0
      %2035 = vset.pattern.permute.xlu0 0
      %2036 = vperm.xlu0 %2035, %v1993
      %v2037 = vpop.permute.xlu0 %2036
      %v2039 = vmul.f32 %v2037, %v1721
      %v2040 = vsub.f32 1.0, %v1993
      %2042 = vset.pattern.permute.xlu0 0
      %2043 = vperm.xlu0 %2042, %v2040
      %v2044 = vpop.permute.xlu0 %2043
      %v2046 = vmul.f32 %v2044, %v2029
      %v2047 = vadd.f32 %v2039, %v2046
      %v2049 = vcombine.high %v2047, %v2047
      %v2051 = vunpack.c.l.s4 1966171168
      %v2052 = vunpack.c.0.s8 %v2051
      %v2053 = vlaneseq
      %v2054 = vshrl.u32 %v2053, 7
      %v2055 = vsub.s32 %v2052, %v2054
      %v2056 = vrot.slane %v2047, %v2055
      %v2058 = vunpack.c.l.s4 1966171168
      %v2059 = vunpack.c.0.s8 %v2058
      %v2060 = vlaneseq
      %v2061 = vshrl.u32 %v2060, 7
      %v2062 = vsub.s32 %v2059, %v2061
      %v2063 = vrot.slane %v2049, %v2062
      %v2064 = vcombine.high %v2056, %v2056
      %v2065 = vcombine.high %v2063, %v2063
      %v2067 = vunpack.c.l.s4 1966171168
      %v2068 = vunpack.c.0.s8 %v2067
      %v2069 = vlaneseq
      %v2070 = vshrl.u32 %v2069, 7
      %v2071 = vsub.s32 %v2068, %v2070
      %v2072 = vrot.slane %v2056, %v2071
      %v2074 = vunpack.c.l.s4 1966171168
      %v2075 = vunpack.c.0.s8 %v2074
      %v2076 = vlaneseq
      %v2077 = vshrl.u32 %v2076, 7
      %v2078 = vsub.s32 %v2075, %v2077
      %v2079 = vrot.slane %v2063, %v2078
      %v2081 = vunpack.c.l.s4 1966171168
      %v2082 = vunpack.c.0.s8 %v2081
      %v2083 = vlaneseq
      %v2084 = vshrl.u32 %v2083, 7
      %v2085 = vsub.s32 %v2082, %v2084
      %v2086 = vrot.slane %v2064, %v2085
      %v2088 = vunpack.c.l.s4 1966171168
      %v2089 = vunpack.c.0.s8 %v2088
      %v2090 = vlaneseq
      %v2091 = vshrl.u32 %v2090, 7
      %v2092 = vsub.s32 %v2089, %v2091
      %v2093 = vrot.slane %v2065, %v2092
      %v2094 = vcombine.high %v2072, %v2072
      %v2095 = vcombine.high %v2079, %v2079
      %v2096 = vcombine.high %v2086, %v2086
      %v2097 = vcombine.high %v2093, %v2093
      %2106 = vst [vmem:[%s548 + $0x1] sm:$0x1] %v2072
      %2107 = vst [vmem:[%s548 + $0x5] sm:$0x1] %v2086
      %2108 = vst [vmem:[%s548 + $0x9] sm:$0x1] %v2094
      %2109 = vst [vmem:[%s548 + $0xd] sm:$0x1] %v2096
      %2110 = vst [vmem:[%s548 + $0x11] sm:$0x1] %v2079
      %2111 = vst [vmem:[%s548 + $0x15] sm:$0x1] %v2093
      %2112 = vst [vmem:[%s548 + $0x19] sm:$0x1] %v2095
      %2113 = vst [vmem:[%s548 + $0x1d] sm:$0x1] %v2097
      %2114 = vmax.xlane.f32.xlu0 %v2047
      %v2115 = vpop.xlane.xlu0 %2114
      %vm2116 = vcmp.eq.f32.partialorder %v2047, %v2115
      %v2117 = vsel %vm2116, %v596, 128
      %v2118 = vand.u32 %v2117, 65535
      %v2119 = vshra.s32 %v2117, 16
      %v2120 = vcvt.s32.f32 %v2118
      %v2121 = vcvt.s32.f32 %v2119
      %2122 = vmin.xlane.f32.xlu0 %v2121
      %v2123 = vpop.xlane.xlu0 %2122
      %vm2124 = vcmp.eq.f32.partialorder %v2121, %v2123
      %v2125 = vsel %vm2124, %v2120, inf
      %2126 = vmin.xlane.f32.xlu0 %v2125
      %v2127 = vpop.xlane.xlu0 %2126
      %v2128 = vcvt.f32.s32 %v2127
      %v2129 = vcvt.f32.s32 %v2123
      %v2130 = vshll.u32 %v2129, 16
      %v2131 = vadd.s32 %v2130, %v2128
      %vm2132 = vcmp.eq.s32.totalorder %v596, %v2131
      %v2133 = vsel %vm2132, 1, 0
      %v2134 = vcvt.s32.f32 %v2133
      %v2135 = vpack.c.bf16 %v2134, %v2134
      %2136 = vmatprep.subr.bf16.mxu0 0
      %2137 = vmatpush1.bf16.msra.mxu0 %v867
      %2138 = vmatprep.subr.bf16.mxu0 0
      %2139 = vmatpush1.bf16.msra.mxu0 %v868
      %2140 = vmatprep.subr.bf16.mxu0 0
      %2141 = vmatpush1.bf16.msra.mxu0 %v869
      %2142 = vmatprep.subr.bf16.mxu0 0
      %2143 = vmatpush1.bf16.msra.mxu0 %v870
      %2144 = vmatprep.subr.bf16.mxu0 0
      %2145 = vmatpush1.bf16.msra.mxu0 %v871
      %2146 = vmatprep.subr.bf16.mxu0 0
      %2147 = vmatpush1.bf16.msra.mxu0 %v872
      %2148 = vmatprep.subr.bf16.mxu0 0
      %2149 = vmatpush1.bf16.msra.mxu0 %v873
      %2150 = vmatprep.subr.bf16.mxu0 0
      %2151 = vmatpush1.bf16.msra.mxu0 %v874
      %2152 = vmatprep.subr.bf16.mxu0 0
      %2153 = vmatpush1.bf16.msra.mxu0 0
      %2154 = vmatprep.subr.bf16.mxu0 0
      %2155 = vmatpush1.bf16.msra.mxu0 0
      %2156 = vmatprep.subr.bf16.mxu0 0
      %2157 = vmatpush1.bf16.msra.mxu0 0
      %2158 = vmatprep.subr.bf16.mxu0 0
      %2159 = vmatpush1.bf16.msra.mxu0 0
      %2160 = vmatprep.subr.bf16.mxu0 0
      %2161 = vmatpush1.bf16.msra.mxu0 0
      %2162 = vmatprep.subr.bf16.mxu0 0
      %2163 = vmatpush1.bf16.msra.mxu0 0
      %2164 = vmatprep.subr.bf16.mxu0 0
      %2165 = vmatpush1.bf16.msra.mxu0 0
      %2166 = vmatprep.subr.bf16.mxu0 0
      %2167 = vmatpush1.bf16.msra.mxu0 0
      %2168 = vmatprep.mubr.bf16.mxu0 0
      %2169 = vmatmul.mubr.bf16.gmra.mrb[0].mxu0 %v2135
      %v2170 = vpop.f32.mrb[0].mxu0
      %v2171 = vadd.f32 0.0, %v2170
      %v2172 = vpop.f32.mrb[0].mxu0
      %v2173 = vpop.f32.mrb[0].mxu0
      %v2174 = vpop.f32.mrb[0].mxu0
      %2175 = vdwg.mxu0
      %2176 = vst.msk [vmem:[#allocation2] sm:$0xff] %vm606, %v2171
      %2178 = vst.msk [vmem:[#allocation3] sm:$0xff] %vm606, %v1767
      %v2179 = vld [vmem:[#allocation2] sm:$0xff]
      %v2180 = vld [vmem:[#allocation3] sm:$0xff]
      %v2181 = vpack.c.bf16 %v2179, %v2179
      %v2183 = vsel %vm606, %v2181, 0
      %2185 = vmatprep.subr.bf16.mxu0 0
      %2186 = vmatpush1.bf16.msra.mxu0 %v627
      %2187 = vmatprep.subr.bf16.mxu0 0
      %2188 = vmatpush1.bf16.msra.mxu0 %v628
      %2189 = vmatprep.subr.bf16.mxu0 0
      %2190 = vmatpush1.bf16.msra.mxu0 0
      %2191 = vmatprep.subr.bf16.mxu0 0
      %2192 = vmatpush1.bf16.msra.mxu0 0
      %2193 = vmatprep.subr.bf16.mxu0 0
      %2194 = vmatpush1.bf16.msra.mxu0 0
      %2195 = vmatprep.subr.bf16.mxu0 0
      %2196 = vmatpush1.bf16.msra.mxu0 0
      %2197 = vmatprep.subr.bf16.mxu0 0
      %2198 = vmatpush1.bf16.msra.mxu0 0
      %2199 = vmatprep.subr.bf16.mxu0 0
      %2200 = vmatpush1.bf16.msra.mxu0 0
      %2201 = vmatprep.subr.bf16.mxu0 0
      %2202 = vmatpush1.bf16.msra.mxu0 0
      %2203 = vmatprep.subr.bf16.mxu0 0
      %2204 = vmatpush1.bf16.msra.mxu0 0
      %2205 = vmatprep.subr.bf16.mxu0 0
      %2206 = vmatpush1.bf16.msra.mxu0 0
      %2207 = vmatprep.subr.bf16.mxu0 0
      %2208 = vmatpush1.bf16.msra.mxu0 0
      %2209 = vmatprep.subr.bf16.mxu0 0
      %2210 = vmatpush1.bf16.msra.mxu0 0
      %2211 = vmatprep.subr.bf16.mxu0 0
      %2212 = vmatpush1.bf16.msra.mxu0 0
      %2213 = vmatprep.subr.bf16.mxu0 0
      %2214 = vmatpush1.bf16.msra.mxu0 0
      %2215 = vmatprep.subr.bf16.mxu0 0
      %2216 = vmatpush1.bf16.msra.mxu0 0
      %2217 = vmatprep.mubr.bf16.mxu0 0
      %2218 = vmatmul.mubr.bf16.gmra.mrb[0].mxu0 %v2183
      %v2219 = vpop.f32.mrb[0].mxu0
      %v2220 = vadd.f32 %v617, %v2219
      %v2221 = vpop.f32.mrb[0].mxu0
      %v2222 = vpop.f32.mrb[0].mxu0
      %v2223 = vpop.f32.mrb[0].mxu0
      %2224 = vdwg.mxu0
      %v2225 = vpack.c.bf16 %v2180, %v2180
      %v2227 = vsel %vm606, %v2225, 0
      %2229 = vmatprep.subr.bf16.mxu0 0
      %2230 = vmatpush1.bf16.msra.mxu0 %v689
      %2231 = vmatprep.subr.bf16.mxu0 0
      %2232 = vmatpush1.bf16.msra.mxu0 %v690
      %2233 = vmatprep.subr.bf16.mxu0 0
      %2234 = vmatpush1.bf16.msra.mxu0 0
      %2235 = vmatprep.subr.bf16.mxu0 0
      %2236 = vmatpush1.bf16.msra.mxu0 0
      %2237 = vmatprep.subr.bf16.mxu0 0
      %2238 = vmatpush1.bf16.msra.mxu0 0
      %2239 = vmatprep.subr.bf16.mxu0 0
      %2240 = vmatpush1.bf16.msra.mxu0 0
      %2241 = vmatprep.subr.bf16.mxu0 0
      %2242 = vmatpush1.bf16.msra.mxu0 0
      %2243 = vmatprep.subr.bf16.mxu0 0
      %2244 = vmatpush1.bf16.msra.mxu0 0
      %2245 = vmatprep.subr.bf16.mxu0 0
      %2246 = vmatpush1.bf16.msra.mxu0 0
      %2247 = vmatprep.subr.bf16.mxu0 0
      %2248 = vmatpush1.bf16.msra.mxu0 0
      %2249 = vmatprep.subr.bf16.mxu0 0
      %2250 = vmatpush1.bf16.msra.mxu0 0
      %2251 = vmatprep.subr.bf16.mxu0 0
      %2252 = vmatpush1.bf16.msra.mxu0 0
      %2253 = vmatprep.subr.bf16.mxu0 0
      %2254 = vmatpush1.bf16.msra.mxu0 0
      %2255 = vmatprep.subr.bf16.mxu0 0
      %2256 = vmatpush1.bf16.msra.mxu0 0
      %2257 = vmatprep.subr.bf16.mxu0 0
      %2258 = vmatpush1.bf16.msra.mxu0 0
      %2259 = vmatprep.subr.bf16.mxu0 0
      %2260 = vmatpush1.bf16.msra.mxu0 0
      %2261 = vmatprep.mubr.bf16.mxu0 0
      %2262 = vmatmul.mubr.bf16.gmra.mrb[0].mxu0 %v2227
      %v2263 = vpop.f32.mrb[0].mxu0
      %v2264 = vadd.f32 %v679, %v2263
      %v2265 = vpop.f32.mrb[0].mxu0
      %v2266 = vpop.f32.mrb[0].mxu0
      %v2267 = vpop.f32.mrb[0].mxu0
      %2268 = vdwg.mxu0
      %v2269 = vadd.f32 %v2220, %v2264
      %v2270 = vxor.u32 %v2269, 2147483648
      %v2271 = vmul.f32 %v2270, 1.442695
      %v2272 = vpow.pop %v2271
      %v2273 = vadd.f32 %v2272, 1.0
      %v2274 = vrcp.pop %v2273
      %v2275 = vmul.f32 1.0, %v2274
      %2277 = vrot.lane.b32.xlu0 %v2264, 64
      %v2278 = vpop.permute.xlu0 %2277
      %v2280 = vmul.f32 %v2275, %v2278
      %2282 = vrot.lane.b32.xlu0 %v2280, 64
      %v2283 = vpop.permute.xlu0 %2282
      %v2285 = vadd.f32 %v2220, %v2283
      %v2286 = vtanh.pop %v2285
      %v2287 = vsub.f32 1.0, %v2275
      %2289 = vrot.lane.b32.xlu0 %v2286, 96
      %v2290 = vpop.permute.xlu0 %2289
      %v2292 = vmul.f32 %v2287, %v2290
      %2294 = vrot.lane.b32.xlu0 %v2180, 32
      %v2295 = vpop.permute.xlu0 %2294
      %v2297 = vmul.f32 %v2275, %v2295
      %v2298 = vadd.f32 %v2292, %v2297
      %v2299 = vpack.c.bf16 %v2298, %v2298
      %2301 = vrot.lane.b32.xlu0 %v2299, 96
      %v2302 = vpop.permute.xlu0 %2301
      %v2304 = vsel %vm606, %v2302, 0
      %2306 = vmatprep.subr.bf16.mxu0 0
      %2307 = vmatpush1.bf16.xpose.msra.mxu0 %v780
      %2308 = vmatprep.subr.bf16.mxu0 0
      %2309 = vmatpush1.bf16.xpose.msra.mxu0 0
      %2310 = vmatprep.subr.bf16.mxu0 0
      %2311 = vmatpush1.bf16.xpose.msra.mxu0 0
      %2312 = vmatprep.subr.bf16.mxu0 0
      %2313 = vmatpush1.bf16.xpose.msra.mxu0 0
      %2314 = vmatprep.subr.bf16.mxu0 0
      %2315 = vmatpush1.bf16.xpose.msra.mxu0 0
      %2316 = vmatprep.subr.bf16.mxu0 0
      %2317 = vmatpush1.bf16.xpose.msra.mxu0 0
      %2318 = vmatprep.subr.bf16.mxu0 0
      %2319 = vmatpush1.bf16.xpose.msra.mxu0 0
      %2320 = vmatprep.subr.bf16.mxu0 0
      %2321 = vmatpush1.bf16.xpose.msra.mxu0 0
      %2322 = vmatprep.subr.bf16.mxu0 0
      %2323 = vmatpush1.bf16.xpose.msra.mxu0 0
      %2324 = vmatprep.subr.bf16.mxu0 0
      %2325 = vmatpush1.bf16.xpose.msra.mxu0 0
      %2326 = vmatprep.subr.bf16.mxu0 0
      %2327 = vmatpush1.bf16.xpose.msra.mxu0 0
      %2328 = vmatprep.subr.bf16.mxu0 0
      %2329 = vmatpush1.bf16.xpose.msra.mxu0 0
      %2330 = vmatprep.subr.bf16.mxu0 0
      %2331 = vmatpush1.bf16.xpose.msra.mxu0 0
      %2332 = vmatprep.subr.bf16.mxu0 0
      %2333 = vmatpush1.bf16.xpose.msra.mxu0 0
      %2334 = vmatprep.subr.bf16.mxu0 0
      %2335 = vmatpush1.bf16.xpose.msra.mxu0 0
      %2336 = vmatprep.subr.bf16.mxu0 0
      %2337 = vmatpush1.bf16.xpose.msra.mxu0 0
      %2338 = vmatprep.mubr.bf16.mxu0 0
      %2339 = vmatmul.mubr.bf16.gmra.mrb[0].mxu0 %v2304
      %v2340 = vpop.f32.mrb[0].mxu0
      %v2341 = vadd.f32 %v771, %v2340
      %v2342 = vpop.f32.mrb[0].mxu0
      %v2343 = vpop.f32.mrb[0].mxu0
      %v2344 = vpop.f32.mrb[0].mxu0
      %2345 = vdwg.mxu0
      %v2346 = vsel %vm822, %v2341, -inf
      %2347 = vmax.xlane.f32.xlu0 %v2346
      %v2348 = vpop.xlane.xlu0 %2347
      %v2349 = vsub.f32 %v2341, %v2348
      %v2350 = vmul.f32 %v2349, 1.442695
      %v2351 = vpow.pop %v2350
      %v2352 = vsel %vm822, %v2351, 0.0
      %2353 = vadd.xlane.f32.xlu0 %v2352
      %v2354 = vpop.xlane.xlu0 %2353
      %v2355 = vrcp.pop %v2354
      %v2356 = vmul.f32 %v2351, %v2355
      %v2357 = vpack.c.bf16 %v2356, %v2356
      %2358 = vmatprep.subr.bf16.mxu0 0
      %2359 = vmatpush1.bf16.xpose.msra.mxu0 %v876
      %2360 = vmatprep.subr.bf16.mxu0 0
      %2361 = vmatpush1.bf16.xpose.msra.mxu0 %v879
      %2362 = vmatprep.subr.bf16.mxu0 0
      %2363 = vmatpush1.bf16.xpose.msra.mxu0 %v882
      %2364 = vmatprep.subr.bf16.mxu0 0
      %2365 = vmatpush1.bf16.xpose.msra.mxu0 %v885
      %2366 = vmatprep.subr.bf16.mxu0 0
      %2367 = vmatpush1.bf16.xpose.msra.mxu0 %v888
      %2368 = vmatprep.subr.bf16.mxu0 0
      %2369 = vmatpush1.bf16.xpose.msra.mxu0 %v891
      %2370 = vmatprep.subr.bf16.mxu0 0
      %2371 = vmatpush1.bf16.xpose.msra.mxu0 %v894
      %2372 = vmatprep.subr.bf16.mxu0 0
      %2373 = vmatpush1.bf16.xpose.msra.mxu0 %v897
      %2374 = vmatprep.subr.bf16.mxu0 0
      %2375 = vmatpush1.bf16.xpose.msra.mxu0 0
      %2376 = vmatprep.subr.bf16.mxu0 0
      %2377 = vmatpush1.bf16.xpose.msra.mxu0 0
      %2378 = vmatprep.subr.bf16.mxu0 0
      %2379 = vmatpush1.bf16.xpose.msra.mxu0 0
      %2380 = vmatprep.subr.bf16.mxu0 0
      %2381 = vmatpush1.bf16.xpose.msra.mxu0 0
      %2382 = vmatprep.subr.bf16.mxu0 0
      %2383 = vmatpush1.bf16.xpose.msra.mxu0 0
      %2384 = vmatprep.subr.bf16.mxu0 0
      %2385 = vmatpush1.bf16.xpose.msra.mxu0 0
      %2386 = vmatprep.subr.bf16.mxu0 0
      %2387 = vmatpush1.bf16.xpose.msra.mxu0 0
      %2388 = vmatprep.subr.bf16.mxu0 0
      %2389 = vmatpush1.bf16.xpose.msra.mxu0 0
      %2390 = vmatprep.mubr.bf16.mxu0 0
      %2391 = vmatmul.mubr.bf16.gmra.mrb[0].mxu0 %v2304
      %v2392 = vpop.f32.mrb[0].mxu0
      %v2393 = vadd.f32 0.0, %v2392
      %v2394 = vpop.f32.mrb[0].mxu0
      %v2395 = vpop.f32.mrb[0].mxu0
      %v2396 = vpop.f32.mrb[0].mxu0
      %2397 = vdwg.mxu0
      %2398 = vmax.xlane.f32.xlu0 %v2393
      %v2399 = vpop.xlane.xlu0 %2398
      %v2400 = vsub.f32 %v2393, %v2399
      %v2401 = vmul.f32 %v2400, 1.442695
      %v2402 = vpow.pop %v2401
      %2403 = vadd.xlane.f32.xlu0 %v2402
      %v2404 = vpop.xlane.xlu0 %2403
      %v2405 = vrcp.pop %v2404
      %v2406 = vmul.f32 %v2402, %v2405
      %v2408 = vsel %vm822, %v2357, 0
      %2410 = vmatprep.subr.bf16.mxu0 0
      %2411 = vmatpush1.bf16.msra.mxu0 %v952
      %2412 = vmatprep.subr.bf16.mxu0 0
      %2413 = vmatpush1.bf16.msra.mxu0 0
      %2414 = vmatprep.subr.bf16.mxu0 0
      %2415 = vmatpush1.bf16.msra.mxu0 0
      %2416 = vmatprep.subr.bf16.mxu0 0
      %2417 = vmatpush1.bf16.msra.mxu0 0
      %2418 = vmatprep.subr.bf16.mxu0 0
      %2419 = vmatpush1.bf16.msra.mxu0 0
      %2420 = vmatprep.subr.bf16.mxu0 0
      %2421 = vmatpush1.bf16.msra.mxu0 0
      %2422 = vmatprep.subr.bf16.mxu0 0
      %2423 = vmatpush1.bf16.msra.mxu0 0
      %2424 = vmatprep.subr.bf16.mxu0 0
      %2425 = vmatpush1.bf16.msra.mxu0 0
      %2426 = vmatprep.subr.bf16.mxu0 0
      %2427 = vmatpush1.bf16.msra.mxu0 0
      %2428 = vmatprep.subr.bf16.mxu0 0
      %2429 = vmatpush1.bf16.msra.mxu0 0
      %2430 = vmatprep.subr.bf16.mxu0 0
      %2431 = vmatpush1.bf16.msra.mxu0 0
      %2432 = vmatprep.subr.bf16.mxu0 0
      %2433 = vmatpush1.bf16.msra.mxu0 0
      %2434 = vmatprep.subr.bf16.mxu0 0
      %2435 = vmatpush1.bf16.msra.mxu0 0
      %2436 = vmatprep.subr.bf16.mxu0 0
      %2437 = vmatpush1.bf16.msra.mxu0 0
      %2438 = vmatprep.subr.bf16.mxu0 0
      %2439 = vmatpush1.bf16.msra.mxu0 0
      %2440 = vmatprep.subr.bf16.mxu0 0
      %2441 = vmatpush1.bf16.msra.mxu0 0
      %2442 = vmatprep.mubr.bf16.mxu0 0
      %2443 = vmatmul.mubr.bf16.gmra.mrb[0].mxu0 %v2408
      %v2444 = vpop.f32.mrb[0].mxu0
      %v2445 = vadd.f32 0.0, %v2444
      %v2446 = vpop.f32.mrb[0].mxu0
      %v2447 = vpop.f32.mrb[0].mxu0
      %v2448 = vpop.f32.mrb[0].mxu0
      %2449 = vdwg.mxu0
      %2451 = vrot.lane.b32.xlu0 %v2298, 96
      %v2452 = vpop.permute.xlu0 %2451
      %v2453 = vsel %vm606, %v2452, 0
      %2455 = vmatprep.subr.mxu0 0.0
      %2456 = vmatpush1.msra.mxu0 %v586
      %2457 = vmatprep.subr.mxu0 0.0
      %2458 = vmatpush1.msra.mxu0 %v587
      %2459 = vmatprep.subr.mxu0 0.0
      %2460 = vmatpush1.msra.mxu0 %v588
      %2461 = vmatprep.subr.mxu0 0.0
      %2462 = vmatpush1.msra.mxu0 %v589
      %2463 = vmatprep.subr.mxu0 0.0
      %2464 = vmatpush1.msra.mxu0 0.0
      %2465 = vmatprep.subr.mxu0 0.0
      %2466 = vmatpush1.msra.mxu0 0.0
      %2467 = vmatprep.subr.mxu0 0.0
      %2468 = vmatpush1.msra.mxu0 0.0
      %2469 = vmatprep.subr.mxu0 0.0
      %2470 = vmatpush1.msra.mxu0 0.0
      %2471 = vmatprep.subr.mxu0 0.0
      %2472 = vmatpush1.msra.mxu0 0.0
      %2473 = vmatprep.subr.mxu0 0.0
      %2474 = vmatpush1.msra.mxu0 0.0
      %2475 = vmatprep.subr.mxu0 0.0
      %2476 = vmatpush1.msra.mxu0 0.0
      %2477 = vmatprep.subr.mxu0 0.0
      %2478 = vmatpush1.msra.mxu0 0.0
      %2479 = vmatprep.subr.mxu0 0.0
      %2480 = vmatpush1.msra.mxu0 0.0
      %2481 = vmatprep.subr.mxu0 0.0
      %2482 = vmatpush1.msra.mxu0 0.0
      %2483 = vmatprep.subr.mxu0 0.0
      %2484 = vmatpush1.msra.mxu0 0.0
      %2485 = vmatprep.subr.mxu0 0.0
      %2486 = vmatpush1.msra.mxu0 0.0
      %2487 = vmatprep.subr.mxu0 0.0
      %2488 = vmatpush1.msra.mxu0 0.0
      %2489 = vmatprep.subr.mxu0 0.0
      %2490 = vmatpush1.msra.mxu0 0.0
      %2491 = vmatprep.subr.mxu0 0.0
      %2492 = vmatpush1.msra.mxu0 0.0
      %2493 = vmatprep.subr.mxu0 0.0
      %2494 = vmatpush1.msra.mxu0 0.0
      %2495 = vmatprep.subr.mxu0 0.0
      %2496 = vmatpush1.msra.mxu0 0.0
      %2497 = vmatprep.subr.mxu0 0.0
      %2498 = vmatpush1.msra.mxu0 0.0
      %2499 = vmatprep.subr.mxu0 0.0
      %2500 = vmatpush1.msra.mxu0 0.0
      %2501 = vmatprep.subr.mxu0 0.0
      %2502 = vmatpush1.msra.mxu0 0.0
      %2503 = vmatprep.subr.mxu0 0.0
      %2504 = vmatpush1.msra.mxu0 0.0
      %2505 = vmatprep.subr.mxu0 0.0
      %2506 = vmatpush1.msra.mxu0 0.0
      %2507 = vmatprep.subr.mxu0 0.0
      %2508 = vmatpush1.msra.mxu0 0.0
      %2509 = vmatprep.subr.mxu0 0.0
      %2510 = vmatpush1.msra.mxu0 0.0
      %2511 = vmatprep.subr.mxu0 0.0
      %2512 = vmatpush1.msra.mxu0 0.0
      %2513 = vmatprep.subr.mxu0 0.0
      %2514 = vmatpush1.msra.mxu0 0.0
      %2515 = vmatprep.subr.mxu0 0.0
      %2516 = vmatpush1.msra.mxu0 0.0
      %2517 = vmatprep.subr.mxu0 0.0
      %2518 = vmatpush1.msra.mxu0 0.0
      %2519 = vmatprep.mubr.f32.mxu0 0.0
      %2520 = vmatmul.mubr.f32.gmra.mrb[0].mxu0 %v2453
      %v2521 = vpop.f32.mrb[0].mxu0
      %v2522 = vadd.f32 0.0, %v2521
      %v2523 = vpop.f32.mrb[0].mxu0
      %2524 = vdwg.mxu0
      %v2526 = vsel %vm606, %v2179, 0
      %2528 = vmatprep.subr.mxu0 0.0
      %2529 = vmatpush1.msra.mxu0 %v582
      %2530 = vmatprep.subr.mxu0 0.0
      %2531 = vmatpush1.msra.mxu0 %v583
      %2532 = vmatprep.subr.mxu0 0.0
      %2533 = vmatpush1.msra.mxu0 %v584
      %2534 = vmatprep.subr.mxu0 0.0
      %2535 = vmatpush1.msra.mxu0 %v585
      %2536 = vmatprep.subr.mxu0 0.0
      %2537 = vmatpush1.msra.mxu0 0.0
      %2538 = vmatprep.subr.mxu0 0.0
      %2539 = vmatpush1.msra.mxu0 0.0
      %2540 = vmatprep.subr.mxu0 0.0
      %2541 = vmatpush1.msra.mxu0 0.0
      %2542 = vmatprep.subr.mxu0 0.0
      %2543 = vmatpush1.msra.mxu0 0.0
      %2544 = vmatprep.subr.mxu0 0.0
      %2545 = vmatpush1.msra.mxu0 0.0
      %2546 = vmatprep.subr.mxu0 0.0
      %2547 = vmatpush1.msra.mxu0 0.0
      %2548 = vmatprep.subr.mxu0 0.0
      %2549 = vmatpush1.msra.mxu0 0.0
      %2550 = vmatprep.subr.mxu0 0.0
      %2551 = vmatpush1.msra.mxu0 0.0
      %2552 = vmatprep.subr.mxu0 0.0
      %2553 = vmatpush1.msra.mxu0 0.0
      %2554 = vmatprep.subr.mxu0 0.0
      %2555 = vmatpush1.msra.mxu0 0.0
      %2556 = vmatprep.subr.mxu0 0.0
      %2557 = vmatpush1.msra.mxu0 0.0
      %2558 = vmatprep.subr.mxu0 0.0
      %2559 = vmatpush1.msra.mxu0 0.0
      %2560 = vmatprep.subr.mxu0 0.0
      %2561 = vmatpush1.msra.mxu0 0.0
      %2562 = vmatprep.subr.mxu0 0.0
      %2563 = vmatpush1.msra.mxu0 0.0
      %2564 = vmatprep.subr.mxu0 0.0
      %2565 = vmatpush1.msra.mxu0 0.0
      %2566 = vmatprep.subr.mxu0 0.0
      %2567 = vmatpush1.msra.mxu0 0.0
      %2568 = vmatprep.subr.mxu0 0.0
      %2569 = vmatpush1.msra.mxu0 0.0
      %2570 = vmatprep.subr.mxu0 0.0
      %2571 = vmatpush1.msra.mxu0 0.0
      %2572 = vmatprep.subr.mxu0 0.0
      %2573 = vmatpush1.msra.mxu0 0.0
      %2574 = vmatprep.subr.mxu0 0.0
      %2575 = vmatpush1.msra.mxu0 0.0
      %2576 = vmatprep.subr.mxu0 0.0
      %2577 = vmatpush1.msra.mxu0 0.0
      %2578 = vmatprep.subr.mxu0 0.0
      %2579 = vmatpush1.msra.mxu0 0.0
      %2580 = vmatprep.subr.mxu0 0.0
      %2581 = vmatpush1.msra.mxu0 0.0
      %2582 = vmatprep.subr.mxu0 0.0
      %2583 = vmatpush1.msra.mxu0 0.0
      %2584 = vmatprep.subr.mxu0 0.0
      %2585 = vmatpush1.msra.mxu0 0.0
      %2586 = vmatprep.subr.mxu0 0.0
      %2587 = vmatpush1.msra.mxu0 0.0
      %2588 = vmatprep.subr.mxu0 0.0
      %2589 = vmatpush1.msra.mxu0 0.0
      %2590 = vmatprep.subr.mxu0 0.0
      %2591 = vmatpush1.msra.mxu0 0.0
      %2592 = vmatprep.mubr.f32.mxu0 0.0
      %2593 = vmatmul.mubr.f32.gmra.mrb[0].mxu0 %v2526
      %v2594 = vpop.f32.mrb[0].mxu0
      %v2595 = vadd.f32 %v2522, %v2594
      %v2596 = vpop.f32.mrb[0].mxu0
      %2597 = vdwg.mxu0
      %v2599 = vsel %vm606, %v2445, 0
      %2601 = vmatprep.subr.mxu0 0.0
      %2602 = vmatpush1.msra.mxu0 %v590
      %2603 = vmatprep.subr.mxu0 0.0
      %2604 = vmatpush1.msra.mxu0 %v591
      %2605 = vmatprep.subr.mxu0 0.0
      %2606 = vmatpush1.msra.mxu0 %v592
      %2607 = vmatprep.subr.mxu0 0.0
      %2608 = vmatpush1.msra.mxu0 %v593
      %2609 = vmatprep.subr.mxu0 0.0
      %2610 = vmatpush1.msra.mxu0 0.0
      %2611 = vmatprep.subr.mxu0 0.0
      %2612 = vmatpush1.msra.mxu0 0.0
      %2613 = vmatprep.subr.mxu0 0.0
      %2614 = vmatpush1.msra.mxu0 0.0
      %2615 = vmatprep.subr.mxu0 0.0
      %2616 = vmatpush1.msra.mxu0 0.0
      %2617 = vmatprep.subr.mxu0 0.0
      %2618 = vmatpush1.msra.mxu0 0.0
      %2619 = vmatprep.subr.mxu0 0.0
      %2620 = vmatpush1.msra.mxu0 0.0
      %2621 = vmatprep.subr.mxu0 0.0
      %2622 = vmatpush1.msra.mxu0 0.0
      %2623 = vmatprep.subr.mxu0 0.0
      %2624 = vmatpush1.msra.mxu0 0.0
      %2625 = vmatprep.subr.mxu0 0.0
      %2626 = vmatpush1.msra.mxu0 0.0
      %2627 = vmatprep.subr.mxu0 0.0
      %2628 = vmatpush1.msra.mxu0 0.0
      %2629 = vmatprep.subr.mxu0 0.0
      %2630 = vmatpush1.msra.mxu0 0.0
      %2631 = vmatprep.subr.mxu0 0.0
      %2632 = vmatpush1.msra.mxu0 0.0
      %2633 = vmatprep.subr.mxu0 0.0
      %2634 = vmatpush1.msra.mxu0 0.0
      %2635 = vmatprep.subr.mxu0 0.0
      %2636 = vmatpush1.msra.mxu0 0.0
      %2637 = vmatprep.subr.mxu0 0.0
      %2638 = vmatpush1.msra.mxu0 0.0
      %2639 = vmatprep.subr.mxu0 0.0
      %2640 = vmatpush1.msra.mxu0 0.0
      %2641 = vmatprep.subr.mxu0 0.0
      %2642 = vmatpush1.msra.mxu0 0.0
      %2643 = vmatprep.subr.mxu0 0.0
      %2644 = vmatpush1.msra.mxu0 0.0
      %2645 = vmatprep.subr.mxu0 0.0
      %2646 = vmatpush1.msra.mxu0 0.0
      %2647 = vmatprep.subr.mxu0 0.0
      %2648 = vmatpush1.msra.mxu0 0.0
      %2649 = vmatprep.subr.mxu0 0.0
      %2650 = vmatpush1.msra.mxu0 0.0
      %2651 = vmatprep.subr.mxu0 0.0
      %2652 = vmatpush1.msra.mxu0 0.0
      %2653 = vmatprep.subr.mxu0 0.0
      %2654 = vmatpush1.msra.mxu0 0.0
      %2655 = vmatprep.subr.mxu0 0.0
      %2656 = vmatpush1.msra.mxu0 0.0
      %2657 = vmatprep.subr.mxu0 0.0
      %2658 = vmatpush1.msra.mxu0 0.0
      %2659 = vmatprep.subr.mxu0 0.0
      %2660 = vmatpush1.msra.mxu0 0.0
      %2661 = vmatprep.subr.mxu0 0.0
      %2662 = vmatpush1.msra.mxu0 0.0
      %2663 = vmatprep.subr.mxu0 0.0
      %2664 = vmatpush1.msra.mxu0 0.0
      %2665 = vmatprep.mubr.f32.mxu0 0.0
      %2666 = vmatmul.mubr.f32.gmra.mrb[0].mxu0 %v2599
      %v2667 = vpop.f32.mrb[0].mxu0
      %v2668 = vadd.f32 0.0, %v2667
      %v2669 = vpop.f32.mrb[0].mxu0
      %2670 = vdwg.mxu0
      %v2671 = vadd.f32 %v2595, %v2668
      %v2672 = vadd.f32 %v2671, %v1220
      %v2673 = vxor.u32 %v2672, 2147483648
      %v2674 = vmul.f32 %v2673, 1.442695
      %v2675 = vpow.pop %v2674
      %v2676 = vadd.f32 %v2675, 1.0
      %v2677 = vrcp.pop %v2676
      %v2678 = vmul.f32 1.0, %v2677
      %2679 = vmatprep.subr.bf16.mxu0 0
      %2680 = vmatpush1.bf16.msra.mxu0 %v1230
      %2681 = vmatprep.subr.bf16.mxu0 0
      %2682 = vmatpush1.bf16.msra.mxu0 0
      %2683 = vmatprep.subr.bf16.mxu0 0
      %2684 = vmatpush1.bf16.msra.mxu0 0
      %2685 = vmatprep.subr.bf16.mxu0 0
      %2686 = vmatpush1.bf16.msra.mxu0 0
      %2687 = vmatprep.subr.bf16.mxu0 0
      %2688 = vmatpush1.bf16.msra.mxu0 0
      %2689 = vmatprep.subr.bf16.mxu0 0
      %2690 = vmatpush1.bf16.msra.mxu0 0
      %2691 = vmatprep.subr.bf16.mxu0 0
      %2692 = vmatpush1.bf16.msra.mxu0 0
      %2693 = vmatprep.subr.bf16.mxu0 0
      %2694 = vmatpush1.bf16.msra.mxu0 0
      %2695 = vmatprep.subr.bf16.mxu0 0
      %2696 = vmatpush1.bf16.msra.mxu0 0
      %2697 = vmatprep.subr.bf16.mxu0 0
      %2698 = vmatpush1.bf16.msra.mxu0 0
      %2699 = vmatprep.subr.bf16.mxu0 0
      %2700 = vmatpush1.bf16.msra.mxu0 0
      %2701 = vmatprep.subr.bf16.mxu0 0
      %2702 = vmatpush1.bf16.msra.mxu0 0
      %2703 = vmatprep.subr.bf16.mxu0 0
      %2704 = vmatpush1.bf16.msra.mxu0 0
      %2705 = vmatprep.subr.bf16.mxu0 0
      %2706 = vmatpush1.bf16.msra.mxu0 0
      %2707 = vmatprep.subr.bf16.mxu0 0
      %2708 = vmatpush1.bf16.msra.mxu0 0
      %2709 = vmatprep.subr.bf16.mxu0 0
      %2710 = vmatpush1.bf16.msra.mxu0 0
      %2711 = vmatprep.mubr.bf16.mxu0 0
      %2712 = vmatmul.mubr.bf16.gmra.mrb[0].mxu0 %v2408
      %v2713 = vpop.f32.mrb[0].mxu0
      %v2714 = vadd.f32 0.0, %v2713
      %v2715 = vpop.f32.mrb[0].mxu0
      %v2716 = vpop.f32.mrb[0].mxu0
      %v2717 = vpop.f32.mrb[0].mxu0
      %2718 = vdwg.mxu0
      %2720 = vset.pattern.permute.xlu0 0
      %2721 = vperm.xlu0 %2720, %v2678
      %v2722 = vpop.permute.xlu0 %2721
      %v2724 = vmul.f32 %v2722, %v2406
      %v2725 = vsub.f32 1.0, %v2678
      %2727 = vset.pattern.permute.xlu0 0
      %2728 = vperm.xlu0 %2727, %v2725
      %v2729 = vpop.permute.xlu0 %2728
      %v2731 = vmul.f32 %v2729, %v2714
      %v2732 = vadd.f32 %v2724, %v2731
      %v2734 = vcombine.high %v2732, %v2732
      %v2736 = vunpack.c.l.s4 1966171168
      %v2737 = vunpack.c.0.s8 %v2736
      %v2738 = vlaneseq
      %v2739 = vshrl.u32 %v2738, 7
      %v2740 = vsub.s32 %v2737, %v2739
      %v2741 = vrot.slane %v2732, %v2740
      %v2743 = vunpack.c.l.s4 1966171168
      %v2744 = vunpack.c.0.s8 %v2743
      %v2745 = vlaneseq
      %v2746 = vshrl.u32 %v2745, 7
      %v2747 = vsub.s32 %v2744, %v2746
      %v2748 = vrot.slane %v2734, %v2747
      %v2749 = vcombine.high %v2741, %v2741
      %v2750 = vcombine.high %v2748, %v2748
      %v2752 = vunpack.c.l.s4 1966171168
      %v2753 = vunpack.c.0.s8 %v2752
      %v2754 = vlaneseq
      %v2755 = vshrl.u32 %v2754, 7
      %v2756 = vsub.s32 %v2753, %v2755
      %v2757 = vrot.slane %v2741, %v2756
      %v2759 = vunpack.c.l.s4 1966171168
      %v2760 = vunpack.c.0.s8 %v2759
      %v2761 = vlaneseq
      %v2762 = vshrl.u32 %v2761, 7
      %v2763 = vsub.s32 %v2760, %v2762
      %v2764 = vrot.slane %v2748, %v2763
      %v2766 = vunpack.c.l.s4 1966171168
      %v2767 = vunpack.c.0.s8 %v2766
      %v2768 = vlaneseq
      %v2769 = vshrl.u32 %v2768, 7
      %v2770 = vsub.s32 %v2767, %v2769
      %v2771 = vrot.slane %v2749, %v2770
      %v2773 = vunpack.c.l.s4 1966171168
      %v2774 = vunpack.c.0.s8 %v2773
      %v2775 = vlaneseq
      %v2776 = vshrl.u32 %v2775, 7
      %v2777 = vsub.s32 %v2774, %v2776
      %v2778 = vrot.slane %v2750, %v2777
      %v2779 = vcombine.high %v2757, %v2757
      %v2780 = vcombine.high %v2764, %v2764
      %v2781 = vcombine.high %v2771, %v2771
      %v2782 = vcombine.high %v2778, %v2778
      %2791 = vst [vmem:[%s548 + $0x2] sm:$0x1] %v2757
      %2792 = vst [vmem:[%s548 + $0x6] sm:$0x1] %v2771
      %2793 = vst [vmem:[%s548 + $0xa] sm:$0x1] %v2779
      %2794 = vst [vmem:[%s548 + $0xe] sm:$0x1] %v2781
      %2795 = vst [vmem:[%s548 + $0x12] sm:$0x1] %v2764
      %2796 = vst [vmem:[%s548 + $0x16] sm:$0x1] %v2778
      %2797 = vst [vmem:[%s548 + $0x1a] sm:$0x1] %v2780
      %2798 = vst [vmem:[%s548 + $0x1e] sm:$0x1] %v2782
      %2799 = vmax.xlane.f32.xlu0 %v2732
      %v2800 = vpop.xlane.xlu0 %2799
      %vm2801 = vcmp.eq.f32.partialorder %v2732, %v2800
      %v2802 = vsel %vm2801, %v596, 128
      %v2803 = vand.u32 %v2802, 65535
      %v2804 = vshra.s32 %v2802, 16
      %v2805 = vcvt.s32.f32 %v2803
      %v2806 = vcvt.s32.f32 %v2804
      %2807 = vmin.xlane.f32.xlu0 %v2806
      %v2808 = vpop.xlane.xlu0 %2807
      %vm2809 = vcmp.eq.f32.partialorder %v2806, %v2808
      %v2810 = vsel %vm2809, %v2805, inf
      %2811 = vmin.xlane.f32.xlu0 %v2810
      %v2812 = vpop.xlane.xlu0 %2811
      %v2813 = vcvt.f32.s32 %v2812
      %v2814 = vcvt.f32.s32 %v2808
      %v2815 = vshll.u32 %v2814, 16
      %v2816 = vadd.s32 %v2815, %v2813
      %vm2817 = vcmp.eq.s32.totalorder %v596, %v2816
      %v2818 = vsel %vm2817, 1, 0
      %v2819 = vcvt.s32.f32 %v2818
      %v2820 = vpack.c.bf16 %v2819, %v2819
      %2821 = vmatprep.subr.bf16.mxu0 0
      %2822 = vmatpush1.bf16.msra.mxu0 %v867
      %2823 = vmatprep.subr.bf16.mxu0 0
      %2824 = vmatpush1.bf16.msra.mxu0 %v868
      %2825 = vmatprep.subr.bf16.mxu0 0
      %2826 = vmatpush1.bf16.msra.mxu0 %v869
      %2827 = vmatprep.subr.bf16.mxu0 0
      %2828 = vmatpush1.bf16.msra.mxu0 %v870
      %2829 = vmatprep.subr.bf16.mxu0 0
      %2830 = vmatpush1.bf16.msra.mxu0 %v871
      %2831 = vmatprep.subr.bf16.mxu0 0
      %2832 = vmatpush1.bf16.msra.mxu0 %v872
      %2833 = vmatprep.subr.bf16.mxu0 0
      %2834 = vmatpush1.bf16.msra.mxu0 %v873
      %2835 = vmatprep.subr.bf16.mxu0 0
      %2836 = vmatpush1.bf16.msra.mxu0 %v874
      %2837 = vmatprep.subr.bf16.mxu0 0
      %2838 = vmatpush1.bf16.msra.mxu0 0
      %2839 = vmatprep.subr.bf16.mxu0 0
      %2840 = vmatpush1.bf16.msra.mxu0 0
      %2841 = vmatprep.subr.bf16.mxu0 0
      %2842 = vmatpush1.bf16.msra.mxu0 0
      %2843 = vmatprep.subr.bf16.mxu0 0
      %2844 = vmatpush1.bf16.msra.mxu0 0
      %2845 = vmatprep.subr.bf16.mxu0 0
      %2846 = vmatpush1.bf16.msra.mxu0 0
      %2847 = vmatprep.subr.bf16.mxu0 0
      %2848 = vmatpush1.bf16.msra.mxu0 0
      %2849 = vmatprep.subr.bf16.mxu0 0
      %2850 = vmatpush1.bf16.msra.mxu0 0
      %2851 = vmatprep.subr.bf16.mxu0 0
      %2852 = vmatpush1.bf16.msra.mxu0 0
      %2853 = vmatprep.mubr.bf16.mxu0 0
      %2854 = vmatmul.mubr.bf16.gmra.mrb[0].mxu0 %v2820
      %v2855 = vpop.f32.mrb[0].mxu0
      %v2856 = vadd.f32 0.0, %v2855
      %v2857 = vpop.f32.mrb[0].mxu0
      %v2858 = vpop.f32.mrb[0].mxu0
      %v2859 = vpop.f32.mrb[0].mxu0
      %2860 = vdwg.mxu0
      %2861 = vst.msk [vmem:[#allocation2] sm:$0xff] %vm606, %v2856
      %2863 = vst.msk [vmem:[#allocation3] sm:$0xff] %vm606, %v2452
      %v2864 = vld [vmem:[#allocation2] sm:$0xff]
      %v2865 = vld [vmem:[#allocation3] sm:$0xff]
      %v2866 = vpack.c.bf16 %v2864, %v2864
      %v2868 = vsel %vm606, %v2866, 0
      %2870 = vmatprep.subr.bf16.mxu0 0
      %2871 = vmatpush1.bf16.msra.mxu0 %v627
      %2872 = vmatprep.subr.bf16.mxu0 0
      %2873 = vmatpush1.bf16.msra.mxu0 %v628
      %2874 = vmatprep.subr.bf16.mxu0 0
      %2875 = vmatpush1.bf16.msra.mxu0 0
      %2876 = vmatprep.subr.bf16.mxu0 0
      %2877 = vmatpush1.bf16.msra.mxu0 0
      %2878 = vmatprep.subr.bf16.mxu0 0
      %2879 = vmatpush1.bf16.msra.mxu0 0
      %2880 = vmatprep.subr.bf16.mxu0 0
      %2881 = vmatpush1.bf16.msra.mxu0 0
      %2882 = vmatprep.subr.bf16.mxu0 0
      %2883 = vmatpush1.bf16.msra.mxu0 0
      %2884 = vmatprep.subr.bf16.mxu0 0
      %2885 = vmatpush1.bf16.msra.mxu0 0
      %2886 = vmatprep.subr.bf16.mxu0 0
      %2887 = vmatpush1.bf16.msra.mxu0 0
      %2888 = vmatprep.subr.bf16.mxu0 0
      %2889 = vmatpush1.bf16.msra.mxu0 0
      %2890 = vmatprep.subr.bf16.mxu0 0
      %2891 = vmatpush1.bf16.msra.mxu0 0
      %2892 = vmatprep.subr.bf16.mxu0 0
      %2893 = vmatpush1.bf16.msra.mxu0 0
      %2894 = vmatprep.subr.bf16.mxu0 0
      %2895 = vmatpush1.bf16.msra.mxu0 0
      %2896 = vmatprep.subr.bf16.mxu0 0
      %2897 = vmatpush1.bf16.msra.mxu0 0
      %2898 = vmatprep.subr.bf16.mxu0 0
      %2899 = vmatpush1.bf16.msra.mxu0 0
      %2900 = vmatprep.subr.bf16.mxu0 0
      %2901 = vmatpush1.bf16.msra.mxu0 0
      %2902 = vmatprep.mubr.bf16.mxu0 0
      %2903 = vmatmul.mubr.bf16.gmra.mrb[0].mxu0 %v2868
      %v2904 = vpop.f32.mrb[0].mxu0
      %v2905 = vadd.f32 %v617, %v2904
      %v2906 = vpop.f32.mrb[0].mxu0
      %v2907 = vpop.f32.mrb[0].mxu0
      %v2908 = vpop.f32.mrb[0].mxu0
      %2909 = vdwg.mxu0
      %v2910 = vpack.c.bf16 %v2865, %v2865
      %v2912 = vsel %vm606, %v2910, 0
      %2914 = vmatprep.subr.bf16.mxu0 0
      %2915 = vmatpush1.bf16.msra.mxu0 %v689
      %2916 = vmatprep.subr.bf16.mxu0 0
      %2917 = vmatpush1.bf16.msra.mxu0 %v690
      %2918 = vmatprep.subr.bf16.mxu0 0
      %2919 = vmatpush1.bf16.msra.mxu0 0
      %2920 = vmatprep.subr.bf16.mxu0 0
      %2921 = vmatpush1.bf16.msra.mxu0 0
      %2922 = vmatprep.subr.bf16.mxu0 0
      %2923 = vmatpush1.bf16.msra.mxu0 0
      %2924 = vmatprep.subr.bf16.mxu0 0
      %2925 = vmatpush1.bf16.msra.mxu0 0
      %2926 = vmatprep.subr.bf16.mxu0 0
      %2927 = vmatpush1.bf16.msra.mxu0 0
      %2928 = vmatprep.subr.bf16.mxu0 0
      %2929 = vmatpush1.bf16.msra.mxu0 0
      %2930 = vmatprep.subr.bf16.mxu0 0
      %2931 = vmatpush1.bf16.msra.mxu0 0
      %2932 = vmatprep.subr.bf16.mxu0 0
      %2933 = vmatpush1.bf16.msra.mxu0 0
      %2934 = vmatprep.subr.bf16.mxu0 0
      %2935 = vmatpush1.bf16.msra.mxu0 0
      %2936 = vmatprep.subr.bf16.mxu0 0
      %2937 = vmatpush1.bf16.msra.mxu0 0
      %2938 = vmatprep.subr.bf16.mxu0 0
      %2939 = vmatpush1.bf16.msra.mxu0 0
      %2940 = vmatprep.subr.bf16.mxu0 0
      %2941 = vmatpush1.bf16.msra.mxu0 0
      %2942 = vmatprep.subr.bf16.mxu0 0
      %2943 = vmatpush1.bf16.msra.mxu0 0
      %2944 = vmatprep.subr.bf16.mxu0 0
      %2945 = vmatpush1.bf16.msra.mxu0 0
      %2946 = vmatprep.mubr.bf16.mxu0 0
      %2947 = vmatmul.mubr.bf16.gmra.mrb[0].mxu0 %v2912
      %v2948 = vpop.f32.mrb[0].mxu0
      %v2949 = vadd.f32 %v679, %v2948
      %v2950 = vpop.f32.mrb[0].mxu0
      %v2951 = vpop.f32.mrb[0].mxu0
      %v2952 = vpop.f32.mrb[0].mxu0
      %2953 = vdwg.mxu0
      %v2954 = vadd.f32 %v2905, %v2949
      %v2955 = vxor.u32 %v2954, 2147483648
      %v2956 = vmul.f32 %v2955, 1.442695
      %v2957 = vpow.pop %v2956
      %v2958 = vadd.f32 %v2957, 1.0
      %v2959 = vrcp.pop %v2958
      %v2960 = vmul.f32 1.0, %v2959
      %2962 = vrot.lane.b32.xlu0 %v2949, 64
      %v2963 = vpop.permute.xlu0 %2962
      %v2965 = vmul.f32 %v2960, %v2963
      %2967 = vrot.lane.b32.xlu0 %v2965, 64
      %v2968 = vpop.permute.xlu0 %2967
      %v2970 = vadd.f32 %v2905, %v2968
      %v2971 = vtanh.pop %v2970
      %v2972 = vsub.f32 1.0, %v2960
      %2974 = vrot.lane.b32.xlu0 %v2971, 96
      %v2975 = vpop.permute.xlu0 %2974
      %v2977 = vmul.f32 %v2972, %v2975
      %2979 = vrot.lane.b32.xlu0 %v2865, 32
      %v2980 = vpop.permute.xlu0 %2979
      %v2982 = vmul.f32 %v2960, %v2980
      %v2983 = vadd.f32 %v2977, %v2982
      %v2984 = vpack.c.bf16 %v2983, %v2983
      %2986 = vrot.lane.b32.xlu0 %v2984, 96
      %v2987 = vpop.permute.xlu0 %2986
      %v2989 = vsel %vm606, %v2987, 0
      %2991 = vmatprep.subr.bf16.mxu0 0
      %2992 = vmatpush1.bf16.xpose.msra.mxu0 %v780
      %2993 = vmatprep.subr.bf16.mxu0 0
      %2994 = vmatpush1.bf16.xpose.msra.mxu0 0
      %2995 = vmatprep.subr.bf16.mxu0 0
      %2996 = vmatpush1.bf16.xpose.msra.mxu0 0
      %2997 = vmatprep.subr.bf16.mxu0 0
      %2998 = vmatpush1.bf16.xpose.msra.mxu0 0
      %2999 = vmatprep.subr.bf16.mxu0 0
      %3000 = vmatpush1.bf16.xpose.msra.mxu0 0
      %3001 = vmatprep.subr.bf16.mxu0 0
      %3002 = vmatpush1.bf16.xpose.msra.mxu0 0
      %3003 = vmatprep.subr.bf16.mxu0 0
      %3004 = vmatpush1.bf16.xpose.msra.mxu0 0
      %3005 = vmatprep.subr.bf16.mxu0 0
      %3006 = vmatpush1.bf16.xpose.msra.mxu0 0
      %3007 = vmatprep.subr.bf16.mxu0 0
      %3008 = vmatpush1.bf16.xpose.msra.mxu0 0
      %3009 = vmatprep.subr.bf16.mxu0 0
      %3010 = vmatpush1.bf16.xpose.msra.mxu0 0
      %3011 = vmatprep.subr.bf16.mxu0 0
      %3012 = vmatpush1.bf16.xpose.msra.mxu0 0
      %3013 = vmatprep.subr.bf16.mxu0 0
      %3014 = vmatpush1.bf16.xpose.msra.mxu0 0
      %3015 = vmatprep.subr.bf16.mxu0 0
      %3016 = vmatpush1.bf16.xpose.msra.mxu0 0
      %3017 = vmatprep.subr.bf16.mxu0 0
      %3018 = vmatpush1.bf16.xpose.msra.mxu0 0
      %3019 = vmatprep.subr.bf16.mxu0 0
      %3020 = vmatpush1.bf16.xpose.msra.mxu0 0
      %3021 = vmatprep.subr.bf16.mxu0 0
      %3022 = vmatpush1.bf16.xpose.msra.mxu0 0
      %3023 = vmatprep.mubr.bf16.mxu0 0
      %3024 = vmatmul.mubr.bf16.gmra.mrb[0].mxu0 %v2989
      %v3025 = vpop.f32.mrb[0].mxu0
      %v3026 = vadd.f32 %v771, %v3025
      %v3027 = vpop.f32.mrb[0].mxu0
      %v3028 = vpop.f32.mrb[0].mxu0
      %v3029 = vpop.f32.mrb[0].mxu0
      %3030 = vdwg.mxu0
      %v3031 = vsel %vm822, %v3026, -inf
      %3032 = vmax.xlane.f32.xlu0 %v3031
      %v3033 = vpop.xlane.xlu0 %3032
      %v3034 = vsub.f32 %v3026, %v3033
      %v3035 = vmul.f32 %v3034, 1.442695
      %v3036 = vpow.pop %v3035
      %v3037 = vsel %vm822, %v3036, 0.0
      %3038 = vadd.xlane.f32.xlu0 %v3037
      %v3039 = vpop.xlane.xlu0 %3038
      %v3040 = vrcp.pop %v3039
      %v3041 = vmul.f32 %v3036, %v3040
      %v3042 = vpack.c.bf16 %v3041, %v3041
      %3043 = vmatprep.subr.bf16.mxu0 0
      %3044 = vmatpush1.bf16.xpose.msra.mxu0 %v876
      %3045 = vmatprep.subr.bf16.mxu0 0
      %3046 = vmatpush1.bf16.xpose.msra.mxu0 %v879
      %3047 = vmatprep.subr.bf16.mxu0 0
      %3048 = vmatpush1.bf16.xpose.msra.mxu0 %v882
      %3049 = vmatprep.subr.bf16.mxu0 0
      %3050 = vmatpush1.bf16.xpose.msra.mxu0 %v885
      %3051 = vmatprep.subr.bf16.mxu0 0
      %3052 = vmatpush1.bf16.xpose.msra.mxu0 %v888
      %3053 = vmatprep.subr.bf16.mxu0 0
      %3054 = vmatpush1.bf16.xpose.msra.mxu0 %v891
      %3055 = vmatprep.subr.bf16.mxu0 0
      %3056 = vmatpush1.bf16.xpose.msra.mxu0 %v894
      %3057 = vmatprep.subr.bf16.mxu0 0
      %3058 = vmatpush1.bf16.xpose.msra.mxu0 %v897
      %3059 = vmatprep.subr.bf16.mxu0 0
      %3060 = vmatpush1.bf16.xpose.msra.mxu0 0
      %3061 = vmatprep.subr.bf16.mxu0 0
      %3062 = vmatpush1.bf16.xpose.msra.mxu0 0
      %3063 = vmatprep.subr.bf16.mxu0 0
      %3064 = vmatpush1.bf16.xpose.msra.mxu0 0
      %3065 = vmatprep.subr.bf16.mxu0 0
      %3066 = vmatpush1.bf16.xpose.msra.mxu0 0
      %3067 = vmatprep.subr.bf16.mxu0 0
      %3068 = vmatpush1.bf16.xpose.msra.mxu0 0
      %3069 = vmatprep.subr.bf16.mxu0 0
      %3070 = vmatpush1.bf16.xpose.msra.mxu0 0
      %3071 = vmatprep.subr.bf16.mxu0 0
      %3072 = vmatpush1.bf16.xpose.msra.mxu0 0
      %3073 = vmatprep.subr.bf16.mxu0 0
      %3074 = vmatpush1.bf16.xpose.msra.mxu0 0
      %3075 = vmatprep.mubr.bf16.mxu0 0
      %3076 = vmatmul.mubr.bf16.gmra.mrb[0].mxu0 %v2989
      %v3077 = vpop.f32.mrb[0].mxu0
      %v3078 = vadd.f32 0.0, %v3077
      %v3079 = vpop.f32.mrb[0].mxu0
      %v3080 = vpop.f32.mrb[0].mxu0
      %v3081 = vpop.f32.mrb[0].mxu0
      %3082 = vdwg.mxu0
      %3083 = vmax.xlane.f32.xlu0 %v3078
      %v3084 = vpop.xlane.xlu0 %3083
      %v3085 = vsub.f32 %v3078, %v3084
      %v3086 = vmul.f32 %v3085, 1.442695
      %v3087 = vpow.pop %v3086
      %3088 = vadd.xlane.f32.xlu0 %v3087
      %v3089 = vpop.xlane.xlu0 %3088
      %v3090 = vrcp.pop %v3089
      %v3091 = vmul.f32 %v3087, %v3090
      %v3093 = vsel %vm822, %v3042, 0
      %3095 = vmatprep.subr.bf16.mxu0 0
      %3096 = vmatpush1.bf16.msra.mxu0 %v952
      %3097 = vmatprep.subr.bf16.mxu0 0
      %3098 = vmatpush1.bf16.msra.mxu0 0
      %3099 = vmatprep.subr.bf16.mxu0 0
      %3100 = vmatpush1.bf16.msra.mxu0 0
      %3101 = vmatprep.subr.bf16.mxu0 0
      %3102 = vmatpush1.bf16.msra.mxu0 0
      %3103 = vmatprep.subr.bf16.mxu0 0
      %3104 = vmatpush1.bf16.msra.mxu0 0
      %3105 = vmatprep.subr.bf16.mxu0 0
      %3106 = vmatpush1.bf16.msra.mxu0 0
      %3107 = vmatprep.subr.bf16.mxu0 0
      %3108 = vmatpush1.bf16.msra.mxu0 0
      %3109 = vmatprep.subr.bf16.mxu0 0
      %3110 = vmatpush1.bf16.msra.mxu0 0
      %3111 = vmatprep.subr.bf16.mxu0 0
      %3112 = vmatpush1.bf16.msra.mxu0 0
      %3113 = vmatprep.subr.bf16.mxu0 0
      %3114 = vmatpush1.bf16.msra.mxu0 0
      %3115 = vmatprep.subr.bf16.mxu0 0
      %3116 = vmatpush1.bf16.msra.mxu0 0
      %3117 = vmatprep.subr.bf16.mxu0 0
      %3118 = vmatpush1.bf16.msra.mxu0 0
      %3119 = vmatprep.subr.bf16.mxu0 0
      %3120 = vmatpush1.bf16.msra.mxu0 0
      %3121 = vmatprep.subr.bf16.mxu0 0
      %3122 = vmatpush1.bf16.msra.mxu0 0
      %3123 = vmatprep.subr.bf16.mxu0 0
      %3124 = vmatpush1.bf16.msra.mxu0 0
      %3125 = vmatprep.subr.bf16.mxu0 0
      %3126 = vmatpush1.bf16.msra.mxu0 0
      %3127 = vmatprep.mubr.bf16.mxu0 0
      %3128 = vmatmul.mubr.bf16.gmra.mrb[0].mxu0 %v3093
      %v3129 = vpop.f32.mrb[0].mxu0
      %v3130 = vadd.f32 0.0, %v3129
      %v3131 = vpop.f32.mrb[0].mxu0
      %v3132 = vpop.f32.mrb[0].mxu0
      %v3133 = vpop.f32.mrb[0].mxu0
      %3134 = vdwg.mxu0
      %3136 = vrot.lane.b32.xlu0 %v2983, 96
      %v3137 = vpop.permute.xlu0 %3136
      %v3138 = vsel %vm606, %v3137, 0
      %3140 = vmatprep.subr.mxu0 0.0
      %3141 = vmatpush1.msra.mxu0 %v586
      %3142 = vmatprep.subr.mxu0 0.0
      %3143 = vmatpush1.msra.mxu0 %v587
      %3144 = vmatprep.subr.mxu0 0.0
      %3145 = vmatpush1.msra.mxu0 %v588
      %3146 = vmatprep.subr.mxu0 0.0
      %3147 = vmatpush1.msra.mxu0 %v589
      %3148 = vmatprep.subr.mxu0 0.0
      %3149 = vmatpush1.msra.mxu0 0.0
      %3150 = vmatprep.subr.mxu0 0.0
      %3151 = vmatpush1.msra.mxu0 0.0
      %3152 = vmatprep.subr.mxu0 0.0
      %3153 = vmatpush1.msra.mxu0 0.0
      %3154 = vmatprep.subr.mxu0 0.0
      %3155 = vmatpush1.msra.mxu0 0.0
      %3156 = vmatprep.subr.mxu0 0.0
      %3157 = vmatpush1.msra.mxu0 0.0
      %3158 = vmatprep.subr.mxu0 0.0
      %3159 = vmatpush1.msra.mxu0 0.0
      %3160 = vmatprep.subr.mxu0 0.0
      %3161 = vmatpush1.msra.mxu0 0.0
      %3162 = vmatprep.subr.mxu0 0.0
      %3163 = vmatpush1.msra.mxu0 0.0
      %3164 = vmatprep.subr.mxu0 0.0
      %3165 = vmatpush1.msra.mxu0 0.0
      %3166 = vmatprep.subr.mxu0 0.0
      %3167 = vmatpush1.msra.mxu0 0.0
      %3168 = vmatprep.subr.mxu0 0.0
      %3169 = vmatpush1.msra.mxu0 0.0
      %3170 = vmatprep.subr.mxu0 0.0
      %3171 = vmatpush1.msra.mxu0 0.0
      %3172 = vmatprep.subr.mxu0 0.0
      %3173 = vmatpush1.msra.mxu0 0.0
      %3174 = vmatprep.subr.mxu0 0.0
      %3175 = vmatpush1.msra.mxu0 0.0
      %3176 = vmatprep.subr.mxu0 0.0
      %3177 = vmatpush1.msra.mxu0 0.0
      %3178 = vmatprep.subr.mxu0 0.0
      %3179 = vmatpush1.msra.mxu0 0.0
      %3180 = vmatprep.subr.mxu0 0.0
      %3181 = vmatpush1.msra.mxu0 0.0
      %3182 = vmatprep.subr.mxu0 0.0
      %3183 = vmatpush1.msra.mxu0 0.0
      %3184 = vmatprep.subr.mxu0 0.0
      %3185 = vmatpush1.msra.mxu0 0.0
      %3186 = vmatprep.subr.mxu0 0.0
      %3187 = vmatpush1.msra.mxu0 0.0
      %3188 = vmatprep.subr.mxu0 0.0
      %3189 = vmatpush1.msra.mxu0 0.0
      %3190 = vmatprep.subr.mxu0 0.0
      %3191 = vmatpush1.msra.mxu0 0.0
      %3192 = vmatprep.subr.mxu0 0.0
      %3193 = vmatpush1.msra.mxu0 0.0
      %3194 = vmatprep.subr.mxu0 0.0
      %3195 = vmatpush1.msra.mxu0 0.0
      %3196 = vmatprep.subr.mxu0 0.0
      %3197 = vmatpush1.msra.mxu0 0.0
      %3198 = vmatprep.subr.mxu0 0.0
      %3199 = vmatpush1.msra.mxu0 0.0
      %3200 = vmatprep.subr.mxu0 0.0
      %3201 = vmatpush1.msra.mxu0 0.0
      %3202 = vmatprep.subr.mxu0 0.0
      %3203 = vmatpush1.msra.mxu0 0.0
      %3204 = vmatprep.mubr.f32.mxu0 0.0
      %3205 = vmatmul.mubr.f32.gmra.mrb[0].mxu0 %v3138
      %v3206 = vpop.f32.mrb[0].mxu0
      %v3207 = vadd.f32 0.0, %v3206
      %v3208 = vpop.f32.mrb[0].mxu0
      %3209 = vdwg.mxu0
      %v3211 = vsel %vm606, %v2864, 0
      %3213 = vmatprep.subr.mxu0 0.0
      %3214 = vmatpush1.msra.mxu0 %v582
      %3215 = vmatprep.subr.mxu0 0.0
      %3216 = vmatpush1.msra.mxu0 %v583
      %3217 = vmatprep.subr.mxu0 0.0
      %3218 = vmatpush1.msra.mxu0 %v584
      %3219 = vmatprep.subr.mxu0 0.0
      %3220 = vmatpush1.msra.mxu0 %v585
      %3221 = vmatprep.subr.mxu0 0.0
      %3222 = vmatpush1.msra.mxu0 0.0
      %3223 = vmatprep.subr.mxu0 0.0
      %3224 = vmatpush1.msra.mxu0 0.0
      %3225 = vmatprep.subr.mxu0 0.0
      %3226 = vmatpush1.msra.mxu0 0.0
      %3227 = vmatprep.subr.mxu0 0.0
      %3228 = vmatpush1.msra.mxu0 0.0
      %3229 = vmatprep.subr.mxu0 0.0
      %3230 = vmatpush1.msra.mxu0 0.0
      %3231 = vmatprep.subr.mxu0 0.0
      %3232 = vmatpush1.msra.mxu0 0.0
      %3233 = vmatprep.subr.mxu0 0.0
      %3234 = vmatpush1.msra.mxu0 0.0
      %3235 = vmatprep.subr.mxu0 0.0
      %3236 = vmatpush1.msra.mxu0 0.0
      %3237 = vmatprep.subr.mxu0 0.0
      %3238 = vmatpush1.msra.mxu0 0.0
      %3239 = vmatprep.subr.mxu0 0.0
      %3240 = vmatpush1.msra.mxu0 0.0
      %3241 = vmatprep.subr.mxu0 0.0
      %3242 = vmatpush1.msra.mxu0 0.0
      %3243 = vmatprep.subr.mxu0 0.0
      %3244 = vmatpush1.msra.mxu0 0.0
      %3245 = vmatprep.subr.mxu0 0.0
      %3246 = vmatpush1.msra.mxu0 0.0
      %3247 = vmatprep.subr.mxu0 0.0
      %3248 = vmatpush1.msra.mxu0 0.0
      %3249 = vmatprep.subr.mxu0 0.0
      %3250 = vmatpush1.msra.mxu0 0.0
      %3251 = vmatprep.subr.mxu0 0.0
      %3252 = vmatpush1.msra.mxu0 0.0
      %3253 = vmatprep.subr.mxu0 0.0
      %3254 = vmatpush1.msra.mxu0 0.0
      %3255 = vmatprep.subr.mxu0 0.0
      %3256 = vmatpush1.msra.mxu0 0.0
      %3257 = vmatprep.subr.mxu0 0.0
      %3258 = vmatpush1.msra.mxu0 0.0
      %3259 = vmatprep.subr.mxu0 0.0
      %3260 = vmatpush1.msra.mxu0 0.0
      %3261 = vmatprep.subr.mxu0 0.0
      %3262 = vmatpush1.msra.mxu0 0.0
      %3263 = vmatprep.subr.mxu0 0.0
      %3264 = vmatpush1.msra.mxu0 0.0
      %3265 = vmatprep.subr.mxu0 0.0
      %3266 = vmatpush1.msra.mxu0 0.0
      %3267 = vmatprep.subr.mxu0 0.0
      %3268 = vmatpush1.msra.mxu0 0.0
      %3269 = vmatprep.subr.mxu0 0.0
      %3270 = vmatpush1.msra.mxu0 0.0
      %3271 = vmatprep.subr.mxu0 0.0
      %3272 = vmatpush1.msra.mxu0 0.0
      %3273 = vmatprep.subr.mxu0 0.0
      %3274 = vmatpush1.msra.mxu0 0.0
      %3275 = vmatprep.subr.mxu0 0.0
      %3276 = vmatpush1.msra.mxu0 0.0
      %3277 = vmatprep.mubr.f32.mxu0 0.0
      %3278 = vmatmul.mubr.f32.gmra.mrb[0].mxu0 %v3211
      %v3279 = vpop.f32.mrb[0].mxu0
      %v3280 = vadd.f32 %v3207, %v3279
      %v3281 = vpop.f32.mrb[0].mxu0
      %3282 = vdwg.mxu0
      %v3284 = vsel %vm606, %v3130, 0
      %3286 = vmatprep.subr.mxu0 0.0
      %3287 = vmatpush1.msra.mxu0 %v590
      %3288 = vmatprep.subr.mxu0 0.0
      %3289 = vmatpush1.msra.mxu0 %v591
      %3290 = vmatprep.subr.mxu0 0.0
      %3291 = vmatpush1.msra.mxu0 %v592
      %3292 = vmatprep.subr.mxu0 0.0
      %3293 = vmatpush1.msra.mxu0 %v593
      %3294 = vmatprep.subr.mxu0 0.0
      %3295 = vmatpush1.msra.mxu0 0.0
      %3296 = vmatprep.subr.mxu0 0.0
      %3297 = vmatpush1.msra.mxu0 0.0
      %3298 = vmatprep.subr.mxu0 0.0
      %3299 = vmatpush1.msra.mxu0 0.0
      %3300 = vmatprep.subr.mxu0 0.0
      %3301 = vmatpush1.msra.mxu0 0.0
      %3302 = vmatprep.subr.mxu0 0.0
      %3303 = vmatpush1.msra.mxu0 0.0
      %3304 = vmatprep.subr.mxu0 0.0
      %3305 = vmatpush1.msra.mxu0 0.0
      %3306 = vmatprep.subr.mxu0 0.0
      %3307 = vmatpush1.msra.mxu0 0.0
      %3308 = vmatprep.subr.mxu0 0.0
      %3309 = vmatpush1.msra.mxu0 0.0
      %3310 = vmatprep.subr.mxu0 0.0
      %3311 = vmatpush1.msra.mxu0 0.0
      %3312 = vmatprep.subr.mxu0 0.0
      %3313 = vmatpush1.msra.mxu0 0.0
      %3314 = vmatprep.subr.mxu0 0.0
      %3315 = vmatpush1.msra.mxu0 0.0
      %3316 = vmatprep.subr.mxu0 0.0
      %3317 = vmatpush1.msra.mxu0 0.0
      %3318 = vmatprep.subr.mxu0 0.0
      %3319 = vmatpush1.msra.mxu0 0.0
      %3320 = vmatprep.subr.mxu0 0.0
      %3321 = vmatpush1.msra.mxu0 0.0
      %3322 = vmatprep.subr.mxu0 0.0
      %3323 = vmatpush1.msra.mxu0 0.0
      %3324 = vmatprep.subr.mxu0 0.0
      %3325 = vmatpush1.msra.mxu0 0.0
      %3326 = vmatprep.subr.mxu0 0.0
      %3327 = vmatpush1.msra.mxu0 0.0
      %3328 = vmatprep.subr.mxu0 0.0
      %3329 = vmatpush1.msra.mxu0 0.0
      %3330 = vmatprep.subr.mxu0 0.0
      %3331 = vmatpush1.msra.mxu0 0.0
      %3332 = vmatprep.subr.mxu0 0.0
      %3333 = vmatpush1.msra.mxu0 0.0
      %3334 = vmatprep.subr.mxu0 0.0
      %3335 = vmatpush1.msra.mxu0 0.0
      %3336 = vmatprep.subr.mxu0 0.0
      %3337 = vmatpush1.msra.mxu0 0.0
      %3338 = vmatprep.subr.mxu0 0.0
      %3339 = vmatpush1.msra.mxu0 0.0
      %3340 = vmatprep.subr.mxu0 0.0
      %3341 = vmatpush1.msra.mxu0 0.0
      %3342 = vmatprep.subr.mxu0 0.0
      %3343 = vmatpush1.msra.mxu0 0.0
      %3344 = vmatprep.subr.mxu0 0.0
      %3345 = vmatpush1.msra.mxu0 0.0
      %3346 = vmatprep.subr.mxu0 0.0
      %3347 = vmatpush1.msra.mxu0 0.0
      %3348 = vmatprep.subr.mxu0 0.0
      %3349 = vmatpush1.msra.mxu0 0.0
      %3350 = vmatprep.mubr.f32.mxu0 0.0
      %3351 = vmatmul.mubr.f32.gmra.mrb[0].mxu0 %v3284
      %v3352 = vpop.f32.mrb[0].mxu0
      %v3353 = vadd.f32 0.0, %v3352
      %v3354 = vpop.f32.mrb[0].mxu0
      %3355 = vdwg.mxu0
      %v3356 = vadd.f32 %v3280, %v3353
      %v3357 = vadd.f32 %v3356, %v1220
      %v3358 = vxor.u32 %v3357, 2147483648
      %v3359 = vmul.f32 %v3358, 1.442695
      %v3360 = vpow.pop %v3359
      %v3361 = vadd.f32 %v3360, 1.0
      %v3362 = vrcp.pop %v3361
      %v3363 = vmul.f32 1.0, %v3362
      %3364 = vmatprep.subr.bf16.mxu0 0
      %3365 = vmatpush1.bf16.msra.mxu0 %v1230
      %3366 = vmatprep.subr.bf16.mxu0 0
      %3367 = vmatpush1.bf16.msra.mxu0 0
      %3368 = vmatprep.subr.bf16.mxu0 0
      %3369 = vmatpush1.bf16.msra.mxu0 0
      %3370 = vmatprep.subr.bf16.mxu0 0
      %3371 = vmatpush1.bf16.msra.mxu0 0
      %3372 = vmatprep.subr.bf16.mxu0 0
      %3373 = vmatpush1.bf16.msra.mxu0 0
      %3374 = vmatprep.subr.bf16.mxu0 0
      %3375 = vmatpush1.bf16.msra.mxu0 0
      %3376 = vmatprep.subr.bf16.mxu0 0
      %3377 = vmatpush1.bf16.msra.mxu0 0
      %3378 = vmatprep.subr.bf16.mxu0 0
      %3379 = vmatpush1.bf16.msra.mxu0 0
      %3380 = vmatprep.subr.bf16.mxu0 0
      %3381 = vmatpush1.bf16.msra.mxu0 0
      %3382 = vmatprep.subr.bf16.mxu0 0
      %3383 = vmatpush1.bf16.msra.mxu0 0
      %3384 = vmatprep.subr.bf16.mxu0 0
      %3385 = vmatpush1.bf16.msra.mxu0 0
      %3386 = vmatprep.subr.bf16.mxu0 0
      %3387 = vmatpush1.bf16.msra.mxu0 0
      %3388 = vmatprep.subr.bf16.mxu0 0
      %3389 = vmatpush1.bf16.msra.mxu0 0
      %3390 = vmatprep.subr.bf16.mxu0 0
      %3391 = vmatpush1.bf16.msra.mxu0 0
      %3392 = vmatprep.subr.bf16.mxu0 0
      %3393 = vmatpush1.bf16.msra.mxu0 0
      %3394 = vmatprep.subr.bf16.mxu0 0
      %3395 = vmatpush1.bf16.msra.mxu0 0
      %3396 = vmatprep.mubr.bf16.mxu0 0
      %3397 = vmatmul.mubr.bf16.gmra.mrb[0].mxu0 %v3093
      %v3398 = vpop.f32.mrb[0].mxu0
      %v3399 = vadd.f32 0.0, %v3398
      %v3400 = vpop.f32.mrb[0].mxu0
      %v3401 = vpop.f32.mrb[0].mxu0
      %v3402 = vpop.f32.mrb[0].mxu0
      %3403 = vdwg.mxu0
      %3405 = vset.pattern.permute.xlu0 0
      %3406 = vperm.xlu0 %3405, %v3363
      %v3407 = vpop.permute.xlu0 %3406
      %v3409 = vmul.f32 %v3407, %v3091
      %v3410 = vsub.f32 1.0, %v3363
      %3412 = vset.pattern.permute.xlu0 0
      %3413 = vperm.xlu0 %3412, %v3410
      %v3414 = vpop.permute.xlu0 %3413
      %v3416 = vmul.f32 %v3414, %v3399
      %v3417 = vadd.f32 %v3409, %v3416
      %v3419 = vcombine.high %v3417, %v3417
      %v3421 = vunpack.c.l.s4 1966171168
      %v3422 = vunpack.c.0.s8 %v3421
      %v3423 = vlaneseq
      %v3424 = vshrl.u32 %v3423, 7
      %v3425 = vsub.s32 %v3422, %v3424
      %v3426 = vrot.slane %v3417, %v3425
      %v3428 = vunpack.c.l.s4 1966171168
      %v3429 = vunpack.c.0.s8 %v3428
      %v3430 = vlaneseq
      %v3431 = vshrl.u32 %v3430, 7
      %v3432 = vsub.s32 %v3429, %v3431
      %v3433 = vrot.slane %v3419, %v3432
      %v3434 = vcombine.high %v3426, %v3426
      %v3435 = vcombine.high %v3433, %v3433
      %v3437 = vunpack.c.l.s4 1966171168
      %v3438 = vunpack.c.0.s8 %v3437
      %v3439 = vlaneseq
      %v3440 = vshrl.u32 %v3439, 7
      %v3441 = vsub.s32 %v3438, %v3440
      %v3442 = vrot.slane %v3426, %v3441
      %v3444 = vunpack.c.l.s4 1966171168
      %v3445 = vunpack.c.0.s8 %v3444
      %v3446 = vlaneseq
      %v3447 = vshrl.u32 %v3446, 7
      %v3448 = vsub.s32 %v3445, %v3447
      %v3449 = vrot.slane %v3433, %v3448
      %v3451 = vunpack.c.l.s4 1966171168
      %v3452 = vunpack.c.0.s8 %v3451
      %v3453 = vlaneseq
      %v3454 = vshrl.u32 %v3453, 7
      %v3455 = vsub.s32 %v3452, %v3454
      %v3456 = vrot.slane %v3434, %v3455
      %v3458 = vunpack.c.l.s4 1966171168
      %v3459 = vunpack.c.0.s8 %v3458
      %v3460 = vlaneseq
      %v3461 = vshrl.u32 %v3460, 7
      %v3462 = vsub.s32 %v3459, %v3461
      %v3463 = vrot.slane %v3435, %v3462
      %v3464 = vcombine.high %v3442, %v3442
      %v3465 = vcombine.high %v3449, %v3449
      %v3466 = vcombine.high %v3456, %v3456
      %v3467 = vcombine.high %v3463, %v3463
      %3476 = vst [vmem:[%s548 + $0x3] sm:$0x1] %v3442
      %3477 = vst [vmem:[%s548 + $0x7] sm:$0x1] %v3456
      %3478 = vst [vmem:[%s548 + $0xb] sm:$0x1] %v3464
      %3479 = vst [vmem:[%s548 + $0xf] sm:$0x1] %v3466
      %3480 = vst [vmem:[%s548 + $0x13] sm:$0x1] %v3449
      %3481 = vst [vmem:[%s548 + $0x17] sm:$0x1] %v3463
      %3482 = vst [vmem:[%s548 + $0x1b] sm:$0x1] %v3465
      %3483 = vst [vmem:[%s548 + $0x1f] sm:$0x1] %v3467
      %3484 = vmax.xlane.f32.xlu0 %v3417
      %v3485 = vpop.xlane.xlu0 %3484
      %vm3486 = vcmp.eq.f32.partialorder %v3417, %v3485
      %v3487 = vsel %vm3486, %v596, 128
      %v3488 = vand.u32 %v3487, 65535
      %v3489 = vshra.s32 %v3487, 16
      %v3490 = vcvt.s32.f32 %v3488
      %v3491 = vcvt.s32.f32 %v3489
      %3492 = vmin.xlane.f32.xlu0 %v3491
      %v3493 = vpop.xlane.xlu0 %3492
      %vm3494 = vcmp.eq.f32.partialorder %v3491, %v3493
      %v3495 = vsel %vm3494, %v3490, inf
      %3496 = vmin.xlane.f32.xlu0 %v3495
      %v3497 = vpop.xlane.xlu0 %3496
      %v3498 = vcvt.f32.s32 %v3497
      %v3499 = vcvt.f32.s32 %v3493
      %v3500 = vshll.u32 %v3499, 16
      %v3501 = vadd.s32 %v3500, %v3498
      %vm3502 = vcmp.eq.s32.totalorder %v596, %v3501
      %v3503 = vsel %vm3502, 1, 0
      %v3504 = vcvt.s32.f32 %v3503
      %v3505 = vpack.c.bf16 %v3504, %v3504
      %3506 = vmatprep.subr.bf16.mxu0 0
      %3507 = vmatpush1.bf16.msra.mxu0 %v867
      %3508 = vmatprep.subr.bf16.mxu0 0
      %3509 = vmatpush1.bf16.msra.mxu0 %v868
      %3510 = vmatprep.subr.bf16.mxu0 0
      %3511 = vmatpush1.bf16.msra.mxu0 %v869
      %3512 = vmatprep.subr.bf16.mxu0 0
      %3513 = vmatpush1.bf16.msra.mxu0 %v870
      %3514 = vmatprep.subr.bf16.mxu0 0
      %3515 = vmatpush1.bf16.msra.mxu0 %v871
      %3516 = vmatprep.subr.bf16.mxu0 0
      %3517 = vmatpush1.bf16.msra.mxu0 %v872
      %3518 = vmatprep.subr.bf16.mxu0 0
      %3519 = vmatpush1.bf16.msra.mxu0 %v873
      %3520 = vmatprep.subr.bf16.mxu0 0
      %3521 = vmatpush1.bf16.msra.mxu0 %v874
      %3522 = vmatprep.subr.bf16.mxu0 0
      %3523 = vmatpush1.bf16.msra.mxu0 0
      %3524 = vmatprep.subr.bf16.mxu0 0
      %3525 = vmatpush1.bf16.msra.mxu0 0
      %3526 = vmatprep.subr.bf16.mxu0 0
      %3527 = vmatpush1.bf16.msra.mxu0 0
      %3528 = vmatprep.subr.bf16.mxu0 0
      %3529 = vmatpush1.bf16.msra.mxu0 0
      %3530 = vmatprep.subr.bf16.mxu0 0
      %3531 = vmatpush1.bf16.msra.mxu0 0
      %3532 = vmatprep.subr.bf16.mxu0 0
      %3533 = vmatpush1.bf16.msra.mxu0 0
      %3534 = vmatprep.subr.bf16.mxu0 0
      %3535 = vmatpush1.bf16.msra.mxu0 0
      %3536 = vmatprep.subr.bf16.mxu0 0
      %3537 = vmatpush1.bf16.msra.mxu0 0
      %3538 = vmatprep.mubr.bf16.mxu0 0
      %3539 = vmatmul.mubr.bf16.gmra.mrb[0].mxu0 %v3505
      %v3540 = vpop.f32.mrb[0].mxu0
      %v3541 = vadd.f32 0.0, %v3540
      %v3542 = vpop.f32.mrb[0].mxu0
      %v3543 = vpop.f32.mrb[0].mxu0
      %v3544 = vpop.f32.mrb[0].mxu0
      %3545 = vdwg.mxu0
      %3546 = vst.msk [vmem:[#allocation2] sm:$0xff] %vm606, %v3541
      %3548 = vst.msk [vmem:[#allocation3] sm:$0xff] %vm606, %v3137
      %p3549 = scmp.lt.s32.totalorder %s29, 1
      %s3550 = scalar_select %p3549, %s29, 1
      %s3551 = smul.addr %s3550, 8
      %s3552 = smul.addr %s3551, 4
      %s3553 = scalar_lea.vmem %s14, %s3552
      %p3554 = scmp.lt.s32.totalorder %s29, 1
      %s3555 = scalar_select %p3554, %s29, 1
      %s3556 = smul.addr %s3555, 8
      %s3557 = scalar_lea.vmem %s15, %s3556
      // Predicated region
      $region77: #{slot_generator_forward.1} parent=75 // pred_check
        %p3558 = pneg %p361
      $region78: #{slot_generator_forward.1} parent=75 // pred_check_branch
        %3560 = sbr.rel (%p3558) target = $region80
      $region79: #{slot_generator_forward.1} parent=75 // pred_region
        _
      $region80: #{slot_generator_forward.1} parent=75 // pred_fallthru
        _
      // Predicated region
      $region81: #{slot_generator_forward.1} parent=75 // pred_check
        %p3561 = pneg %p387
      $region82: #{slot_generator_forward.1} parent=75 // pred_check_branch
        %3563 = sbr.rel (%p3561) target = $region84
      $region83: #{slot_generator_forward.1} parent=75 // pred_region
        _
      $region84: #{slot_generator_forward.1} parent=75 // pred_fallthru
        _
    $region76: #{slot_generator_forward.1} parent=5 // pred_fallthru
      _
    %p3564 = scmp.le.s32.totalorder 2, %s24
    // Predicated region
    $region85: #{slot_generator_forward.1} parent=5 // pred_check
      %p3565 = pneg %p3564
    $region86: #{slot_generator_forward.1} parent=5 // pred_check_branch
      %3567 = sbr.rel (%p3565) target = $region88
    $region87: #{slot_generator_forward.1} parent=5 // pred_region
      %s3568 = ssub.s32 %s24, 2
      // Predicated region
      $region89: #{slot_generator_forward.1} parent=87 // pred_check
        %p3569 = pneg %p367
      $region90: #{slot_generator_forward.1} parent=87 // pred_check_branch
        %3571 = sbr.rel (%p3569) target = $region92
      $region91: #{slot_generator_forward.1} parent=87 // pred_region
        %p3572 = scmp.lt.s32.totalorder %s30, 1
        %s3573 = scalar_select %p3572, %s30, 1
        %s3574 = smul.addr %s3573, 8
        %s3575 = smul.addr %s3574, 4
        %s3576 = scalar_lea.vmem %s14, %s3575
      $region92: #{slot_generator_forward.1} parent=87 // pred_fallthru
        _
      // Predicated region
      $region93: #{slot_generator_forward.1} parent=87 // pred_check
        %p3577 = pneg %p393
      $region94: #{slot_generator_forward.1} parent=87 // pred_check_branch
        %3579 = sbr.rel (%p3577) target = $region96
      $region95: #{slot_generator_forward.1} parent=87 // pred_region
        %p3580 = scmp.lt.s32.totalorder %s30, 1
        %s3581 = scalar_select %p3580, %s30, 1
        %s3582 = smul.addr %s3581, 8
        %s3583 = scalar_lea.vmem %s15, %s3582
      $region96: #{slot_generator_forward.1} parent=87 // pred_fallthru
        _
    $region88: #{slot_generator_forward.1} parent=5 // pred_fallthru
      _
  $region6: #{slot_generator_forward.1} parent=0 // loop_footer
    %s28 = sadd.s32 1, %s24
  $region7: #{slot_generator_forward.1} parent=0 // loop_footer_branch
    %23 = sbr.rel target = $region3
  $region8: #{slot_generator_forward.1} parent=0 // loop_exit
    _

</llo_original>
